<compile_context>
chip_gen: v6e
topology: v6e:2x2x1
jax: 0.10.0
libtpu: 0.0.40
codegen_flags: <defaults>
</compile_context>

<pallas_src>
import functools

import jax
import jax.numpy as jnp
import numpy as np
from jax.experimental import pallas as pl
from jax.experimental.pallas import tpu as pltpu

EPS = 1e-5


def _round_up(a, b):
    return (a + b - 1) // b * b


def _convt_in_relu_kernel(x_ref, w_ref, mask_ref, gamma_ref, beta_ref, o_ref, p_ref,
                          *, tap_offsets, cin, Ls, nb, n_phase, cout, inv_count):
    """Nb batch samples per grid step.

    x_ref    : (Nb, Cin, Flen)        zero-padded inputs, spatial dims flattened
    w_ref    : (n_phase*Cout, T)      packed weight, T = R*R*Cin, MXU-native dtype
    mask_ref : (1, Ls)                1.0 on valid output columns, 0.0 on junk columns
    gamma_ref: (Cout, 1)   beta_ref : (Cout, 1)     instance-norm affine params (f32)
    o_ref    : (Nb, n_phase*Cout, Ls) per-phase outputs, spatial in lanes (128-aligned)
    p_ref    : (2, T, Ls)             double-slotted im2col scratch (MXU-native dtype)
    """
    w = w_ref[...]
    mask = mask_ref[...]            # (1, Ls)
    gamma = gamma_ref[...]          # (Cout, 1)
    beta = beta_ref[...]            # (Cout, 1)

    for b in range(nb):             # static unroll, nb <= 4
        slot = b % 2
        # im2col: every tap is a contiguous, 128-lane-aligned slice of the flat input.
        # No casts here: x, p_ref and w all share the MXU operand dtype.
        for t, off in enumerate(tap_offsets):
            p_ref[slot, t * cin:(t + 1) * cin, :] = x_ref[b, :, off:off + Ls]
        # TODO(synk): pairing two taps per store (full 8-sublane tiles) needs a sublane-dim
        # concat; kept as cin-row lane-dense stores for lowering safety.

        # Single MXU contraction over all taps and input channels (f32 accumulate).
        y = jnp.dot(w, p_ref[slot], preferred_element_type=jnp.float32)   # (n_phase*Cout, Ls)
        y = y.reshape(n_phase, cout, Ls)

        # Fused instance norm: one masked pass -> sum & sum-of-squares, then one per-channel
        # scale/shift + ReLU.  Junk columns contribute 0 to both sums (mask is 0/1).
        ym = y * mask
        s1 = jnp.sum(jnp.sum(ym, axis=0), axis=-1, keepdims=True)         # (Cout, 1)
        s2 = jnp.sum(jnp.sum(ym * ym, axis=0), axis=-1, keepdims=True)    # (Cout, 1)
        mean = s1 * inv_count
        var = s2 * inv_count - mean * mean
        scale = gamma * jax.lax.rsqrt(var + EPS)                          # (Cout, 1)
        shift = beta - mean * scale
        out = jnp.maximum(y * scale[None] + shift[None], 0.0)
        o_ref[b] = out.reshape(n_phase * cout, Ls).astype(o_ref.dtype)


@functools.partial(jax.jit, static_argnames=("stride", "padding"))
def conv_transpose2d_layer(x, weight, gamma, beta, *, stride, padding):
    """Forward of ConvTranspose2d_Layer: ConvTranspose2d(bias=False) -> InstanceNorm2d -> ReLU.

    x      : (N, Cin, H, W)
    weight : (Cin, Cout, K, K)    PyTorch ConvTranspose2d weight layout
    gamma  : (Cout,)  beta: (Cout,)   InstanceNorm affine parameters
    returns (N, Cout, Ho, Wo)
    """
    N, Cin, H, W = x.shape
    cin_w, Cout, K, _ = weight.shape
    assert cin_w == Cin
    s, p = stride, padding
    Ho = (H - 1) * s - 2 * p + K
    Wo = (W - 1) * s - 2 * p + K
    # TODO(synk): phases with unequal valid extents ((K - 2p) % s != 0) not implemented.
    assert Ho % s == 0 and Wo % s == 0, "requires (K - 2*padding) % stride == 0"
    Qh, Qw = Ho // s, Wo // s
    n_phase = s * s

    # ---- static sub-pixel geometry (pure python / numpy, zero device work) ----
    def geom(r):
        rm = (r + p) % s
        return rm, (r + p) // s, len(range(rm, K, s))

    geoms = [geom(r) for r in range(s)]
    rel = [d - j for (_, d, J) in geoms for j in range(J)]
    PT = max(0, -min(rel))              # top/left zero padding of x
    R = max(rel) + PT + 1               # union tap-window extent (rows == cols)

    Wp = max(Qw + R - 1, W + PT)        # padded row width
    L = Qh * Wp                         # valid per-sample lane extent (row-structured)
    Ls = _round_up(L, 128)              # 128-aligned per-sample lane extent
    max_off = (R - 1) * Wp + (R - 1)
    Hrows = max(-(-(Ls + max_off) // Wp), H + PT, Qh + R - 1)
    Flen = Hrows * Wp

    # ---- batch blocking: Nb samples per grid step, >= 2 parallel steps when N >= 2 (v7x) ----
    Nb = min(4, max(1, N // 2))
    G = -(-N // Nb)
    Np = G * Nb                          # batch padded with zero samples (results discarded)

    x_pad = jnp.pad(x, ((0, Np - N), (0, 0), (PT, Hrows - PT - H), (PT, Wp - PT - W)))
    x_flat = x_pad.reshape(Np, Cin, Flen)

    # ---- one-shot weight repack: a single gather instead of 16 tiny scatters ----
    # gather_idx[phase, dr, dc] = kh*K + kw of the contributing tap, or K*K (-> zero row).
    gather_idx = np.full((n_phase, R, R), K * K, np.int32)
    for rh in range(s):
        rmh, dh, Jh = geoms[rh]
        for rw in range(s):
            rmw, dw, Jw = geoms[rw]
            for jh in range(Jh):
                for jw in range(Jw):
                    kh, kw = rmh + s * jh, rmw + s * jw
                    dr, dc = dh - jh + PT, dw - jw + PT
                    gather_idx[rh * s + rw, dr, dc] = kh * K + kw
    w_t = jnp.transpose(weight, (2, 3, 1, 0)).reshape(K * K, Cout, Cin)   # [kh*K+kw, co, ci]
    w_t = jnp.concatenate([w_t, jnp.zeros((1, Cout, Cin), w_t.dtype)], axis=0)
    w_full = w_t[jnp.asarray(gather_idx.reshape(-1))]                     # (n_phase*R*R, Cout, Cin)
    w_full = w_full.reshape(n_phase, R, R, Cout, Cin)
    w_packed = jnp.transpose(w_full, (0, 3, 1, 2, 4)).reshape(n_phase * Cout, R * R * Cin)
    w_packed = w_packed.astype(x.dtype)   # MXU-native operand dtype (bf16 input stays bf16)

    col = np.arange(Ls)
    mask = jnp.asarray(((col % Wp < Qw) & (col < L)).astype(np.float32).reshape(1, Ls))
    gamma_c = gamma.astype(jnp.float32).reshape(Cout, 1)
    beta_c = beta.astype(jnp.float32).reshape(Cout, 1)

    tap_offsets = tuple(dr * Wp + dc for dr in range(R) for dc in range(R))
    T = R * R * Cin

    kernel = functools.partial(
        _convt_in_relu_kernel,
        tap_offsets=tap_offsets, cin=Cin, Ls=Ls, nb=Nb,
        n_phase=n_phase, cout=Cout, inv_count=1.0 / float(Ho * Wo))

    out_ps = pl.pallas_call(
        kernel,
        out_shape=jax.ShapeDtypeStruct((Np, n_phase * Cout, Ls), x.dtype),
        grid_spec=pltpu.PrefetchScalarGridSpec(
            num_scalar_prefetch=0,
            grid=(G,),
            in_specs=[
                pl.BlockSpec((Nb, Cin, Flen), lambda g: (g, 0, 0)),
                pl.BlockSpec((n_phase * Cout, T), lambda g: (0, 0)),
                pl.BlockSpec((1, Ls), lambda g: (0, 0)),
                pl.BlockSpec((Cout, 1), lambda g: (0, 0)),
                pl.BlockSpec((Cout, 1), lambda g: (0, 0)),
            ],
            out_specs=pl.BlockSpec((Nb, n_phase * Cout, Ls), lambda g: (g, 0, 0)),
            scratch_shapes=[pltpu.VMEM((2, T, Ls), x.dtype)],
        ),
        # Per-step working set is ~0.5 MiB (2x in-block + 2x out-block + scratch), far below
        # 64 MiB (v7x) / 128 MiB (v5e/v6e), so default scoped VMEM and buffer depth suffice.
        compiler_params=pltpu.CompilerParams(
            dimension_semantics=("parallel",)),
    )(x_flat, w_packed, mask, gamma_c, beta_c)

    # Depth-to-space (phase interleave) + drop junk columns / padded batch samples.
    # TODO(synk): at production sizes, fold the input zero-pad and the W-phase interleave into
    # the kernel to remove these two wrapper HBM passes.
    out = out_ps[:N, :, :L].reshape(N, s, s, Cout, Qh, Wp)[..., :Qw]
    out = jnp.transpose(out, (0, 3, 4, 1, 5, 2)).reshape(N, Cout, Ho, Wo)
    return out


def _reference(x_nchw, weight, gamma, beta, *, stride, padding):
    """Pure-JAX reference (lax conv with lhs dilation) for verification."""
    N, Cin, H, W = x_nchw.shape
    _, Cout, K, _ = weight.shape
    x = jnp.transpose(x_nchw, (0, 2, 3, 1))
    w_hwio = jnp.transpose(jnp.flip(weight, axis=(2, 3)), (2, 3, 0, 1))
    pad = K - 1 - padding
    y = jax.lax.conv_general_dilated(
        x, w_hwio, window_strides=(1, 1),
        padding=[(pad, pad), (pad, pad)],
        lhs_dilation=(stride, stride),
        dimension_numbers=("NHWC", "HWIO", "NHWC"),
    )
    mean = jnp.mean(y, axis=(1, 2), keepdims=True)
    var = jnp.mean((y - mean) ** 2, axis=(1, 2), keepdims=True)
    y = (y - mean) * jax.lax.rsqrt(var + EPS)
    y = y * gamma.reshape(1, 1, 1, Cout) + beta.reshape(1, 1, 1, Cout)
    y = jnp.maximum(y, 0.0)
    return jnp.transpose(y, (0, 3, 1, 2))


if __name__ == "__main__":
    # Small shapes consistent with the module: upsample-style transposed conv.
    Cin, Cout, K, S, P = 4, 8, 4, 2, 1
    H = W = 16
    Ho = (H - 1) * S - 2 * P + K
    Wo = (W - 1) * S - 2 * P + K

    key = jax.random.PRNGKey(0)
    kx, kw, kg, kb = jax.random.split(key, 4)
    weight = 0.1 * jax.random.normal(kw, (Cin, Cout, K, K), jnp.float32)
    gamma = 1.0 + 0.1 * jax.random.normal(kg, (Cout,), jnp.float32)
    beta = 0.1 * jax.random.normal(kb, (Cout,), jnp.float32)

    # N=8 exercises the Nb=4 batched path, N=5 the ragged (zero-padded batch) path,
    # N=2 the Nb=1 / two-parallel-step path, N=1 the single-step path.
    for N in (8, 5, 2, 1):
        x = jax.random.normal(jax.random.fold_in(kx, N), (N, Cin, H, W), jnp.float32)
        out = jax.block_until_ready(
            conv_transpose2d_layer(x, weight, gamma, beta, stride=S, padding=P))
        ref = _reference(x, weight, gamma, beta, stride=S, padding=P)
        assert out.shape == (N, Cout, Ho, Wo)
        assert jnp.allclose(out, ref, atol=1e-4, rtol=1e-4), f"mismatch vs reference (N={N})"

    print("KERNEL_OK")
</pallas_src>

<mosaic_0001>
module attributes {stable_mosaic.version = 11 : i64} {
  func.func @_convt_in_relu_kernel(%arg0: i32, %arg1: memref<4x4x432xf32, #tpu.memory_space<vmem>>, %arg2: memref<32x36xf32, #tpu.memory_space<vmem>>, %arg3: memref<1x384xf32, #tpu.memory_space<vmem>>, %arg4: memref<8x1xf32, #tpu.memory_space<vmem>>, %arg5: memref<8x1xf32, #tpu.memory_space<vmem>>, %arg6: memref<4x32x384xf32, #tpu.memory_space<vmem>>, %arg7: memref<2x36x384xf32, #tpu.memory_space<vmem>>) attributes {dimension_semantics = [#tpu.dimension_semantics<parallel>], iteration_bounds = array<i64: 2>, scalar_prefetch = 0 : i64, scratch_operands = 1 : i64, tpu.core_type = #tpu.core_type<tc>, window_params = [{transform_indices = @transform_0, window_bounds = array<i64: 4, 4, 432>}, {pipeline_mode = #tpu.pipeline_mode<synchronous>, transform_indices = @transform_1, window_bounds = array<i64: 32, 36>}, {pipeline_mode = #tpu.pipeline_mode<synchronous>, transform_indices = @transform_2, window_bounds = array<i64: 1, 384>}, {pipeline_mode = #tpu.pipeline_mode<synchronous>, transform_indices = @transform_3, window_bounds = array<i64: 8, 1>}, {pipeline_mode = #tpu.pipeline_mode<synchronous>, transform_indices = @transform_4, window_bounds = array<i64: 8, 1>}, {transform_indices = @transform_5, window_bounds = array<i64: 4, 32, 384>}]} {
    %c0 = arith.constant 0 : index
    %c0_0 = arith.constant 0 : index
    %0 = vector.load %arg2[%c0, %c0_0] : memref<32x36xf32, #tpu.memory_space<vmem>>, vector<32x36xf32>
    %c0_1 = arith.constant 0 : index
    %c0_2 = arith.constant 0 : index
    %1 = vector.load %arg3[%c0_1, %c0_2] : memref<1x384xf32, #tpu.memory_space<vmem>>, vector<1x384xf32>
    %c0_3 = arith.constant 0 : index
    %c0_4 = arith.constant 0 : index
    %2 = vector.load %arg4[%c0_3, %c0_4] : memref<8x1xf32, #tpu.memory_space<vmem>>, vector<8x1xf32>
    %c0_5 = arith.constant 0 : index
    %c0_6 = arith.constant 0 : index
    %3 = vector.load %arg5[%c0_5, %c0_6] : memref<8x1xf32, #tpu.memory_space<vmem>>, vector<8x1xf32>
    %c0_7 = arith.constant 0 : index
    %c0_8 = arith.constant 0 : index
    %c0_9 = arith.constant 0 : index
    %4 = vector.load %arg1[%c0_7, %c0_8, %c0_9] : memref<4x4x432xf32, #tpu.memory_space<vmem>>, vector<1x4x384xf32>
    %5 = vector.shape_cast %4 : vector<1x4x384xf32> to vector<4x384xf32>
    %c0_10 = arith.constant 0 : index
    %c0_11 = arith.constant 0 : index
    %c0_12 = arith.constant 0 : index
    %6 = vector.load %arg7[%c0_10, %c0_11, %c0_12] : memref<2x36x384xf32, #tpu.memory_space<vmem>>, vector<1x4x384xf32>
    %7 = vector.shape_cast %6 : vector<1x4x384xf32> to vector<4x384xf32>
    %8 = vector.shape_cast %5 : vector<4x384xf32> to vector<1x4x384xf32>
    tpu.vector_store %arg7[%c0_10, %c0_11, %c0_12], %8 {strides = array<i32>} : memref<2x36x384xf32, #tpu.memory_space<vmem>>, vector<1x4x384xf32>,
    %c0_13 = arith.constant 0 : index
    %c0_14 = arith.constant 0 : index
    %c1 = arith.constant 1 : index
    %9 = vector.load %arg1[%c0_13, %c0_14, %c1] : memref<4x4x432xf32, #tpu.memory_space<vmem>>, vector<1x4x384xf32>
    %10 = vector.shape_cast %9 : vector<1x4x384xf32> to vector<4x384xf32>
    %c0_15 = arith.constant 0 : index
    %c4 = arith.constant 4 : index
    %c0_16 = arith.constant 0 : index
    %11 = vector.load %arg7[%c0_15, %c4, %c0_16] : memref<2x36x384xf32, #tpu.memory_space<vmem>>, vector<1x4x384xf32>
    %12 = vector.shape_cast %11 : vector<1x4x384xf32> to vector<4x384xf32>
    %13 = vector.shape_cast %10 : vector<4x384xf32> to vector<1x4x384xf32>
    tpu.vector_store %arg7[%c0_15, %c4, %c0_16], %13 {strides = array<i32>} : memref<2x36x384xf32, #tpu.memory_space<vmem>>, vector<1x4x384xf32>,
    %c0_17 = arith.constant 0 : index
    %c0_18 = arith.constant 0 : index
    %c2 = arith.constant 2 : index
    %14 = vector.load %arg1[%c0_17, %c0_18, %c2] : memref<4x4x432xf32, #tpu.memory_space<vmem>>, vector<1x4x384xf32>
    %15 = vector.shape_cast %14 : vector<1x4x384xf32> to vector<4x384xf32>
    %c0_19 = arith.constant 0 : index
    %c8 = arith.constant 8 : index
    %c0_20 = arith.constant 0 : index
    %16 = vector.load %arg7[%c0_19, %c8, %c0_20] : memref<2x36x384xf32, #tpu.memory_space<vmem>>, vector<1x4x384xf32>
    %17 = vector.shape_cast %16 : vector<1x4x384xf32> to vector<4x384xf32>
    %18 = vector.shape_cast %15 : vector<4x384xf32> to vector<1x4x384xf32>
    tpu.vector_store %arg7[%c0_19, %c8, %c0_20], %18 {strides = array<i32>} : memref<2x36x384xf32, #tpu.memory_space<vmem>>, vector<1x4x384xf32>,
    %c0_21 = arith.constant 0 : index
    %c0_22 = arith.constant 0 : index
    %c18 = arith.constant 18 : index
    %19 = vector.load %arg1[%c0_21, %c0_22, %c18] : memref<4x4x432xf32, #tpu.memory_space<vmem>>, vector<1x4x384xf32>
    %20 = vector.shape_cast %19 : vector<1x4x384xf32> to vector<4x384xf32>
    %c0_23 = arith.constant 0 : index
    %c12 = arith.constant 12 : index
    %c0_24 = arith.constant 0 : index
    %21 = vector.load %arg7[%c0_23, %c12, %c0_24] : memref<2x36x384xf32, #tpu.memory_space<vmem>>, vector<1x4x384xf32>
    %22 = vector.shape_cast %21 : vector<1x4x384xf32> to vector<4x384xf32>
    %23 = vector.shape_cast %20 : vector<4x384xf32> to vector<1x4x384xf32>
    tpu.vector_store %arg7[%c0_23, %c12, %c0_24], %23 {strides = array<i32>} : memref<2x36x384xf32, #tpu.memory_space<vmem>>, vector<1x4x384xf32>,
    %c0_25 = arith.constant 0 : index
    %c0_26 = arith.constant 0 : index
    %c19 = arith.constant 19 : index
    %24 = vector.load %arg1[%c0_25, %c0_26, %c19] : memref<4x4x432xf32, #tpu.memory_space<vmem>>, vector<1x4x384xf32>
    %25 = vector.shape_cast %24 : vector<1x4x384xf32> to vector<4x384xf32>
    %c0_27 = arith.constant 0 : index
    %c16 = arith.constant 16 : index
    %c0_28 = arith.constant 0 : index
    %26 = vector.load %arg7[%c0_27, %c16, %c0_28] : memref<2x36x384xf32, #tpu.memory_space<vmem>>, vector<1x4x384xf32>
    %27 = vector.shape_cast %26 : vector<1x4x384xf32> to vector<4x384xf32>
    %28 = vector.shape_cast %25 : vector<4x384xf32> to vector<1x4x384xf32>
    tpu.vector_store %arg7[%c0_27, %c16, %c0_28], %28 {strides = array<i32>} : memref<2x36x384xf32, #tpu.memory_space<vmem>>, vector<1x4x384xf32>,
    %c0_29 = arith.constant 0 : index
    %c0_30 = arith.constant 0 : index
    %c20 = arith.constant 20 : index
    %29 = vector.load %arg1[%c0_29, %c0_30, %c20] : memref<4x4x432xf32, #tpu.memory_space<vmem>>, vector<1x4x384xf32>
    %30 = vector.shape_cast %29 : vector<1x4x384xf32> to vector<4x384xf32>
    %c0_31 = arith.constant 0 : index
    %c20_32 = arith.constant 20 : index
    %c0_33 = arith.constant 0 : index
    %31 = vector.load %arg7[%c0_31, %c20_32, %c0_33] : memref<2x36x384xf32, #tpu.memory_space<vmem>>, vector<1x4x384xf32>
    %32 = vector.shape_cast %31 : vector<1x4x384xf32> to vector<4x384xf32>
    %33 = vector.shape_cast %30 : vector<4x384xf32> to vector<1x4x384xf32>
    tpu.vector_store %arg7[%c0_31, %c20_32, %c0_33], %33 {strides = array<i32>} : memref<2x36x384xf32, #tpu.memory_space<vmem>>, vector<1x4x384xf32>,
    %c0_34 = arith.constant 0 : index
    %c0_35 = arith.constant 0 : index
    %c36 = arith.constant 36 : index
    %34 = vector.load %arg1[%c0_34, %c0_35, %c36] : memref<4x4x432xf32, #tpu.memory_space<vmem>>, vector<1x4x384xf32>
    %35 = vector.shape_cast %34 : vector<1x4x384xf32> to vector<4x384xf32>
    %c0_36 = arith.constant 0 : index
    %c24 = arith.constant 24 : index
    %c0_37 = arith.constant 0 : index
    %36 = vector.load %arg7[%c0_36, %c24, %c0_37] : memref<2x36x384xf32, #tpu.memory_space<vmem>>, vector<1x4x384xf32>
    %37 = vector.shape_cast %36 : vector<1x4x384xf32> to vector<4x384xf32>
    %38 = vector.shape_cast %35 : vector<4x384xf32> to vector<1x4x384xf32>
    tpu.vector_store %arg7[%c0_36, %c24, %c0_37], %38 {strides = array<i32>} : memref<2x36x384xf32, #tpu.memory_space<vmem>>, vector<1x4x384xf32>,
    %c0_38 = arith.constant 0 : index
    %c0_39 = arith.constant 0 : index
    %c37 = arith.constant 37 : index
    %39 = vector.load %arg1[%c0_38, %c0_39, %c37] : memref<4x4x432xf32, #tpu.memory_space<vmem>>, vector<1x4x384xf32>
    %40 = vector.shape_cast %39 : vector<1x4x384xf32> to vector<4x384xf32>
    %c0_40 = arith.constant 0 : index
    %c28 = arith.constant 28 : index
    %c0_41 = arith.constant 0 : index
    %41 = vector.load %arg7[%c0_40, %c28, %c0_41] : memref<2x36x384xf32, #tpu.memory_space<vmem>>, vector<1x4x384xf32>
    %42 = vector.shape_cast %41 : vector<1x4x384xf32> to vector<4x384xf32>
    %43 = vector.shape_cast %40 : vector<4x384xf32> to vector<1x4x384xf32>
    tpu.vector_store %arg7[%c0_40, %c28, %c0_41], %43 {strides = array<i32>} : memref<2x36x384xf32, #tpu.memory_space<vmem>>, vector<1x4x384xf32>,
    %c0_42 = arith.constant 0 : index
    %c0_43 = arith.constant 0 : index
    %c38 = arith.constant 38 : index
    %44 = vector.load %arg1[%c0_42, %c0_43, %c38] : memref<4x4x432xf32, #tpu.memory_space<vmem>>, vector<1x4x384xf32>
    %45 = vector.shape_cast %44 : vector<1x4x384xf32> to vector<4x384xf32>
    %c0_44 = arith.constant 0 : index
    %c32 = arith.constant 32 : index
    %c0_45 = arith.constant 0 : index
    %46 = vector.load %arg7[%c0_44, %c32, %c0_45] : memref<2x36x384xf32, #tpu.memory_space<vmem>>, vector<1x4x384xf32>
    %47 = vector.shape_cast %46 : vector<1x4x384xf32> to vector<4x384xf32>
    %48 = vector.shape_cast %45 : vector<4x384xf32> to vector<1x4x384xf32>
    tpu.vector_store %arg7[%c0_44, %c32, %c0_45], %48 {strides = array<i32>} : memref<2x36x384xf32, #tpu.memory_space<vmem>>, vector<1x4x384xf32>,
    %c0_46 = arith.constant 0 : index
    %c0_47 = arith.constant 0 : index
    %c0_48 = arith.constant 0 : index
    %49 = vector.load %arg7[%c0_46, %c0_47, %c0_48] : memref<2x36x384xf32, #tpu.memory_space<vmem>>, vector<1x36x384xf32>
    %50 = vector.shape_cast %49 : vector<1x36x384xf32> to vector<36x384xf32>
    %cst = arith.constant dense<0.000000e+00> : vector<32x384xf32>
    %51 = tpu.matmul %0, %50, %cst {dimension_numbers = #tpu.dot_dimension_numbers<[1], [0], [0], [1], [0, 0, 1, 1], [], []>} : vector<32x36xf32>, vector<36x384xf32>, vector<32x384xf32> -> vector<32x384xf32>
    %52 = vector.shape_cast %51 : vector<32x384xf32> to vector<4x8x384xf32>
    %53 = vector.shape_cast %1 : vector<1x384xf32> to vector<1x1x384xf32>
    %54 = vector.broadcast %53 : vector<1x1x384xf32> to vector<4x8x384xf32>
    %55 = arith.mulf %52, %54 : vector<4x8x384xf32>
    %cst_49 = arith.constant dense<0.000000e+00> : vector<8x384xf32>
    %56 = vector.multi_reduction <add>, %55, %cst_49 [0] : vector<4x8x384xf32> to vector<8x384xf32>
    %cst_50 = arith.constant dense<0.000000e+00> : vector<8xf32>
    %57 = vector.multi_reduction <add>, %56, %cst_50 [1] : vector<8x384xf32> to vector<8xf32>
    %58 = vector.shape_cast %57 : vector<8xf32> to vector<8x1xf32>
    %59 = arith.mulf %55, %55 : vector<4x8x384xf32>
    %cst_51 = arith.constant dense<0.000000e+00> : vector<8x384xf32>
    %60 = vector.multi_reduction <add>, %59, %cst_51 [0] : vector<4x8x384xf32> to vector<8x384xf32>
    %cst_52 = arith.constant dense<0.000000e+00> : vector<8xf32>
    %61 = vector.multi_reduction <add>, %60, %cst_52 [1] : vector<8x384xf32> to vector<8xf32>
    %62 = vector.shape_cast %61 : vector<8xf32> to vector<8x1xf32>
    %cst_53 = arith.constant 9.765625E-4 : f32
    %63 = vector.broadcast %cst_53 : f32 to vector<8x1xf32>
    %64 = arith.mulf %58, %63 : vector<8x1xf32>
    %cst_54 = arith.constant 9.765625E-4 : f32
    %65 = vector.broadcast %cst_54 : f32 to vector<8x1xf32>
    %66 = arith.mulf %62, %65 : vector<8x1xf32>
    %67 = arith.mulf %64, %64 : vector<8x1xf32>
    %68 = arith.subf %66, %67 : vector<8x1xf32>
    %cst_55 = arith.constant 9.99999974E-6 : f32
    %69 = vector.broadcast %cst_55 : f32 to vector<8x1xf32>
    %70 = arith.addf %68, %69 : vector<8x1xf32>
    %71 = math.rsqrt %70 : vector<8x1xf32>
    %72 = arith.mulf %2, %71 : vector<8x1xf32>
    %73 = arith.mulf %64, %72 : vector<8x1xf32>
    %74 = arith.subf %3, %73 : vector<8x1xf32>
    %75 = vector.shape_cast %72 : vector<8x1xf32> to vector<1x8x1xf32>
    %76 = vector.broadcast %75 : vector<1x8x1xf32> to vector<4x8x384xf32>
    %77 = arith.mulf %52, %76 : vector<4x8x384xf32>
    %78 = vector.shape_cast %74 : vector<8x1xf32> to vector<1x8x1xf32>
    %79 = vector.broadcast %78 : vector<1x8x1xf32> to vector<4x8x384xf32>
    %80 = arith.addf %77, %79 : vector<4x8x384xf32>
    %cst_56 = arith.constant 0.000000e+00 : f32
    %81 = vector.broadcast %cst_56 : f32 to vector<4x8x384xf32>
    %82 = arith.maximumf %80, %81 : vector<4x8x384xf32>
    %83 = vector.shape_cast %82 : vector<4x8x384xf32> to vector<32x384xf32>
    %c0_57 = arith.constant 0 : index
    %c0_58 = arith.constant 0 : index
    %c0_59 = arith.constant 0 : index
    %84 = vector.load %arg6[%c0_57, %c0_58, %c0_59] : memref<4x32x384xf32, #tpu.memory_space<vmem>>, vector<1x32x384xf32>
    %85 = vector.shape_cast %84 : vector<1x32x384xf32> to vector<32x384xf32>
    %86 = vector.shape_cast %83 : vector<32x384xf32> to vector<1x32x384xf32>
    tpu.vector_store %arg6[%c0_57, %c0_58, %c0_59], %86 {strides = array<i32>} : memref<4x32x384xf32, #tpu.memory_space<vmem>>, vector<1x32x384xf32>,
    %c1_60 = arith.constant 1 : index
    %c0_61 = arith.constant 0 : index
    %c0_62 = arith.constant 0 : index
    %87 = vector.load %arg1[%c1_60, %c0_61, %c0_62] : memref<4x4x432xf32, #tpu.memory_space<vmem>>, vector<1x4x384xf32>
    %88 = vector.shape_cast %87 : vector<1x4x384xf32> to vector<4x384xf32>
    %c1_63 = arith.constant 1 : index
    %c0_64 = arith.constant 0 : index
    %c0_65 = arith.constant 0 : index
    %89 = vector.load %arg7[%c1_63, %c0_64, %c0_65] : memref<2x36x384xf32, #tpu.memory_space<vmem>>, vector<1x4x384xf32>
    %90 = vector.shape_cast %89 : vector<1x4x384xf32> to vector<4x384xf32>
    %91 = vector.shape_cast %88 : vector<4x384xf32> to vector<1x4x384xf32>
    tpu.vector_store %arg7[%c1_63, %c0_64, %c0_65], %91 {strides = array<i32>} : memref<2x36x384xf32, #tpu.memory_space<vmem>>, vector<1x4x384xf32>,
    %c1_66 = arith.constant 1 : index
    %c0_67 = arith.constant 0 : index
    %c1_68 = arith.constant 1 : index
    %92 = vector.load %arg1[%c1_66, %c0_67, %c1_68] : memref<4x4x432xf32, #tpu.memory_space<vmem>>, vector<1x4x384xf32>
    %93 = vector.shape_cast %92 : vector<1x4x384xf32> to vector<4x384xf32>
    %c1_69 = arith.constant 1 : index
    %c4_70 = arith.constant 4 : index
    %c0_71 = arith.constant 0 : index
    %94 = vector.load %arg7[%c1_69, %c4_70, %c0_71] : memref<2x36x384xf32, #tpu.memory_space<vmem>>, vector<1x4x384xf32>
    %95 = vector.shape_cast %94 : vector<1x4x384xf32> to vector<4x384xf32>
    %96 = vector.shape_cast %93 : vector<4x384xf32> to vector<1x4x384xf32>
    tpu.vector_store %arg7[%c1_69, %c4_70, %c0_71], %96 {strides = array<i32>} : memref<2x36x384xf32, #tpu.memory_space<vmem>>, vector<1x4x384xf32>,
    %c1_72 = arith.constant 1 : index
    %c0_73 = arith.constant 0 : index
    %c2_74 = arith.constant 2 : index
    %97 = vector.load %arg1[%c1_72, %c0_73, %c2_74] : memref<4x4x432xf32, #tpu.memory_space<vmem>>, vector<1x4x384xf32>
    %98 = vector.shape_cast %97 : vector<1x4x384xf32> to vector<4x384xf32>
    %c1_75 = arith.constant 1 : index
    %c8_76 = arith.constant 8 : index
    %c0_77 = arith.constant 0 : index
    %99 = vector.load %arg7[%c1_75, %c8_76, %c0_77] : memref<2x36x384xf32, #tpu.memory_space<vmem>>, vector<1x4x384xf32>
    %100 = vector.shape_cast %99 : vector<1x4x384xf32> to vector<4x384xf32>
    %101 = vector.shape_cast %98 : vector<4x384xf32> to vector<1x4x384xf32>
    tpu.vector_store %arg7[%c1_75, %c8_76, %c0_77], %101 {strides = array<i32>} : memref<2x36x384xf32, #tpu.memory_space<vmem>>, vector<1x4x384xf32>,
    %c1_78 = arith.constant 1 : index
    %c0_79 = arith.constant 0 : index
    %c18_80 = arith.constant 18 : index
    %102 = vector.load %arg1[%c1_78, %c0_79, %c18_80] : memref<4x4x432xf32, #tpu.memory_space<vmem>>, vector<1x4x384xf32>
    %103 = vector.shape_cast %102 : vector<1x4x384xf32> to vector<4x384xf32>
    %c1_81 = arith.constant 1 : index
    %c12_82 = arith.constant 12 : index
    %c0_83 = arith.constant 0 : index
    %104 = vector.load %arg7[%c1_81, %c12_82, %c0_83] : memref<2x36x384xf32, #tpu.memory_space<vmem>>, vector<1x4x384xf32>
    %105 = vector.shape_cast %104 : vector<1x4x384xf32> to vector<4x384xf32>
    %106 = vector.shape_cast %103 : vector<4x384xf32> to vector<1x4x384xf32>
    tpu.vector_store %arg7[%c1_81, %c12_82, %c0_83], %106 {strides = array<i32>} : memref<2x36x384xf32, #tpu.memory_space<vmem>>, vector<1x4x384xf32>,
    %c1_84 = arith.constant 1 : index
    %c0_85 = arith.constant 0 : index
    %c19_86 = arith.constant 19 : index
    %107 = vector.load %arg1[%c1_84, %c0_85, %c19_86] : memref<4x4x432xf32, #tpu.memory_space<vmem>>, vector<1x4x384xf32>
    %108 = vector.shape_cast %107 : vector<1x4x384xf32> to vector<4x384xf32>
    %c1_87 = arith.constant 1 : index
    %c16_88 = arith.constant 16 : index
    %c0_89 = arith.constant 0 : index
    %109 = vector.load %arg7[%c1_87, %c16_88, %c0_89] : memref<2x36x384xf32, #tpu.memory_space<vmem>>, vector<1x4x384xf32>
    %110 = vector.shape_cast %109 : vector<1x4x384xf32> to vector<4x384xf32>
    %111 = vector.shape_cast %108 : vector<4x384xf32> to vector<1x4x384xf32>
    tpu.vector_store %arg7[%c1_87, %c16_88, %c0_89], %111 {strides = array<i32>} : memref<2x36x384xf32, #tpu.memory_space<vmem>>, vector<1x4x384xf32>,
    %c1_90 = arith.constant 1 : index
    %c0_91 = arith.constant 0 : index
    %c20_92 = arith.constant 20 : index
    %112 = vector.load %arg1[%c1_90, %c0_91, %c20_92] : memref<4x4x432xf32, #tpu.memory_space<vmem>>, vector<1x4x384xf32>
    %113 = vector.shape_cast %112 : vector<1x4x384xf32> to vector<4x384xf32>
    %c1_93 = arith.constant 1 : index
    %c20_94 = arith.constant 20 : index
    %c0_95 = arith.constant 0 : index
    %114 = vector.load %arg7[%c1_93, %c20_94, %c0_95] : memref<2x36x384xf32, #tpu.memory_space<vmem>>, vector<1x4x384xf32>
    %115 = vector.shape_cast %114 : vector<1x4x384xf32> to vector<4x384xf32>
    %116 = vector.shape_cast %113 : vector<4x384xf32> to vector<1x4x384xf32>
    tpu.vector_store %arg7[%c1_93, %c20_94, %c0_95], %116 {strides = array<i32>} : memref<2x36x384xf32, #tpu.memory_space<vmem>>, vector<1x4x384xf32>,
    %c1_96 = arith.constant 1 : index
    %c0_97 = arith.constant 0 : index
    %c36_98 = arith.constant 36 : index
    %117 = vector.load %arg1[%c1_96, %c0_97, %c36_98] : memref<4x4x432xf32, #tpu.memory_space<vmem>>, vector<1x4x384xf32>
    %118 = vector.shape_cast %117 : vector<1x4x384xf32> to vector<4x384xf32>
    %c1_99 = arith.constant 1 : index
    %c24_100 = arith.constant 24 : index
    %c0_101 = arith.constant 0 : index
    %119 = vector.load %arg7[%c1_99, %c24_100, %c0_101] : memref<2x36x384xf32, #tpu.memory_space<vmem>>, vector<1x4x384xf32>
    %120 = vector.shape_cast %119 : vector<1x4x384xf32> to vector<4x384xf32>
    %121 = vector.shape_cast %118 : vector<4x384xf32> to vector<1x4x384xf32>
    tpu.vector_store %arg7[%c1_99, %c24_100, %c0_101], %121 {strides = array<i32>} : memref<2x36x384xf32, #tpu.memory_space<vmem>>, vector<1x4x384xf32>,
    %c1_102 = arith.constant 1 : index
    %c0_103 = arith.constant 0 : index
    %c37_104 = arith.constant 37 : index
    %122 = vector.load %arg1[%c1_102, %c0_103, %c37_104] : memref<4x4x432xf32, #tpu.memory_space<vmem>>, vector<1x4x384xf32>
    %123 = vector.shape_cast %122 : vector<1x4x384xf32> to vector<4x384xf32>
    %c1_105 = arith.constant 1 : index
    %c28_106 = arith.constant 28 : index
    %c0_107 = arith.constant 0 : index
    %124 = vector.load %arg7[%c1_105, %c28_106, %c0_107] : memref<2x36x384xf32, #tpu.memory_space<vmem>>, vector<1x4x384xf32>
    %125 = vector.shape_cast %124 : vector<1x4x384xf32> to vector<4x384xf32>
    %126 = vector.shape_cast %123 : vector<4x384xf32> to vector<1x4x384xf32>
    tpu.vector_store %arg7[%c1_105, %c28_106, %c0_107], %126 {strides = array<i32>} : memref<2x36x384xf32, #tpu.memory_space<vmem>>, vector<1x4x384xf32>,
    %c1_108 = arith.constant 1 : index
    %c0_109 = arith.constant 0 : index
    %c38_110 = arith.constant 38 : index
    %127 = vector.load %arg1[%c1_108, %c0_109, %c38_110] : memref<4x4x432xf32, #tpu.memory_space<vmem>>, vector<1x4x384xf32>
    %128 = vector.shape_cast %127 : vector<1x4x384xf32> to vector<4x384xf32>
    %c1_111 = arith.constant 1 : index
    %c32_112 = arith.constant 32 : index
    %c0_113 = arith.constant 0 : index
    %129 = vector.load %arg7[%c1_111, %c32_112, %c0_113] : memref<2x36x384xf32, #tpu.memory_space<vmem>>, vector<1x4x384xf32>
    %130 = vector.shape_cast %129 : vector<1x4x384xf32> to vector<4x384xf32>
    %131 = vector.shape_cast %128 : vector<4x384xf32> to vector<1x4x384xf32>
    tpu.vector_store %arg7[%c1_111, %c32_112, %c0_113], %131 {strides = array<i32>} : memref<2x36x384xf32, #tpu.memory_space<vmem>>, vector<1x4x384xf32>,
    %c1_114 = arith.constant 1 : index
    %c0_115 = arith.constant 0 : index
    %c0_116 = arith.constant 0 : index
    %132 = vector.load %arg7[%c1_114, %c0_115, %c0_116] : memref<2x36x384xf32, #tpu.memory_space<vmem>>, vector<1x36x384xf32>
    %133 = vector.shape_cast %132 : vector<1x36x384xf32> to vector<36x384xf32>
    %cst_117 = arith.constant dense<0.000000e+00> : vector<32x384xf32>
    %134 = tpu.matmul %0, %133, %cst_117 {dimension_numbers = #tpu.dot_dimension_numbers<[1], [0], [0], [1], [0, 0, 1, 1], [], []>} : vector<32x36xf32>, vector<36x384xf32>, vector<32x384xf32> -> vector<32x384xf32>
    %135 = vector.shape_cast %134 : vector<32x384xf32> to vector<4x8x384xf32>
    %136 = vector.shape_cast %1 : vector<1x384xf32> to vector<1x1x384xf32>
    %137 = vector.broadcast %136 : vector<1x1x384xf32> to vector<4x8x384xf32>
    %138 = arith.mulf %135, %137 : vector<4x8x384xf32>
    %cst_118 = arith.constant dense<0.000000e+00> : vector<8x384xf32>
    %139 = vector.multi_reduction <add>, %138, %cst_118 [0] : vector<4x8x384xf32> to vector<8x384xf32>
    %cst_119 = arith.constant dense<0.000000e+00> : vector<8xf32>
    %140 = vector.multi_reduction <add>, %139, %cst_119 [1] : vector<8x384xf32> to vector<8xf32>
    %141 = vector.shape_cast %140 : vector<8xf32> to vector<8x1xf32>
    %142 = arith.mulf %138, %138 : vector<4x8x384xf32>
    %cst_120 = arith.constant dense<0.000000e+00> : vector<8x384xf32>
    %143 = vector.multi_reduction <add>, %142, %cst_120 [0] : vector<4x8x384xf32> to vector<8x384xf32>
    %cst_121 = arith.constant dense<0.000000e+00> : vector<8xf32>
    %144 = vector.multi_reduction <add>, %143, %cst_121 [1] : vector<8x384xf32> to vector<8xf32>
    %145 = vector.shape_cast %144 : vector<8xf32> to vector<8x1xf32>
    %cst_122 = arith.constant 9.765625E-4 : f32
    %146 = vector.broadcast %cst_122 : f32 to vector<8x1xf32>
    %147 = arith.mulf %141, %146 : vector<8x1xf32>
    %cst_123 = arith.constant 9.765625E-4 : f32
    %148 = vector.broadcast %cst_123 : f32 to vector<8x1xf32>
    %149 = arith.mulf %145, %148 : vector<8x1xf32>
    %150 = arith.mulf %147, %147 : vector<8x1xf32>
    %151 = arith.subf %149, %150 : vector<8x1xf32>
    %cst_124 = arith.constant 9.99999974E-6 : f32
    %152 = vector.broadcast %cst_124 : f32 to vector<8x1xf32>
    %153 = arith.addf %151, %152 : vector<8x1xf32>
    %154 = math.rsqrt %153 : vector<8x1xf32>
    %155 = arith.mulf %2, %154 : vector<8x1xf32>
    %156 = arith.mulf %147, %155 : vector<8x1xf32>
    %157 = arith.subf %3, %156 : vector<8x1xf32>
    %158 = vector.shape_cast %155 : vector<8x1xf32> to vector<1x8x1xf32>
    %159 = vector.broadcast %158 : vector<1x8x1xf32> to vector<4x8x384xf32>
    %160 = arith.mulf %135, %159 : vector<4x8x384xf32>
    %161 = vector.shape_cast %157 : vector<8x1xf32> to vector<1x8x1xf32>
    %162 = vector.broadcast %161 : vector<1x8x1xf32> to vector<4x8x384xf32>
    %163 = arith.addf %160, %162 : vector<4x8x384xf32>
    %cst_125 = arith.constant 0.000000e+00 : f32
    %164 = vector.broadcast %cst_125 : f32 to vector<4x8x384xf32>
    %165 = arith.maximumf %163, %164 : vector<4x8x384xf32>
    %166 = vector.shape_cast %165 : vector<4x8x384xf32> to vector<32x384xf32>
    %c1_126 = arith.constant 1 : index
    %c0_127 = arith.constant 0 : index
    %c0_128 = arith.constant 0 : index
    %167 = vector.load %arg6[%c1_126, %c0_127, %c0_128] : memref<4x32x384xf32, #tpu.memory_space<vmem>>, vector<1x32x384xf32>
    %168 = vector.shape_cast %167 : vector<1x32x384xf32> to vector<32x384xf32>
    %169 = vector.shape_cast %166 : vector<32x384xf32> to vector<1x32x384xf32>
    tpu.vector_store %arg6[%c1_126, %c0_127, %c0_128], %169 {strides = array<i32>} : memref<4x32x384xf32, #tpu.memory_space<vmem>>, vector<1x32x384xf32>,
    %c2_129 = arith.constant 2 : index
    %c0_130 = arith.constant 0 : index
    %c0_131 = arith.constant 0 : index
    %170 = vector.load %arg1[%c2_129, %c0_130, %c0_131] : memref<4x4x432xf32, #tpu.memory_space<vmem>>, vector<1x4x384xf32>
    %171 = vector.shape_cast %170 : vector<1x4x384xf32> to vector<4x384xf32>
    %c0_132 = arith.constant 0 : index
    %c0_133 = arith.constant 0 : index
    %c0_134 = arith.constant 0 : index
    %172 = vector.load %arg7[%c0_132, %c0_133, %c0_134] : memref<2x36x384xf32, #tpu.memory_space<vmem>>, vector<1x4x384xf32>
    %173 = vector.shape_cast %172 : vector<1x4x384xf32> to vector<4x384xf32>
    %174 = vector.shape_cast %171 : vector<4x384xf32> to vector<1x4x384xf32>
    tpu.vector_store %arg7[%c0_132, %c0_133, %c0_134], %174 {strides = array<i32>} : memref<2x36x384xf32, #tpu.memory_space<vmem>>, vector<1x4x384xf32>,
    %c2_135 = arith.constant 2 : index
    %c0_136 = arith.constant 0 : index
    %c1_137 = arith.constant 1 : index
    %175 = vector.load %arg1[%c2_135, %c0_136, %c1_137] : memref<4x4x432xf32, #tpu.memory_space<vmem>>, vector<1x4x384xf32>
    %176 = vector.shape_cast %175 : vector<1x4x384xf32> to vector<4x384xf32>
    %c0_138 = arith.constant 0 : index
    %c4_139 = arith.constant 4 : index
    %c0_140 = arith.constant 0 : index
    %177 = vector.load %arg7[%c0_138, %c4_139, %c0_140] : memref<2x36x384xf32, #tpu.memory_space<vmem>>, vector<1x4x384xf32>
    %178 = vector.shape_cast %177 : vector<1x4x384xf32> to vector<4x384xf32>
    %179 = vector.shape_cast %176 : vector<4x384xf32> to vector<1x4x384xf32>
    tpu.vector_store %arg7[%c0_138, %c4_139, %c0_140], %179 {strides = array<i32>} : memref<2x36x384xf32, #tpu.memory_space<vmem>>, vector<1x4x384xf32>,
    %c2_141 = arith.constant 2 : index
    %c0_142 = arith.constant 0 : index
    %c2_143 = arith.constant 2 : index
    %180 = vector.load %arg1[%c2_141, %c0_142, %c2_143] : memref<4x4x432xf32, #tpu.memory_space<vmem>>, vector<1x4x384xf32>
    %181 = vector.shape_cast %180 : vector<1x4x384xf32> to vector<4x384xf32>
    %c0_144 = arith.constant 0 : index
    %c8_145 = arith.constant 8 : index
    %c0_146 = arith.constant 0 : index
    %182 = vector.load %arg7[%c0_144, %c8_145, %c0_146] : memref<2x36x384xf32, #tpu.memory_space<vmem>>, vector<1x4x384xf32>
    %183 = vector.shape_cast %182 : vector<1x4x384xf32> to vector<4x384xf32>
    %184 = vector.shape_cast %181 : vector<4x384xf32> to vector<1x4x384xf32>
    tpu.vector_store %arg7[%c0_144, %c8_145, %c0_146], %184 {strides = array<i32>} : memref<2x36x384xf32, #tpu.memory_space<vmem>>, vector<1x4x384xf32>,
    %c2_147 = arith.constant 2 : index
    %c0_148 = arith.constant 0 : index
    %c18_149 = arith.constant 18 : index
    %185 = vector.load %arg1[%c2_147, %c0_148, %c18_149] : memref<4x4x432xf32, #tpu.memory_space<vmem>>, vector<1x4x384xf32>
    %186 = vector.shape_cast %185 : vector<1x4x384xf32> to vector<4x384xf32>
    %c0_150 = arith.constant 0 : index
    %c12_151 = arith.constant 12 : index
    %c0_152 = arith.constant 0 : index
    %187 = vector.load %arg7[%c0_150, %c12_151, %c0_152] : memref<2x36x384xf32, #tpu.memory_space<vmem>>, vector<1x4x384xf32>
    %188 = vector.shape_cast %187 : vector<1x4x384xf32> to vector<4x384xf32>
    %189 = vector.shape_cast %186 : vector<4x384xf32> to vector<1x4x384xf32>
    tpu.vector_store %arg7[%c0_150, %c12_151, %c0_152], %189 {strides = array<i32>} : memref<2x36x384xf32, #tpu.memory_space<vmem>>, vector<1x4x384xf32>,
    %c2_153 = arith.constant 2 : index
    %c0_154 = arith.constant 0 : index
    %c19_155 = arith.constant 19 : index
    %190 = vector.load %arg1[%c2_153, %c0_154, %c19_155] : memref<4x4x432xf32, #tpu.memory_space<vmem>>, vector<1x4x384xf32>
    %191 = vector.shape_cast %190 : vector<1x4x384xf32> to vector<4x384xf32>
    %c0_156 = arith.constant 0 : index
    %c16_157 = arith.constant 16 : index
    %c0_158 = arith.constant 0 : index
    %192 = vector.load %arg7[%c0_156, %c16_157, %c0_158] : memref<2x36x384xf32, #tpu.memory_space<vmem>>, vector<1x4x384xf32>
    %193 = vector.shape_cast %192 : vector<1x4x384xf32> to vector<4x384xf32>
    %194 = vector.shape_cast %191 : vector<4x384xf32> to vector<1x4x384xf32>
    tpu.vector_store %arg7[%c0_156, %c16_157, %c0_158], %194 {strides = array<i32>} : memref<2x36x384xf32, #tpu.memory_space<vmem>>, vector<1x4x384xf32>,
    %c2_159 = arith.constant 2 : index
    %c0_160 = arith.constant 0 : index
    %c20_161 = arith.constant 20 : index
    %195 = vector.load %arg1[%c2_159, %c0_160, %c20_161] : memref<4x4x432xf32, #tpu.memory_space<vmem>>, vector<1x4x384xf32>
    %196 = vector.shape_cast %195 : vector<1x4x384xf32> to vector<4x384xf32>
    %c0_162 = arith.constant 0 : index
    %c20_163 = arith.constant 20 : index
    %c0_164 = arith.constant 0 : index
    %197 = vector.load %arg7[%c0_162, %c20_163, %c0_164] : memref<2x36x384xf32, #tpu.memory_space<vmem>>, vector<1x4x384xf32>
    %198 = vector.shape_cast %197 : vector<1x4x384xf32> to vector<4x384xf32>
    %199 = vector.shape_cast %196 : vector<4x384xf32> to vector<1x4x384xf32>
    tpu.vector_store %arg7[%c0_162, %c20_163, %c0_164], %199 {strides = array<i32>} : memref<2x36x384xf32, #tpu.memory_space<vmem>>, vector<1x4x384xf32>,
    %c2_165 = arith.constant 2 : index
    %c0_166 = arith.constant 0 : index
    %c36_167 = arith.constant 36 : index
    %200 = vector.load %arg1[%c2_165, %c0_166, %c36_167] : memref<4x4x432xf32, #tpu.memory_space<vmem>>, vector<1x4x384xf32>
    %201 = vector.shape_cast %200 : vector<1x4x384xf32> to vector<4x384xf32>
    %c0_168 = arith.constant 0 : index
    %c24_169 = arith.constant 24 : index
    %c0_170 = arith.constant 0 : index
    %202 = vector.load %arg7[%c0_168, %c24_169, %c0_170] : memref<2x36x384xf32, #tpu.memory_space<vmem>>, vector<1x4x384xf32>
    %203 = vector.shape_cast %202 : vector<1x4x384xf32> to vector<4x384xf32>
    %204 = vector.shape_cast %201 : vector<4x384xf32> to vector<1x4x384xf32>
    tpu.vector_store %arg7[%c0_168, %c24_169, %c0_170], %204 {strides = array<i32>} : memref<2x36x384xf32, #tpu.memory_space<vmem>>, vector<1x4x384xf32>,
    %c2_171 = arith.constant 2 : index
    %c0_172 = arith.constant 0 : index
    %c37_173 = arith.constant 37 : index
    %205 = vector.load %arg1[%c2_171, %c0_172, %c37_173] : memref<4x4x432xf32, #tpu.memory_space<vmem>>, vector<1x4x384xf32>
    %206 = vector.shape_cast %205 : vector<1x4x384xf32> to vector<4x384xf32>
    %c0_174 = arith.constant 0 : index
    %c28_175 = arith.constant 28 : index
    %c0_176 = arith.constant 0 : index
    %207 = vector.load %arg7[%c0_174, %c28_175, %c0_176] : memref<2x36x384xf32, #tpu.memory_space<vmem>>, vector<1x4x384xf32>
    %208 = vector.shape_cast %207 : vector<1x4x384xf32> to vector<4x384xf32>
    %209 = vector.shape_cast %206 : vector<4x384xf32> to vector<1x4x384xf32>
    tpu.vector_store %arg7[%c0_174, %c28_175, %c0_176], %209 {strides = array<i32>} : memref<2x36x384xf32, #tpu.memory_space<vmem>>, vector<1x4x384xf32>,
    %c2_177 = arith.constant 2 : index
    %c0_178 = arith.constant 0 : index
    %c38_179 = arith.constant 38 : index
    %210 = vector.load %arg1[%c2_177, %c0_178, %c38_179] : memref<4x4x432xf32, #tpu.memory_space<vmem>>, vector<1x4x384xf32>
    %211 = vector.shape_cast %210 : vector<1x4x384xf32> to vector<4x384xf32>
    %c0_180 = arith.constant 0 : index
    %c32_181 = arith.constant 32 : index
    %c0_182 = arith.constant 0 : index
    %212 = vector.load %arg7[%c0_180, %c32_181, %c0_182] : memref<2x36x384xf32, #tpu.memory_space<vmem>>, vector<1x4x384xf32>
    %213 = vector.shape_cast %212 : vector<1x4x384xf32> to vector<4x384xf32>
    %214 = vector.shape_cast %211 : vector<4x384xf32> to vector<1x4x384xf32>
    tpu.vector_store %arg7[%c0_180, %c32_181, %c0_182], %214 {strides = array<i32>} : memref<2x36x384xf32, #tpu.memory_space<vmem>>, vector<1x4x384xf32>,
    %c0_183 = arith.constant 0 : index
    %c0_184 = arith.constant 0 : index
    %c0_185 = arith.constant 0 : index
    %215 = vector.load %arg7[%c0_183, %c0_184, %c0_185] : memref<2x36x384xf32, #tpu.memory_space<vmem>>, vector<1x36x384xf32>
    %216 = vector.shape_cast %215 : vector<1x36x384xf32> to vector<36x384xf32>
    %cst_186 = arith.constant dense<0.000000e+00> : vector<32x384xf32>
    %217 = tpu.matmul %0, %216, %cst_186 {dimension_numbers = #tpu.dot_dimension_numbers<[1], [0], [0], [1], [0, 0, 1, 1], [], []>} : vector<32x36xf32>, vector<36x384xf32>, vector<32x384xf32> -> vector<32x384xf32>
    %218 = vector.shape_cast %217 : vector<32x384xf32> to vector<4x8x384xf32>
    %219 = vector.shape_cast %1 : vector<1x384xf32> to vector<1x1x384xf32>
    %220 = vector.broadcast %219 : vector<1x1x384xf32> to vector<4x8x384xf32>
    %221 = arith.mulf %218, %220 : vector<4x8x384xf32>
    %cst_187 = arith.constant dense<0.000000e+00> : vector<8x384xf32>
    %222 = vector.multi_reduction <add>, %221, %cst_187 [0] : vector<4x8x384xf32> to vector<8x384xf32>
    %cst_188 = arith.constant dense<0.000000e+00> : vector<8xf32>
    %223 = vector.multi_reduction <add>, %222, %cst_188 [1] : vector<8x384xf32> to vector<8xf32>
    %224 = vector.shape_cast %223 : vector<8xf32> to vector<8x1xf32>
    %225 = arith.mulf %221, %221 : vector<4x8x384xf32>
    %cst_189 = arith.constant dense<0.000000e+00> : vector<8x384xf32>
    %226 = vector.multi_reduction <add>, %225, %cst_189 [0] : vector<4x8x384xf32> to vector<8x384xf32>
    %cst_190 = arith.constant dense<0.000000e+00> : vector<8xf32>
    %227 = vector.multi_reduction <add>, %226, %cst_190 [1] : vector<8x384xf32> to vector<8xf32>
    %228 = vector.shape_cast %227 : vector<8xf32> to vector<8x1xf32>
    %cst_191 = arith.constant 9.765625E-4 : f32
    %229 = vector.broadcast %cst_191 : f32 to vector<8x1xf32>
    %230 = arith.mulf %224, %229 : vector<8x1xf32>
    %cst_192 = arith.constant 9.765625E-4 : f32
    %231 = vector.broadcast %cst_192 : f32 to vector<8x1xf32>
    %232 = arith.mulf %228, %231 : vector<8x1xf32>
    %233 = arith.mulf %230, %230 : vector<8x1xf32>
    %234 = arith.subf %232, %233 : vector<8x1xf32>
    %cst_193 = arith.constant 9.99999974E-6 : f32
    %235 = vector.broadcast %cst_193 : f32 to vector<8x1xf32>
    %236 = arith.addf %234, %235 : vector<8x1xf32>
    %237 = math.rsqrt %236 : vector<8x1xf32>
    %238 = arith.mulf %2, %237 : vector<8x1xf32>
    %239 = arith.mulf %230, %238 : vector<8x1xf32>
    %240 = arith.subf %3, %239 : vector<8x1xf32>
    %241 = vector.shape_cast %238 : vector<8x1xf32> to vector<1x8x1xf32>
    %242 = vector.broadcast %241 : vector<1x8x1xf32> to vector<4x8x384xf32>
    %243 = arith.mulf %218, %242 : vector<4x8x384xf32>
    %244 = vector.shape_cast %240 : vector<8x1xf32> to vector<1x8x1xf32>
    %245 = vector.broadcast %244 : vector<1x8x1xf32> to vector<4x8x384xf32>
    %246 = arith.addf %243, %245 : vector<4x8x384xf32>
    %cst_194 = arith.constant 0.000000e+00 : f32
    %247 = vector.broadcast %cst_194 : f32 to vector<4x8x384xf32>
    %248 = arith.maximumf %246, %247 : vector<4x8x384xf32>
    %249 = vector.shape_cast %248 : vector<4x8x384xf32> to vector<32x384xf32>
    %c2_195 = arith.constant 2 : index
    %c0_196 = arith.constant 0 : index
    %c0_197 = arith.constant 0 : index
    %250 = vector.load %arg6[%c2_195, %c0_196, %c0_197] : memref<4x32x384xf32, #tpu.memory_space<vmem>>, vector<1x32x384xf32>
    %251 = vector.shape_cast %250 : vector<1x32x384xf32> to vector<32x384xf32>
    %252 = vector.shape_cast %249 : vector<32x384xf32> to vector<1x32x384xf32>
    tpu.vector_store %arg6[%c2_195, %c0_196, %c0_197], %252 {strides = array<i32>} : memref<4x32x384xf32, #tpu.memory_space<vmem>>, vector<1x32x384xf32>,
    %c3 = arith.constant 3 : index
    %c0_198 = arith.constant 0 : index
    %c0_199 = arith.constant 0 : index
    %253 = vector.load %arg1[%c3, %c0_198, %c0_199] : memref<4x4x432xf32, #tpu.memory_space<vmem>>, vector<1x4x384xf32>
    %254 = vector.shape_cast %253 : vector<1x4x384xf32> to vector<4x384xf32>
    %c1_200 = arith.constant 1 : index
    %c0_201 = arith.constant 0 : index
    %c0_202 = arith.constant 0 : index
    %255 = vector.load %arg7[%c1_200, %c0_201, %c0_202] : memref<2x36x384xf32, #tpu.memory_space<vmem>>, vector<1x4x384xf32>
    %256 = vector.shape_cast %255 : vector<1x4x384xf32> to vector<4x384xf32>
    %257 = vector.shape_cast %254 : vector<4x384xf32> to vector<1x4x384xf32>
    tpu.vector_store %arg7[%c1_200, %c0_201, %c0_202], %257 {strides = array<i32>} : memref<2x36x384xf32, #tpu.memory_space<vmem>>, vector<1x4x384xf32>,
    %c3_203 = arith.constant 3 : index
    %c0_204 = arith.constant 0 : index
    %c1_205 = arith.constant 1 : index
    %258 = vector.load %arg1[%c3_203, %c0_204, %c1_205] : memref<4x4x432xf32, #tpu.memory_space<vmem>>, vector<1x4x384xf32>
    %259 = vector.shape_cast %258 : vector<1x4x384xf32> to vector<4x384xf32>
    %c1_206 = arith.constant 1 : index
    %c4_207 = arith.constant 4 : index
    %c0_208 = arith.constant 0 : index
    %260 = vector.load %arg7[%c1_206, %c4_207, %c0_208] : memref<2x36x384xf32, #tpu.memory_space<vmem>>, vector<1x4x384xf32>
    %261 = vector.shape_cast %260 : vector<1x4x384xf32> to vector<4x384xf32>
    %262 = vector.shape_cast %259 : vector<4x384xf32> to vector<1x4x384xf32>
    tpu.vector_store %arg7[%c1_206, %c4_207, %c0_208], %262 {strides = array<i32>} : memref<2x36x384xf32, #tpu.memory_space<vmem>>, vector<1x4x384xf32>,
    %c3_209 = arith.constant 3 : index
    %c0_210 = arith.constant 0 : index
    %c2_211 = arith.constant 2 : index
    %263 = vector.load %arg1[%c3_209, %c0_210, %c2_211] : memref<4x4x432xf32, #tpu.memory_space<vmem>>, vector<1x4x384xf32>
    %264 = vector.shape_cast %263 : vector<1x4x384xf32> to vector<4x384xf32>
    %c1_212 = arith.constant 1 : index
    %c8_213 = arith.constant 8 : index
    %c0_214 = arith.constant 0 : index
    %265 = vector.load %arg7[%c1_212, %c8_213, %c0_214] : memref<2x36x384xf32, #tpu.memory_space<vmem>>, vector<1x4x384xf32>
    %266 = vector.shape_cast %265 : vector<1x4x384xf32> to vector<4x384xf32>
    %267 = vector.shape_cast %264 : vector<4x384xf32> to vector<1x4x384xf32>
    tpu.vector_store %arg7[%c1_212, %c8_213, %c0_214], %267 {strides = array<i32>} : memref<2x36x384xf32, #tpu.memory_space<vmem>>, vector<1x4x384xf32>,
    %c3_215 = arith.constant 3 : index
    %c0_216 = arith.constant 0 : index
    %c18_217 = arith.constant 18 : index
    %268 = vector.load %arg1[%c3_215, %c0_216, %c18_217] : memref<4x4x432xf32, #tpu.memory_space<vmem>>, vector<1x4x384xf32>
    %269 = vector.shape_cast %268 : vector<1x4x384xf32> to vector<4x384xf32>
    %c1_218 = arith.constant 1 : index
    %c12_219 = arith.constant 12 : index
    %c0_220 = arith.constant 0 : index
    %270 = vector.load %arg7[%c1_218, %c12_219, %c0_220] : memref<2x36x384xf32, #tpu.memory_space<vmem>>, vector<1x4x384xf32>
    %271 = vector.shape_cast %270 : vector<1x4x384xf32> to vector<4x384xf32>
    %272 = vector.shape_cast %269 : vector<4x384xf32> to vector<1x4x384xf32>
    tpu.vector_store %arg7[%c1_218, %c12_219, %c0_220], %272 {strides = array<i32>} : memref<2x36x384xf32, #tpu.memory_space<vmem>>, vector<1x4x384xf32>,
    %c3_221 = arith.constant 3 : index
    %c0_222 = arith.constant 0 : index
    %c19_223 = arith.constant 19 : index
    %273 = vector.load %arg1[%c3_221, %c0_222, %c19_223] : memref<4x4x432xf32, #tpu.memory_space<vmem>>, vector<1x4x384xf32>
    %274 = vector.shape_cast %273 : vector<1x4x384xf32> to vector<4x384xf32>
    %c1_224 = arith.constant 1 : index
    %c16_225 = arith.constant 16 : index
    %c0_226 = arith.constant 0 : index
    %275 = vector.load %arg7[%c1_224, %c16_225, %c0_226] : memref<2x36x384xf32, #tpu.memory_space<vmem>>, vector<1x4x384xf32>
    %276 = vector.shape_cast %275 : vector<1x4x384xf32> to vector<4x384xf32>
    %277 = vector.shape_cast %274 : vector<4x384xf32> to vector<1x4x384xf32>
    tpu.vector_store %arg7[%c1_224, %c16_225, %c0_226], %277 {strides = array<i32>} : memref<2x36x384xf32, #tpu.memory_space<vmem>>, vector<1x4x384xf32>,
    %c3_227 = arith.constant 3 : index
    %c0_228 = arith.constant 0 : index
    %c20_229 = arith.constant 20 : index
    %278 = vector.load %arg1[%c3_227, %c0_228, %c20_229] : memref<4x4x432xf32, #tpu.memory_space<vmem>>, vector<1x4x384xf32>
    %279 = vector.shape_cast %278 : vector<1x4x384xf32> to vector<4x384xf32>
    %c1_230 = arith.constant 1 : index
    %c20_231 = arith.constant 20 : index
    %c0_232 = arith.constant 0 : index
    %280 = vector.load %arg7[%c1_230, %c20_231, %c0_232] : memref<2x36x384xf32, #tpu.memory_space<vmem>>, vector<1x4x384xf32>
    %281 = vector.shape_cast %280 : vector<1x4x384xf32> to vector<4x384xf32>
    %282 = vector.shape_cast %279 : vector<4x384xf32> to vector<1x4x384xf32>
    tpu.vector_store %arg7[%c1_230, %c20_231, %c0_232], %282 {strides = array<i32>} : memref<2x36x384xf32, #tpu.memory_space<vmem>>, vector<1x4x384xf32>,
    %c3_233 = arith.constant 3 : index
    %c0_234 = arith.constant 0 : index
    %c36_235 = arith.constant 36 : index
    %283 = vector.load %arg1[%c3_233, %c0_234, %c36_235] : memref<4x4x432xf32, #tpu.memory_space<vmem>>, vector<1x4x384xf32>
    %284 = vector.shape_cast %283 : vector<1x4x384xf32> to vector<4x384xf32>
    %c1_236 = arith.constant 1 : index
    %c24_237 = arith.constant 24 : index
    %c0_238 = arith.constant 0 : index
    %285 = vector.load %arg7[%c1_236, %c24_237, %c0_238] : memref<2x36x384xf32, #tpu.memory_space<vmem>>, vector<1x4x384xf32>
    %286 = vector.shape_cast %285 : vector<1x4x384xf32> to vector<4x384xf32>
    %287 = vector.shape_cast %284 : vector<4x384xf32> to vector<1x4x384xf32>
    tpu.vector_store %arg7[%c1_236, %c24_237, %c0_238], %287 {strides = array<i32>} : memref<2x36x384xf32, #tpu.memory_space<vmem>>, vector<1x4x384xf32>,
    %c3_239 = arith.constant 3 : index
    %c0_240 = arith.constant 0 : index
    %c37_241 = arith.constant 37 : index
    %288 = vector.load %arg1[%c3_239, %c0_240, %c37_241] : memref<4x4x432xf32, #tpu.memory_space<vmem>>, vector<1x4x384xf32>
    %289 = vector.shape_cast %288 : vector<1x4x384xf32> to vector<4x384xf32>
    %c1_242 = arith.constant 1 : index
    %c28_243 = arith.constant 28 : index
    %c0_244 = arith.constant 0 : index
    %290 = vector.load %arg7[%c1_242, %c28_243, %c0_244] : memref<2x36x384xf32, #tpu.memory_space<vmem>>, vector<1x4x384xf32>
    %291 = vector.shape_cast %290 : vector<1x4x384xf32> to vector<4x384xf32>
    %292 = vector.shape_cast %289 : vector<4x384xf32> to vector<1x4x384xf32>
    tpu.vector_store %arg7[%c1_242, %c28_243, %c0_244], %292 {strides = array<i32>} : memref<2x36x384xf32, #tpu.memory_space<vmem>>, vector<1x4x384xf32>,
    %c3_245 = arith.constant 3 : index
    %c0_246 = arith.constant 0 : index
    %c38_247 = arith.constant 38 : index
    %293 = vector.load %arg1[%c3_245, %c0_246, %c38_247] : memref<4x4x432xf32, #tpu.memory_space<vmem>>, vector<1x4x384xf32>
    %294 = vector.shape_cast %293 : vector<1x4x384xf32> to vector<4x384xf32>
    %c1_248 = arith.constant 1 : index
    %c32_249 = arith.constant 32 : index
    %c0_250 = arith.constant 0 : index
    %295 = vector.load %arg7[%c1_248, %c32_249, %c0_250] : memref<2x36x384xf32, #tpu.memory_space<vmem>>, vector<1x4x384xf32>
    %296 = vector.shape_cast %295 : vector<1x4x384xf32> to vector<4x384xf32>
    %297 = vector.shape_cast %294 : vector<4x384xf32> to vector<1x4x384xf32>
    tpu.vector_store %arg7[%c1_248, %c32_249, %c0_250], %297 {strides = array<i32>} : memref<2x36x384xf32, #tpu.memory_space<vmem>>, vector<1x4x384xf32>,
    %c1_251 = arith.constant 1 : index
    %c0_252 = arith.constant 0 : index
    %c0_253 = arith.constant 0 : index
    %298 = vector.load %arg7[%c1_251, %c0_252, %c0_253] : memref<2x36x384xf32, #tpu.memory_space<vmem>>, vector<1x36x384xf32>
    %299 = vector.shape_cast %298 : vector<1x36x384xf32> to vector<36x384xf32>
    %cst_254 = arith.constant dense<0.000000e+00> : vector<32x384xf32>
    %300 = tpu.matmul %0, %299, %cst_254 {dimension_numbers = #tpu.dot_dimension_numbers<[1], [0], [0], [1], [0, 0, 1, 1], [], []>} : vector<32x36xf32>, vector<36x384xf32>, vector<32x384xf32> -> vector<32x384xf32>
    %301 = vector.shape_cast %300 : vector<32x384xf32> to vector<4x8x384xf32>
    %302 = vector.shape_cast %1 : vector<1x384xf32> to vector<1x1x384xf32>
    %303 = vector.broadcast %302 : vector<1x1x384xf32> to vector<4x8x384xf32>
    %304 = arith.mulf %301, %303 : vector<4x8x384xf32>
    %cst_255 = arith.constant dense<0.000000e+00> : vector<8x384xf32>
    %305 = vector.multi_reduction <add>, %304, %cst_255 [0] : vector<4x8x384xf32> to vector<8x384xf32>
    %cst_256 = arith.constant dense<0.000000e+00> : vector<8xf32>
    %306 = vector.multi_reduction <add>, %305, %cst_256 [1] : vector<8x384xf32> to vector<8xf32>
    %307 = vector.shape_cast %306 : vector<8xf32> to vector<8x1xf32>
    %308 = arith.mulf %304, %304 : vector<4x8x384xf32>
    %cst_257 = arith.constant dense<0.000000e+00> : vector<8x384xf32>
    %309 = vector.multi_reduction <add>, %308, %cst_257 [0] : vector<4x8x384xf32> to vector<8x384xf32>
    %cst_258 = arith.constant dense<0.000000e+00> : vector<8xf32>
    %310 = vector.multi_reduction <add>, %309, %cst_258 [1] : vector<8x384xf32> to vector<8xf32>
    %311 = vector.shape_cast %310 : vector<8xf32> to vector<8x1xf32>
    %cst_259 = arith.constant 9.765625E-4 : f32
    %312 = vector.broadcast %cst_259 : f32 to vector<8x1xf32>
    %313 = arith.mulf %307, %312 : vector<8x1xf32>
    %cst_260 = arith.constant 9.765625E-4 : f32
    %314 = vector.broadcast %cst_260 : f32 to vector<8x1xf32>
    %315 = arith.mulf %311, %314 : vector<8x1xf32>
    %316 = arith.mulf %313, %313 : vector<8x1xf32>
    %317 = arith.subf %315, %316 : vector<8x1xf32>
    %cst_261 = arith.constant 9.99999974E-6 : f32
    %318 = vector.broadcast %cst_261 : f32 to vector<8x1xf32>
    %319 = arith.addf %317, %318 : vector<8x1xf32>
    %320 = math.rsqrt %319 : vector<8x1xf32>
    %321 = arith.mulf %2, %320 : vector<8x1xf32>
    %322 = arith.mulf %313, %321 : vector<8x1xf32>
    %323 = arith.subf %3, %322 : vector<8x1xf32>
    %324 = vector.shape_cast %321 : vector<8x1xf32> to vector<1x8x1xf32>
    %325 = vector.broadcast %324 : vector<1x8x1xf32> to vector<4x8x384xf32>
    %326 = arith.mulf %301, %325 : vector<4x8x384xf32>
    %327 = vector.shape_cast %323 : vector<8x1xf32> to vector<1x8x1xf32>
    %328 = vector.broadcast %327 : vector<1x8x1xf32> to vector<4x8x384xf32>
    %329 = arith.addf %326, %328 : vector<4x8x384xf32>
    %cst_262 = arith.constant 0.000000e+00 : f32
    %330 = vector.broadcast %cst_262 : f32 to vector<4x8x384xf32>
    %331 = arith.maximumf %329, %330 : vector<4x8x384xf32>
    %332 = vector.shape_cast %331 : vector<4x8x384xf32> to vector<32x384xf32>
    %c3_263 = arith.constant 3 : index
    %c0_264 = arith.constant 0 : index
    %c0_265 = arith.constant 0 : index
    %333 = vector.load %arg6[%c3_263, %c0_264, %c0_265] : memref<4x32x384xf32, #tpu.memory_space<vmem>>, vector<1x32x384xf32>
    %334 = vector.shape_cast %333 : vector<1x32x384xf32> to vector<32x384xf32>
    %335 = vector.shape_cast %332 : vector<32x384xf32> to vector<1x32x384xf32>
    tpu.vector_store %arg6[%c3_263, %c0_264, %c0_265], %335 {strides = array<i32>} : memref<4x32x384xf32, #tpu.memory_space<vmem>>, vector<1x32x384xf32>,
    return
  }
  func.func @transform_0(%arg0: i32) -> (i32, i32, i32) {
    %c0_i32 = arith.constant 0 : i32
    %c0_i32_0 = arith.constant 0 : i32
    %c0_i32_1 = arith.constant 0 : i32
    return %arg0, %c0_i32, %c0_i32_0 : i32, i32, i32
  }
  func.func @transform_1(%arg0: i32) -> (i32, i32) {
    %c0_i32 = arith.constant 0 : i32
    %c0_i32_0 = arith.constant 0 : i32
    %c0_i32_1 = arith.constant 0 : i32
    return %c0_i32, %c0_i32_0 : i32, i32
  }
  func.func @transform_2(%arg0: i32) -> (i32, i32) {
    %c0_i32 = arith.constant 0 : i32
    %c0_i32_0 = arith.constant 0 : i32
    %c0_i32_1 = arith.constant 0 : i32
    return %c0_i32, %c0_i32_0 : i32, i32
  }
  func.func @transform_3(%arg0: i32) -> (i32, i32) {
    %c0_i32 = arith.constant 0 : i32
    %c0_i32_0 = arith.constant 0 : i32
    %c0_i32_1 = arith.constant 0 : i32
    return %c0_i32, %c0_i32_0 : i32, i32
  }
  func.func @transform_4(%arg0: i32) -> (i32, i32) {
    %c0_i32 = arith.constant 0 : i32
    %c0_i32_0 = arith.constant 0 : i32
    %c0_i32_1 = arith.constant 0 : i32
    return %c0_i32, %c0_i32_0 : i32, i32
  }
  func.func @transform_5(%arg0: i32) -> (i32, i32, i32) {
    %c0_i32 = arith.constant 0 : i32
    %c0_i32_0 = arith.constant 0 : i32
    %c0_i32_1 = arith.constant 0 : i32
    return %arg0, %c0_i32, %c0_i32_0 : i32, i32, i32
  }
}

</mosaic_0001>

<llo_original>
// kernel: conv_transpose2d_layer.1
$region0: #{conv_transpose2d_layer.1}
  #allocation0 [shape = 'u32[]', space=smem, size = 0x4, offset = 0x4, fixed_abs, tag = 'smem constant byte address 0x4 - core index']
  #allocation1 [shape = 'u32[144,128]{1,0:T(1,128)}', space=vmem, size = 0x12000, scoped, tag = 'internal scratch']
  #allocation2 [shape = 'f32[2,36,384]{2,1,0:T(8,128)}', space=vmem, size = 0x1e000, scoped, tag = 'scratch operand']
  %s0 = inlined_call_operand.vmem [shape: f32[8,4,432], index: 0, kind: input, shape index: {}]
  %s1 = inlined_call_operand.vmem [shape: f32[32,36], index: 1, kind: input, shape index: {}]
  %s2 = inlined_call_operand.hbm [shape: f32[1,384], index: 2, kind: input, shape index: {}]
  %s3 = inlined_call_operand.vmem [shape: f32[8,1], index: 3, kind: input, shape index: {}]
  %s4 = inlined_call_operand.vmem [shape: f32[8,1], index: 4, kind: input, shape index: {}]
  %s5 = inlined_call_operand.vmem [shape: f32[8,32,384], index: 5, kind: output, shape index: {}]
  %s6 = sld [smem:[#allocation0]]
  $region57: #{conv_transpose2d_layer.1} parent=0
    _
  %s8 = ssub.s32 1, %s6
  %s9 = scalar_select 0, %s8, %s6
  $region1: #{conv_transpose2d_layer.1} parent=0
    #allocation3 [shape = 'u8[1536]{0}', space=vmem, size = 0x800, scoped, tag = 'input window, operand 2, single buffered']
    #allocation4 [shape = 's32[2]{0}', space=sflag, size = 0x8, scoped, tag = 'scoped memory for conv_transpose2d_layer.1']
    %10 = vsyncpa [#allocation4], 0
    loop: start=0, step=1, limit=4
    $region2: #{conv_transpose2d_layer.1} parent=1 // loop_pre_header
      _
    $region3: #{conv_transpose2d_layer.1} parent=1 // loop_header
      %s12 = sphi 0, %s16
      %p13 = scmp.ge.s32.totalorder %s12, 4
      %s22 = sphi 0, %s24
      %s25 = sphi 0, %s22
      %s26 = sphi 0, %s25
      %s42 = sphi 0, %s26
      %s46 = sphi 0, %s46
      %s48 = sphi 0, %s46
      %s49 = sphi 0, %s48
      %s63 = sphi 0, %s49
      %s67 = sphi 0, %s67
      %s69 = sphi 0, %s67
      %s70 = sphi 0, %s69
      %s84 = sphi 0, %s70
      %s88 = sphi 0, %s88
      %s90 = sphi 0, %s88
      %s91 = sphi 0, %s90
      %s105 = sphi 0, %s91
      %s109 = sphi 0, %s109
      %s111 = sphi 0, %s109
      %s112 = sphi 0, %s111
      %s126 = sphi 0, %s112
      %s132 = sphi 0, %s134
      %s135 = sphi 0, %s132
      %s136 = sphi 0, %s135
      %s152 = sphi 0, %s136
    $region4: #{conv_transpose2d_layer.1} parent=1 // loop_header_branch
      %15 = sbr.rel (%p13) target = $region8
    $region5: #{conv_transpose2d_layer.1} parent=1 // loop_body
      %s17 = ssub.s32 %s12, 1
      %s18 = ssub.s32 %s12, 2
      %s19 = sadd.s32 %s12, 1
      %s20 = ssub.s32 %s12, %s19
      %p21 = scmp.eq.s32.totalorder %s20, 0
      %s23 = sadd.s32 %s22, 1
      %s24 = scalar_select %p21, %s22, %s23
      %p27 = pneg %p21
      %p28 = scmp.eq.s32.totalorder %s12, 1
      %p29 = por %p27, %p28
      %p30 = scmp.ne.s32.totalorder %s22, %s25
      %p31 = scmp.eq.s32.totalorder %s12, 0
      %p32 = por %p30, %p31
      %p33 = scmp.ne.s32.totalorder %s22, %s25
      %p34 = scmp.eq.s32.totalorder %s17, 1
      %p35 = por %p33, %p34
      %p36 = scmp.ne.s32.totalorder %s25, %s26
      %p37 = scmp.eq.s32.totalorder %s17, 0
      %p38 = por %p36, %p37
      %p39 = scmp.ne.s32.totalorder %s25, %s26
      %p40 = scmp.eq.s32.totalorder %s18, 1
      %p41 = por %p39, %p40
      %p43 = scmp.ne.s32.totalorder %s26, %s42
      %p44 = scmp.eq.s32.totalorder %s18, 0
      %p45 = por %p43, %p44
      %s47 = sadd.s32 %s46, 1
      %p50 = scmp.eq.s32.totalorder %s12, 1
      %p51 = scmp.ne.s32.totalorder %s46, %s48
      %p52 = scmp.eq.s32.totalorder %s12, 0
      %p53 = por %p51, %p52
      %p54 = scmp.ne.s32.totalorder %s46, %s48
      %p55 = scmp.eq.s32.totalorder %s17, 1
      %p56 = por %p54, %p55
      %p57 = scmp.ne.s32.totalorder %s48, %s49
      %p58 = scmp.eq.s32.totalorder %s17, 0
      %p59 = por %p57, %p58
      %p60 = scmp.ne.s32.totalorder %s48, %s49
      %p61 = scmp.eq.s32.totalorder %s18, 1
      %p62 = por %p60, %p61
      %p64 = scmp.ne.s32.totalorder %s49, %s63
      %p65 = scmp.eq.s32.totalorder %s18, 0
      %p66 = por %p64, %p65
      %s68 = sadd.s32 %s67, 1
      %p71 = scmp.eq.s32.totalorder %s12, 1
      %p72 = scmp.ne.s32.totalorder %s67, %s69
      %p73 = scmp.eq.s32.totalorder %s12, 0
      %p74 = por %p72, %p73
      %p75 = scmp.ne.s32.totalorder %s67, %s69
      %p76 = scmp.eq.s32.totalorder %s17, 1
      %p77 = por %p75, %p76
      %p78 = scmp.ne.s32.totalorder %s69, %s70
      %p79 = scmp.eq.s32.totalorder %s17, 0
      %p80 = por %p78, %p79
      %p81 = scmp.ne.s32.totalorder %s69, %s70
      %p82 = scmp.eq.s32.totalorder %s18, 1
      %p83 = por %p81, %p82
      %p85 = scmp.ne.s32.totalorder %s70, %s84
      %p86 = scmp.eq.s32.totalorder %s18, 0
      %p87 = por %p85, %p86
      %s89 = sadd.s32 %s88, 1
      %p92 = scmp.eq.s32.totalorder %s12, 1
      %p93 = scmp.ne.s32.totalorder %s88, %s90
      %p94 = scmp.eq.s32.totalorder %s12, 0
      %p95 = por %p93, %p94
      %p96 = scmp.ne.s32.totalorder %s88, %s90
      %p97 = scmp.eq.s32.totalorder %s17, 1
      %p98 = por %p96, %p97
      %p99 = scmp.ne.s32.totalorder %s90, %s91
      %p100 = scmp.eq.s32.totalorder %s17, 0
      %p101 = por %p99, %p100
      %p102 = scmp.ne.s32.totalorder %s90, %s91
      %p103 = scmp.eq.s32.totalorder %s18, 1
      %p104 = por %p102, %p103
      %p106 = scmp.ne.s32.totalorder %s91, %s105
      %p107 = scmp.eq.s32.totalorder %s18, 0
      %p108 = por %p106, %p107
      %s110 = sadd.s32 %s109, 1
      %p113 = scmp.eq.s32.totalorder %s12, 1
      %p114 = scmp.ne.s32.totalorder %s109, %s111
      %p115 = scmp.eq.s32.totalorder %s12, 0
      %p116 = por %p114, %p115
      %p117 = scmp.ne.s32.totalorder %s109, %s111
      %p118 = scmp.eq.s32.totalorder %s17, 1
      %p119 = por %p117, %p118
      %p120 = scmp.ne.s32.totalorder %s111, %s112
      %p121 = scmp.eq.s32.totalorder %s17, 0
      %p122 = por %p120, %p121
      %p123 = scmp.ne.s32.totalorder %s111, %s112
      %p124 = scmp.eq.s32.totalorder %s18, 1
      %p125 = por %p123, %p124
      %p127 = scmp.ne.s32.totalorder %s112, %s126
      %p128 = scmp.eq.s32.totalorder %s18, 0
      %p129 = por %p127, %p128
      %s130 = ssub.s32 %s12, %s19
      %p131 = scmp.eq.s32.totalorder %s130, 0
      %s133 = sadd.s32 %s132, 1
      %s134 = scalar_select %p131, %s132, %s133
      %p137 = pneg %p131
      %p138 = scmp.eq.s32.totalorder %s12, 1
      %p139 = por %p137, %p138
      %p140 = scmp.ne.s32.totalorder %s132, %s135
      %p141 = scmp.eq.s32.totalorder %s12, 0
      %p142 = por %p140, %p141
      %p143 = scmp.ne.s32.totalorder %s132, %s135
      %p144 = scmp.eq.s32.totalorder %s17, 1
      %p145 = por %p143, %p144
      %p146 = scmp.ne.s32.totalorder %s135, %s136
      %p147 = scmp.eq.s32.totalorder %s17, 0
      %p148 = por %p146, %p147
      %p149 = scmp.ne.s32.totalorder %s135, %s136
      %p150 = scmp.eq.s32.totalorder %s18, 1
      %p151 = por %p149, %p150
      %p153 = scmp.ne.s32.totalorder %s136, %s152
      %p154 = scmp.eq.s32.totalorder %s18, 0
      %p155 = por %p153, %p154
      %p156 = scmp.le.s32.totalorder 1, %s12
      %p157 = scmp.lt.s32.totalorder %s12, 3
      %p158 = pnand %p156, %p157
      %p159 = pneg %p158
      // Predicated region
      $region9: #{conv_transpose2d_layer.1} parent=5 // pred_check
        _
      $region10: #{conv_transpose2d_layer.1} parent=5 // pred_check_branch
        %161 = sbr.rel (%p158) target = $region12
      $region11: #{conv_transpose2d_layer.1} parent=5 // pred_region
        %s162 = ssub.s32 %s12, 1
        // Predicated region
        $region13: #{conv_transpose2d_layer.1} parent=11 // pred_check
          %p163 = pneg %p59
        $region14: #{conv_transpose2d_layer.1} parent=11 // pred_check_branch
          %165 = sbr.rel (%p163) target = $region16
        $region15: #{conv_transpose2d_layer.1} parent=11 // pred_region
          _
        $region16: #{conv_transpose2d_layer.1} parent=11 // pred_fallthru
          _
        // Predicated region
        $region17: #{conv_transpose2d_layer.1} parent=11 // pred_check
          %p166 = pneg %p80
        $region18: #{conv_transpose2d_layer.1} parent=11 // pred_check_branch
          %168 = sbr.rel (%p166) target = $region20
        $region19: #{conv_transpose2d_layer.1} parent=11 // pred_region
          %s170 = ssub.s32 48, 48
          %171 = vsyncadd [#allocation4], %s170
          %s173 = sshll.u32 [#allocation3], 4
          %s174 = int_to_ptr.vmem [resolvable:$true] %s173
          %176 = dma.hbm_to_vmem [thread:$0]  %s2, 48, %s174, [#allocation4]
        $region20: #{conv_transpose2d_layer.1} parent=11 // pred_fallthru
          _
        // Predicated region
        $region21: #{conv_transpose2d_layer.1} parent=11 // pred_check
          %p177 = pneg %p101
        $region22: #{conv_transpose2d_layer.1} parent=11 // pred_check_branch
          %179 = sbr.rel (%p177) target = $region24
        $region23: #{conv_transpose2d_layer.1} parent=11 // pred_region
          _
        $region24: #{conv_transpose2d_layer.1} parent=11 // pred_fallthru
          _
        // Predicated region
        $region25: #{conv_transpose2d_layer.1} parent=11 // pred_check
          %p180 = pneg %p122
        $region26: #{conv_transpose2d_layer.1} parent=11 // pred_check_branch
          %182 = sbr.rel (%p180) target = $region28
        $region27: #{conv_transpose2d_layer.1} parent=11 // pred_region
          _
        $region28: #{conv_transpose2d_layer.1} parent=11 // pred_fallthru
          _
      $region12: #{conv_transpose2d_layer.1} parent=5 // pred_fallthru
        _
      %p183 = scmp.lt.s32.totalorder %s12, 2
      // Predicated region
      $region29: #{conv_transpose2d_layer.1} parent=5 // pred_check
        %p184 = pneg %p183
      $region30: #{conv_transpose2d_layer.1} parent=5 // pred_check_branch
        %186 = sbr.rel (%p184) target = $region32
      $region31: #{conv_transpose2d_layer.1} parent=5 // pred_region
        // Predicated region
        $region33: #{conv_transpose2d_layer.1} parent=31 // pred_check
          %p187 = pneg %p32
        $region34: #{conv_transpose2d_layer.1} parent=31 // pred_check_branch
          %189 = sbr.rel (%p187) target = $region36
        $region35: #{conv_transpose2d_layer.1} parent=31 // pred_region
          %s190 = smul.u32 4, %s12
          %p191 = scmp.lt.s32.totalorder %s190, 7
          %s192 = scalar_select %p191, %s190, 7
          %s193 = smul.addr %s192, 4
          %s194 = smul.addr %s193, 4
          %s195 = scalar_lea.vmem %s0, %s194
          %s196 = smul.u32 4, %s12
        $region36: #{conv_transpose2d_layer.1} parent=31 // pred_fallthru
          _
      $region32: #{conv_transpose2d_layer.1} parent=5 // pred_fallthru
        _
      %p197 = scmp.le.s32.totalorder 1, %s12
      %p198 = scmp.lt.s32.totalorder %s12, 3
      %p199 = pnand %p197, %p198
      %p200 = pneg %p199
      // Predicated region
      $region37: #{conv_transpose2d_layer.1} parent=5 // pred_check
        _
      $region38: #{conv_transpose2d_layer.1} parent=5 // pred_check_branch
        %202 = sbr.rel (%p199) target = $region40
      $region39: #{conv_transpose2d_layer.1} parent=5 // pred_region
        %s203 = ssub.s32 %s12, 1
        // Predicated region
        $region41: #{conv_transpose2d_layer.1} parent=39 // pred_check
          %p204 = pneg %p80
        $region42: #{conv_transpose2d_layer.1} parent=39 // pred_check_branch
          %206 = sbr.rel (%p204) target = $region44
        $region43: #{conv_transpose2d_layer.1} parent=39 // pred_region
          %207 = dma.done [#allocation4], 48
        $region44: #{conv_transpose2d_layer.1} parent=39 // pred_fallthru
          _
        %s208 = smul.u32 4, %s17
        %p209 = scmp.lt.s32.totalorder %s208, 7
        %s210 = scalar_select %p209, %s208, 7
        %s211 = smul.addr %s210, 4
        %s212 = smul.addr %s211, 4
        %s213 = scalar_lea.vmem %s0, %s212
        %p214 = pneg %p38
        %p215 = pneg %p35
        %p216 = pneg %p59
        %p217 = pneg %p56
        %p218 = pneg %p80
        %p219 = pneg %p77
        %p220 = pneg %p101
        %p221 = pneg %p98
        %p222 = pneg %p122
        %p223 = pneg %p119
        %p224 = pneg %p148
        %p225 = pneg %p145
        %s226 = smul.u32 4, %s17
        %p227 = scmp.lt.s32.totalorder %s226, 7
        %s228 = scalar_select %p227, %s226, 7
        %s229 = smul.addr %s228, 12
        %s230 = smul.addr %s229, 8
        %s231 = scalar_lea.vmem %s5, %s230
        %s232 = smul.u32 4, %s17
        %p233 = scmp.lt.s32.totalorder %s232, 7
        %s234 = scalar_select %p233, %s232, 7
        %s235 = smul.addr %s234, 4
        %s236 = smul.addr %s235, 4
        %s237 = scalar_lea.vmem %s0, %s236
        %s238 = smul.u32 4, %s17
        %s239 = smul.u32 4, %s17
        %p240 = scmp.lt.s32.totalorder %s239, 7
        %s241 = scalar_select %p240, %s239, 7
        %s242 = smul.addr %s241, 12
        %s243 = smul.addr %s242, 8
        %s244 = scalar_lea.vmem %s5, %s243
        %s245 = smul.u32 4, %s17
        %v246 = vld [vmem:[%s1] sm:$0xff]
        %v247 = vld [vmem:[%s1 + $0x8] sm:$0xff]
        %v248 = vld [vmem:[%s1 + $0x10] sm:$0xff]
        %v249 = vld [vmem:[%s1 + $0x18] sm:$0xff]
        %v250 = vld [vmem:[#allocation3] sm:$0x7]
        %v251 = vld [vmem:[%s3] sm:$0xff]
        %v252 = vld [vmem:[%s4] sm:$0xff]
        %v253 = vld [vmem:[%s237] sm:$0xff]
        %v254 = vld [vmem:[%s237 + $0x8] sm:$0xf]
        %v256 = vcombine.high %v253, %v253
        %258 = vst [vmem:[#allocation2] sm:$0xf] %v253
        %259 = vst [vmem:[#allocation2 + $0x8] sm:$0xf] %v256
        %260 = vst [vmem:[#allocation2 + $0x10] sm:$0xf] %v254
        %v261 = vld [vmem:[%s237] sm:$0xff]
        %v262 = vld [vmem:[%s237 + $0x8] sm:$0xff]
        %v265 = vcombine.low %v261, %v261
        %v266 = vcombine.low %v262, %v262
        %267 = vrot.lane.b32.xlu0 %v265, 127
        %v268 = vpop.permute.xlu0 %267
        %269 = vrot.lane.b32.xlu0 %v261, 127
        %v270 = vpop.permute.xlu0 %269
        %271 = vrot.lane.b32.xlu0 %v266, 127
        %v272 = vpop.permute.xlu0 %271
        %273 = vrot.lane.b32.xlu0 %v262, 127
        %v274 = vpop.permute.xlu0 %273
        %vm275 = vcmask 1039360
        %v276 = vsel %vm275, %v268, %v270
        %v277 = vsel %vm275, %v270, %v272
        %v278 = vsel %vm275, %v272, %v274
        %282 = vst [vmem:[#allocation2] sm:$0xf0] %v276
        %283 = vst [vmem:[#allocation2 + $0x8] sm:$0xf0] %v277
        %284 = vst [vmem:[#allocation2 + $0x10] sm:$0xf0] %v278
        %v285 = vld [vmem:[%s237] sm:$0xff]
        %v286 = vld [vmem:[%s237 + $0x8] sm:$0xff]
        %v289 = vcombine.high %v285, %v285
        %v290 = vcombine.high %v286, %v286
        %291 = vrot.lane.b32.xlu0 %v285, 126
        %v292 = vpop.permute.xlu0 %291
        %293 = vrot.lane.b32.xlu0 %v289, 126
        %v294 = vpop.permute.xlu0 %293
        %295 = vrot.lane.b32.xlu0 %v286, 126
        %v296 = vpop.permute.xlu0 %295
        %297 = vrot.lane.b32.xlu0 %v290, 126
        %v298 = vpop.permute.xlu0 %297
        %vm299 = vcmask 1031168
        %v300 = vsel %vm299, %v292, %v294
        %v301 = vsel %vm299, %v294, %v296
        %v302 = vsel %vm299, %v296, %v298
        %306 = vst [vmem:[#allocation2 + $0x18] sm:$0xf] %v300
        %307 = vst [vmem:[#allocation2 + $0x20] sm:$0xf] %v301
        %308 = vst [vmem:[#allocation2 + $0x28] sm:$0xf] %v302
        %v309 = vld [vmem:[%s237] sm:$0xff]
        %v310 = vld [vmem:[%s237 + $0x8] sm:$0xff]
        %v313 = vcombine.low %v309, %v309
        %v314 = vcombine.low %v310, %v310
        %315 = vrot.lane.b32.xlu0 %v313, 110
        %v316 = vpop.permute.xlu0 %315
        %317 = vrot.lane.b32.xlu0 %v309, 110
        %v318 = vpop.permute.xlu0 %317
        %319 = vrot.lane.b32.xlu0 %v314, 110
        %v320 = vpop.permute.xlu0 %319
        %321 = vrot.lane.b32.xlu0 %v310, 110
        %v322 = vpop.permute.xlu0 %321
        %vm323 = vcmask 900096
        %v324 = vsel %vm323, %v316, %v318
        %v325 = vsel %vm323, %v318, %v320
        %v326 = vsel %vm323, %v320, %v322
        %330 = vst [vmem:[#allocation2 + $0x18] sm:$0xf0] %v324
        %331 = vst [vmem:[#allocation2 + $0x20] sm:$0xf0] %v325
        %332 = vst [vmem:[#allocation2 + $0x28] sm:$0xf0] %v326
        %v333 = vld [vmem:[%s237] sm:$0xff]
        %v334 = vld [vmem:[%s237 + $0x8] sm:$0xff]
        %v337 = vcombine.high %v333, %v333
        %v338 = vcombine.high %v334, %v334
        %339 = vrot.lane.b32.xlu0 %v333, 109
        %v340 = vpop.permute.xlu0 %339
        %341 = vrot.lane.b32.xlu0 %v337, 109
        %v342 = vpop.permute.xlu0 %341
        %343 = vrot.lane.b32.xlu0 %v334, 109
        %v344 = vpop.permute.xlu0 %343
        %345 = vrot.lane.b32.xlu0 %v338, 109
        %v346 = vpop.permute.xlu0 %345
        %vm347 = vcmask 891904
        %v348 = vsel %vm347, %v340, %v342
        %v349 = vsel %vm347, %v342, %v344
        %v350 = vsel %vm347, %v344, %v346
        %354 = vst [vmem:[#allocation2 + $0x30] sm:$0xf] %v348
        %355 = vst [vmem:[#allocation2 + $0x38] sm:$0xf] %v349
        %356 = vst [vmem:[#allocation2 + $0x40] sm:$0xf] %v350
        %v357 = vld [vmem:[%s237] sm:$0xff]
        %v358 = vld [vmem:[%s237 + $0x8] sm:$0xff]
        %v361 = vcombine.low %v357, %v357
        %v362 = vcombine.low %v358, %v358
        %363 = vrot.lane.b32.xlu0 %v361, 108
        %v364 = vpop.permute.xlu0 %363
        %365 = vrot.lane.b32.xlu0 %v357, 108
        %v366 = vpop.permute.xlu0 %365
        %367 = vrot.lane.b32.xlu0 %v362, 108
        %v368 = vpop.permute.xlu0 %367
        %369 = vrot.lane.b32.xlu0 %v358, 108
        %v370 = vpop.permute.xlu0 %369
        %vm371 = vcmask 883712
        %v372 = vsel %vm371, %v364, %v366
        %v373 = vsel %vm371, %v366, %v368
        %v374 = vsel %vm371, %v368, %v370
        %378 = vst [vmem:[#allocation2 + $0x30] sm:$0xf0] %v372
        %379 = vst [vmem:[#allocation2 + $0x38] sm:$0xf0] %v373
        %380 = vst [vmem:[#allocation2 + $0x40] sm:$0xf0] %v374
        %v381 = vld [vmem:[%s237] sm:$0xff]
        %v382 = vld [vmem:[%s237 + $0x8] sm:$0xff]
        %v385 = vcombine.high %v381, %v381
        %v386 = vcombine.high %v382, %v382
        %387 = vrot.lane.b32.xlu0 %v381, 92
        %v388 = vpop.permute.xlu0 %387
        %389 = vrot.lane.b32.xlu0 %v385, 92
        %v390 = vpop.permute.xlu0 %389
        %391 = vrot.lane.b32.xlu0 %v382, 92
        %v392 = vpop.permute.xlu0 %391
        %393 = vrot.lane.b32.xlu0 %v386, 92
        %v394 = vpop.permute.xlu0 %393
        %vm395 = vcmask 752640
        %v396 = vsel %vm395, %v388, %v390
        %v397 = vsel %vm395, %v390, %v392
        %v398 = vsel %vm395, %v392, %v394
        %402 = vst [vmem:[#allocation2 + $0x48] sm:$0xf] %v396
        %403 = vst [vmem:[#allocation2 + $0x50] sm:$0xf] %v397
        %404 = vst [vmem:[#allocation2 + $0x58] sm:$0xf] %v398
        %v405 = vld [vmem:[%s237] sm:$0xff]
        %v406 = vld [vmem:[%s237 + $0x8] sm:$0xff]
        %v409 = vcombine.low %v405, %v405
        %v410 = vcombine.low %v406, %v406
        %411 = vrot.lane.b32.xlu0 %v409, 91
        %v412 = vpop.permute.xlu0 %411
        %413 = vrot.lane.b32.xlu0 %v405, 91
        %v414 = vpop.permute.xlu0 %413
        %415 = vrot.lane.b32.xlu0 %v410, 91
        %v416 = vpop.permute.xlu0 %415
        %417 = vrot.lane.b32.xlu0 %v406, 91
        %v418 = vpop.permute.xlu0 %417
        %vm419 = vcmask 744448
        %v420 = vsel %vm419, %v412, %v414
        %v421 = vsel %vm419, %v414, %v416
        %v422 = vsel %vm419, %v416, %v418
        %426 = vst [vmem:[#allocation2 + $0x48] sm:$0xf0] %v420
        %427 = vst [vmem:[#allocation2 + $0x50] sm:$0xf0] %v421
        %428 = vst [vmem:[#allocation2 + $0x58] sm:$0xf0] %v422
        %v429 = vld [vmem:[%s237] sm:$0xff]
        %v430 = vld [vmem:[%s237 + $0x8] sm:$0xff]
        %v433 = vcombine.high %v429, %v429
        %v434 = vcombine.high %v430, %v430
        %435 = vrot.lane.b32.xlu0 %v429, 90
        %v436 = vpop.permute.xlu0 %435
        %437 = vrot.lane.b32.xlu0 %v433, 90
        %v438 = vpop.permute.xlu0 %437
        %439 = vrot.lane.b32.xlu0 %v430, 90
        %v440 = vpop.permute.xlu0 %439
        %441 = vrot.lane.b32.xlu0 %v434, 90
        %v442 = vpop.permute.xlu0 %441
        %vm443 = vcmask 736256
        %v444 = vsel %vm443, %v436, %v438
        %v445 = vsel %vm443, %v438, %v440
        %v446 = vsel %vm443, %v440, %v442
        %450 = vst [vmem:[#allocation2 + $0x60] sm:$0xf] %v444
        %451 = vst [vmem:[#allocation2 + $0x68] sm:$0xf] %v445
        %452 = vst [vmem:[#allocation2 + $0x70] sm:$0xf] %v446
        %v453 = vld [vmem:[#allocation2] sm:$0xff]
        %v454 = vld [vmem:[#allocation2 + $0x8] sm:$0xff]
        %v455 = vld [vmem:[#allocation2 + $0x10] sm:$0xff]
        %v456 = vld [vmem:[#allocation2 + $0x18] sm:$0xff]
        %v457 = vld [vmem:[#allocation2 + $0x20] sm:$0xff]
        %v458 = vld [vmem:[#allocation2 + $0x28] sm:$0xff]
        %v459 = vld [vmem:[#allocation2 + $0x30] sm:$0xff]
        %v460 = vld [vmem:[#allocation2 + $0x38] sm:$0xff]
        %v461 = vld [vmem:[#allocation2 + $0x40] sm:$0xff]
        %v462 = vld [vmem:[#allocation2 + $0x48] sm:$0xff]
        %v463 = vld [vmem:[#allocation2 + $0x50] sm:$0xff]
        %v464 = vld [vmem:[#allocation2 + $0x58] sm:$0xff]
        %v465 = vld [vmem:[#allocation2 + $0x60] sm:$0xf]
        %v466 = vld [vmem:[#allocation2 + $0x68] sm:$0xf]
        %v467 = vld [vmem:[#allocation2 + $0x70] sm:$0xf]
        %vm468 = vcmask 293888
        %v470 = vsel %vm468, %v246, 0
        %v473 = vsel %vm468, %v247, 0
        %v476 = vsel %vm468, %v248, 0
        %v479 = vsel %vm468, %v249, 0
        %vm481 = vcmask 1043456
        %v483 = vsel %vm481, %v465, 0
        %v486 = vsel %vm481, %v466, 0
        %v489 = vsel %vm481, %v467, 0
        %491 = vmatprep.subr.mxu0 0.0
        %492 = vmatpush1.msra.mxu0 0.0
        %493 = vmatprep.subr.mxu0 0.0
        %494 = vmatpush1.msra.mxu0 0.0
        %495 = vmatprep.subr.mxu0 0.0
        %496 = vmatpush1.msra.mxu0 0.0
        %497 = vmatprep.subr.mxu0 0.0
        %498 = vmatpush1.msra.mxu0 0.0
        %499 = vmatprep.subr.mxu0 0.0
        %500 = vmatpush1.msra.mxu0 0.0
        %501 = vmatprep.subr.mxu0 0.0
        %502 = vmatpush1.msra.mxu0 0.0
        %503 = vmatprep.subr.mxu0 0.0
        %504 = vmatpush1.msra.mxu0 0.0
        %505 = vmatprep.subr.mxu0 0.0
        %506 = vmatpush1.msra.mxu0 0.0
        %507 = vmatprep.subr.mxu0 0.0
        %508 = vmatpush1.msra.mxu0 0.0
        %509 = vmatprep.subr.mxu0 0.0
        %510 = vmatpush1.msra.mxu0 0.0
        %511 = vmatprep.subr.mxu0 0.0
        %512 = vmatpush1.msra.mxu0 0.0
        %513 = vmatprep.subr.mxu0 %v486
        %514 = vmatpush1.msra.mxu0 %v483
        %515 = vmatprep.subr.mxu0 %v463
        %516 = vmatpush1.msra.mxu0 %v462
        %517 = vmatprep.subr.mxu0 %v460
        %518 = vmatpush1.msra.mxu0 %v459
        %519 = vmatprep.subr.mxu0 %v457
        %520 = vmatpush1.msra.mxu0 %v456
        %521 = vmatprep.subr.mxu0 %v454
        %522 = vmatpush1.msra.mxu0 %v453
        %523 = vmatprep.subr.mxu0 0.0
        %524 = vmatpush2.msra.mxu0 0.0
        %525 = vmatprep.subr.mxu0 0.0
        %526 = vmatpush2.msra.mxu0 0.0
        %527 = vmatprep.subr.mxu0 0.0
        %528 = vmatpush2.msra.mxu0 0.0
        %529 = vmatprep.subr.mxu0 0.0
        %530 = vmatpush2.msra.mxu0 0.0
        %531 = vmatprep.subr.mxu0 0.0
        %532 = vmatpush2.msra.mxu0 0.0
        %533 = vmatprep.subr.mxu0 0.0
        %534 = vmatpush2.msra.mxu0 0.0
        %535 = vmatprep.subr.mxu0 0.0
        %536 = vmatpush2.msra.mxu0 0.0
        %537 = vmatprep.subr.mxu0 0.0
        %538 = vmatpush2.msra.mxu0 0.0
        %539 = vmatprep.subr.mxu0 0.0
        %540 = vmatpush2.msra.mxu0 0.0
        %541 = vmatprep.subr.mxu0 0.0
        %542 = vmatpush2.msra.mxu0 0.0
        %543 = vmatprep.subr.mxu0 0.0
        %544 = vmatpush2.msra.mxu0 0.0
        %545 = vmatprep.subr.mxu0 0.0
        %546 = vmatpush2.msra.mxu0 0.0
        %547 = vmatprep.subr.mxu0 0.0
        %548 = vmatpush2.msra.mxu0 0.0
        %549 = vmatprep.subr.mxu0 0.0
        %550 = vmatpush2.msra.mxu0 0.0
        %551 = vmatprep.subr.mxu0 0.0
        %552 = vmatpush2.msra.mxu0 0.0
        %553 = vmatprep.subr.mxu0 0.0
        %554 = vmatpush2.msra.mxu0 0.0
        %555 = vmatprep.mubr.f32.mxu0 0.0
        %556 = vmatmul.mubr.f32.gmra.mxu0 %v470
        %v557 = vpop.f32.mrf.mxu0
        %v558 = vadd.f32 0.0, %v557
        %v559 = vpop.f32.mrf.mxu0
        %v560 = vadd.f32 0.0, %v559
        %561 = vmatprep.mubr.f32.mxu0 0.0
        %562 = vmatmul.mubr.f32.gmra.mxu0 %v473
        %v563 = vpop.f32.mrf.mxu0
        %v564 = vadd.f32 0.0, %v563
        %v565 = vpop.f32.mrf.mxu0
        %v566 = vadd.f32 0.0, %v565
        %567 = vmatprep.mubr.f32.mxu0 0.0
        %568 = vmatmul.mubr.f32.gmra.mxu0 %v476
        %v569 = vpop.f32.mrf.mxu0
        %v570 = vadd.f32 0.0, %v569
        %v571 = vpop.f32.mrf.mxu0
        %v572 = vadd.f32 0.0, %v571
        %573 = vmatprep.mubr.f32.mxu0 0.0
        %574 = vmatmul.mubr.f32.gmra.mxu0 %v479
        %v575 = vpop.f32.mrf.mxu0
        %v576 = vadd.f32 0.0, %v575
        %v577 = vpop.f32.mrf.mxu0
        %v578 = vadd.f32 0.0, %v577
        %579 = vdwg.mxu0
        %580 = vmatprep.subr.mxu0 0.0
        %581 = vmatpush1.msra.mxu0 0.0
        %582 = vmatprep.subr.mxu0 0.0
        %583 = vmatpush1.msra.mxu0 0.0
        %584 = vmatprep.subr.mxu0 0.0
        %585 = vmatpush1.msra.mxu0 0.0
        %586 = vmatprep.subr.mxu0 0.0
        %587 = vmatpush1.msra.mxu0 0.0
        %588 = vmatprep.subr.mxu0 0.0
        %589 = vmatpush1.msra.mxu0 0.0
        %590 = vmatprep.subr.mxu0 0.0
        %591 = vmatpush1.msra.mxu0 0.0
        %592 = vmatprep.subr.mxu0 0.0
        %593 = vmatpush1.msra.mxu0 0.0
        %594 = vmatprep.subr.mxu0 0.0
        %595 = vmatpush1.msra.mxu0 0.0
        %596 = vmatprep.subr.mxu0 0.0
        %597 = vmatpush1.msra.mxu0 0.0
        %598 = vmatprep.subr.mxu0 0.0
        %599 = vmatpush1.msra.mxu0 0.0
        %600 = vmatprep.subr.mxu0 0.0
        %601 = vmatpush1.msra.mxu0 0.0
        %602 = vmatprep.subr.mxu0 0.0
        %603 = vmatpush1.msra.mxu0 %v489
        %604 = vmatprep.subr.mxu0 0.0
        %605 = vmatpush1.msra.mxu0 %v464
        %606 = vmatprep.subr.mxu0 0.0
        %607 = vmatpush1.msra.mxu0 %v461
        %608 = vmatprep.subr.mxu0 0.0
        %609 = vmatpush1.msra.mxu0 %v458
        %610 = vmatprep.subr.mxu0 0.0
        %611 = vmatpush1.msra.mxu0 %v455
        %612 = vmatprep.subr.mxu0 0.0
        %613 = vmatpush2.msra.mxu0 0.0
        %614 = vmatprep.subr.mxu0 0.0
        %615 = vmatpush2.msra.mxu0 0.0
        %616 = vmatprep.subr.mxu0 0.0
        %617 = vmatpush2.msra.mxu0 0.0
        %618 = vmatprep.subr.mxu0 0.0
        %619 = vmatpush2.msra.mxu0 0.0
        %620 = vmatprep.subr.mxu0 0.0
        %621 = vmatpush2.msra.mxu0 0.0
        %622 = vmatprep.subr.mxu0 0.0
        %623 = vmatpush2.msra.mxu0 0.0
        %624 = vmatprep.subr.mxu0 0.0
        %625 = vmatpush2.msra.mxu0 0.0
        %626 = vmatprep.subr.mxu0 0.0
        %627 = vmatpush2.msra.mxu0 0.0
        %628 = vmatprep.subr.mxu0 0.0
        %629 = vmatpush2.msra.mxu0 0.0
        %630 = vmatprep.subr.mxu0 0.0
        %631 = vmatpush2.msra.mxu0 0.0
        %632 = vmatprep.subr.mxu0 0.0
        %633 = vmatpush2.msra.mxu0 0.0
        %634 = vmatprep.subr.mxu0 0.0
        %635 = vmatpush2.msra.mxu0 0.0
        %636 = vmatprep.subr.mxu0 0.0
        %637 = vmatpush2.msra.mxu0 0.0
        %638 = vmatprep.subr.mxu0 0.0
        %639 = vmatpush2.msra.mxu0 0.0
        %640 = vmatprep.subr.mxu0 0.0
        %641 = vmatpush2.msra.mxu0 0.0
        %642 = vmatprep.subr.mxu0 0.0
        %643 = vmatpush2.msra.mxu0 0.0
        %644 = vmatprep.mubr.f32.mxu0 0.0
        %645 = vmatmul.mubr.f32.gmra.mxu0 %v470
        %v646 = vpop.f32.mrf.mxu0
        %v647 = vadd.f32 0.0, %v646
        %v648 = vpop.f32.mrf.mxu0
        %649 = vmatprep.mubr.f32.mxu0 0.0
        %650 = vmatmul.mubr.f32.gmra.mxu0 %v473
        %v651 = vpop.f32.mrf.mxu0
        %v652 = vadd.f32 0.0, %v651
        %v653 = vpop.f32.mrf.mxu0
        %654 = vmatprep.mubr.f32.mxu0 0.0
        %655 = vmatmul.mubr.f32.gmra.mxu0 %v476
        %v656 = vpop.f32.mrf.mxu0
        %v657 = vadd.f32 0.0, %v656
        %v658 = vpop.f32.mrf.mxu0
        %659 = vmatprep.mubr.f32.mxu0 0.0
        %660 = vmatmul.mubr.f32.gmra.mxu0 %v479
        %v661 = vpop.f32.mrf.mxu0
        %v662 = vadd.f32 0.0, %v661
        %v663 = vpop.f32.mrf.mxu0
        %664 = vdwg.mxu0
        %v666 = vlaneseq
        %v667 = vshrl.u32 %v666, 7
        %v668 = vsub.s32 0, %v667
        %v669 = vrot.slane %v250, %v668
        %v670 = vlaneseq
        %v671 = vshrl.u32 %v670, 7
        %v672 = vsub.s32 1, %v671
        %v673 = vrot.slane %v250, %v672
        %v674 = vlaneseq
        %v675 = vshrl.u32 %v674, 7
        %v676 = vsub.s32 2, %v675
        %v677 = vrot.slane %v250, %v676
        %v681 = vmul.f32 %v558, %v669
        %v682 = vmul.f32 %v560, %v673
        %v683 = vmul.f32 %v647, %v677
        %v684 = vmul.f32 %v564, %v669
        %v685 = vmul.f32 %v566, %v673
        %v686 = vmul.f32 %v652, %v677
        %v687 = vmul.f32 %v570, %v669
        %v688 = vmul.f32 %v572, %v673
        %v689 = vmul.f32 %v657, %v677
        %v690 = vmul.f32 %v576, %v669
        %v691 = vmul.f32 %v578, %v673
        %v692 = vmul.f32 %v662, %v677
        %v693 = vadd.f32 %v681, %v684
        %v694 = vadd.f32 %v693, %v687
        %v695 = vadd.f32 %v694, %v690
        %v696 = vadd.f32 %v682, %v685
        %v697 = vadd.f32 %v696, %v688
        %v698 = vadd.f32 %v697, %v691
        %v699 = vadd.f32 %v683, %v686
        %v700 = vadd.f32 %v699, %v689
        %v701 = vadd.f32 %v700, %v692
        %v702 = vadd.f32 %v695, %v698
        %v703 = vadd.f32 %v702, %v701
        %704 = vadd.xlane.f32.xlu0 %v703
        %v705 = vpop.xlane.xlu0 %704
        %v706 = vmul.f32 %v681, %v681
        %v707 = vmul.f32 %v682, %v682
        %v708 = vmul.f32 %v683, %v683
        %v709 = vmul.f32 %v684, %v684
        %v710 = vmul.f32 %v685, %v685
        %v711 = vmul.f32 %v686, %v686
        %v712 = vmul.f32 %v687, %v687
        %v713 = vmul.f32 %v688, %v688
        %v714 = vmul.f32 %v689, %v689
        %v715 = vmul.f32 %v690, %v690
        %v716 = vmul.f32 %v691, %v691
        %v717 = vmul.f32 %v692, %v692
        %v718 = vadd.f32 %v706, %v709
        %v719 = vadd.f32 %v718, %v712
        %v720 = vadd.f32 %v719, %v715
        %v721 = vadd.f32 %v707, %v710
        %v722 = vadd.f32 %v721, %v713
        %v723 = vadd.f32 %v722, %v716
        %v724 = vadd.f32 %v708, %v711
        %v725 = vadd.f32 %v724, %v714
        %v726 = vadd.f32 %v725, %v717
        %v727 = vadd.f32 %v720, %v723
        %v728 = vadd.f32 %v727, %v726
        %729 = vadd.xlane.f32.xlu0 %v728
        %v730 = vpop.xlane.xlu0 %729
        %v731 = vmul.f32 %v705, 0.0009765625
        %v732 = vmul.f32 %v730, 0.0009765625
        %v733 = vmul.f32 %v731, %v731
        %v734 = vsub.f32 %v732, %v733
        %v735 = vadd.f32 %v734, 1e-05
        %v736 = vrsqrt.pop %v735
        %v737 = vmul.f32 %v251, %v736
        %v738 = vmul.f32 %v731, %v737
        %v739 = vsub.f32 %v252, %v738
        %741 = vset.pattern.permute.xlu0 0
        %742 = vperm.xlu0 %741, %v737
        %v743 = vpop.permute.xlu0 %742
        %v745 = vmul.f32 %v558, %v743
        %v746 = vmul.f32 %v560, %v743
        %v747 = vmul.f32 %v647, %v743
        %v748 = vmul.f32 %v564, %v743
        %v749 = vmul.f32 %v566, %v743
        %v750 = vmul.f32 %v652, %v743
        %v751 = vmul.f32 %v570, %v743
        %v752 = vmul.f32 %v572, %v743
        %v753 = vmul.f32 %v657, %v743
        %v754 = vmul.f32 %v576, %v743
        %v755 = vmul.f32 %v578, %v743
        %v756 = vmul.f32 %v662, %v743
        %758 = vset.pattern.permute.xlu0 0
        %759 = vperm.xlu0 %758, %v739
        %v760 = vpop.permute.xlu0 %759
        %v762 = vadd.f32 %v745, %v760
        %v763 = vadd.f32 %v746, %v760
        %v764 = vadd.f32 %v747, %v760
        %v765 = vadd.f32 %v748, %v760
        %v766 = vadd.f32 %v749, %v760
        %v767 = vadd.f32 %v750, %v760
        %v768 = vadd.f32 %v751, %v760
        %v769 = vadd.f32 %v752, %v760
        %v770 = vadd.f32 %v753, %v760
        %v771 = vadd.f32 %v754, %v760
        %v772 = vadd.f32 %v755, %v760
        %v773 = vadd.f32 %v756, %v760
        %v774 = vmax.f32 %v762, 0.0
        %v775 = vmax.f32 %v763, 0.0
        %v776 = vmax.f32 %v764, 0.0
        %v777 = vmax.f32 %v765, 0.0
        %v778 = vmax.f32 %v766, 0.0
        %v779 = vmax.f32 %v767, 0.0
        %v780 = vmax.f32 %v768, 0.0
        %v781 = vmax.f32 %v769, 0.0
        %v782 = vmax.f32 %v770, 0.0
        %v783 = vmax.f32 %v771, 0.0
        %v784 = vmax.f32 %v772, 0.0
        %v785 = vmax.f32 %v773, 0.0
        %786 = vst [vmem:[%s244] sm:$0xff] %v774
        %787 = vst [vmem:[%s244 + $0x8] sm:$0xff] %v775
        %788 = vst [vmem:[%s244 + $0x10] sm:$0xff] %v776
        %789 = vst [vmem:[%s244 + $0x18] sm:$0xff] %v777
        %790 = vst [vmem:[%s244 + $0x20] sm:$0xff] %v778
        %791 = vst [vmem:[%s244 + $0x28] sm:$0xff] %v779
        %792 = vst [vmem:[%s244 + $0x30] sm:$0xff] %v780
        %793 = vst [vmem:[%s244 + $0x38] sm:$0xff] %v781
        %794 = vst [vmem:[%s244 + $0x40] sm:$0xff] %v782
        %795 = vst [vmem:[%s244 + $0x48] sm:$0xff] %v783
        %796 = vst [vmem:[%s244 + $0x50] sm:$0xff] %v784
        %797 = vst [vmem:[%s244 + $0x58] sm:$0xff] %v785
        %s798 = scalar_lea.vmem %s237, 16
        %v799 = vld [vmem:[%s798] sm:$0xff]
        %v800 = vld [vmem:[%s798 + $0x8] sm:$0xf]
        %v802 = vcombine.high %v799, %v799
        %s804 = scalar_lea.vmem [#allocation2], 120
        %805 = vst [vmem:[%s804] sm:$0xf] %v799
        %806 = vst [vmem:[%s804 + $0x8] sm:$0xf] %v802
        %807 = vst [vmem:[%s804 + $0x10] sm:$0xf] %v800
        %v808 = vld [vmem:[%s798] sm:$0xff]
        %v809 = vld [vmem:[%s798 + $0x8] sm:$0xff]
        %v812 = vcombine.low %v808, %v808
        %v813 = vcombine.low %v809, %v809
        %814 = vrot.lane.b32.xlu0 %v812, 127
        %v815 = vpop.permute.xlu0 %814
        %816 = vrot.lane.b32.xlu0 %v808, 127
        %v817 = vpop.permute.xlu0 %816
        %818 = vrot.lane.b32.xlu0 %v813, 127
        %v819 = vpop.permute.xlu0 %818
        %820 = vrot.lane.b32.xlu0 %v809, 127
        %v821 = vpop.permute.xlu0 %820
        %v822 = vsel %vm275, %v815, %v817
        %v823 = vsel %vm275, %v817, %v819
        %v824 = vsel %vm275, %v819, %v821
        %828 = vst [vmem:[%s804] sm:$0xf0] %v822
        %829 = vst [vmem:[%s804 + $0x8] sm:$0xf0] %v823
        %830 = vst [vmem:[%s804 + $0x10] sm:$0xf0] %v824
        %v831 = vld [vmem:[%s798] sm:$0xff]
        %v832 = vld [vmem:[%s798 + $0x8] sm:$0xff]
        %v835 = vcombine.high %v831, %v831
        %v836 = vcombine.high %v832, %v832
        %837 = vrot.lane.b32.xlu0 %v831, 126
        %v838 = vpop.permute.xlu0 %837
        %839 = vrot.lane.b32.xlu0 %v835, 126
        %v840 = vpop.permute.xlu0 %839
        %841 = vrot.lane.b32.xlu0 %v832, 126
        %v842 = vpop.permute.xlu0 %841
        %843 = vrot.lane.b32.xlu0 %v836, 126
        %v844 = vpop.permute.xlu0 %843
        %v845 = vsel %vm299, %v838, %v840
        %v846 = vsel %vm299, %v840, %v842
        %v847 = vsel %vm299, %v842, %v844
        %851 = vst [vmem:[%s804 + $0x18] sm:$0xf] %v845
        %852 = vst [vmem:[%s804 + $0x20] sm:$0xf] %v846
        %853 = vst [vmem:[%s804 + $0x28] sm:$0xf] %v847
        %v854 = vld [vmem:[%s798] sm:$0xff]
        %v855 = vld [vmem:[%s798 + $0x8] sm:$0xff]
        %v858 = vcombine.low %v854, %v854
        %v859 = vcombine.low %v855, %v855
        %860 = vrot.lane.b32.xlu0 %v858, 110
        %v861 = vpop.permute.xlu0 %860
        %862 = vrot.lane.b32.xlu0 %v854, 110
        %v863 = vpop.permute.xlu0 %862
        %864 = vrot.lane.b32.xlu0 %v859, 110
        %v865 = vpop.permute.xlu0 %864
        %866 = vrot.lane.b32.xlu0 %v855, 110
        %v867 = vpop.permute.xlu0 %866
        %v868 = vsel %vm323, %v861, %v863
        %v869 = vsel %vm323, %v863, %v865
        %v870 = vsel %vm323, %v865, %v867
        %874 = vst [vmem:[%s804 + $0x18] sm:$0xf0] %v868
        %875 = vst [vmem:[%s804 + $0x20] sm:$0xf0] %v869
        %876 = vst [vmem:[%s804 + $0x28] sm:$0xf0] %v870
        %v877 = vld [vmem:[%s798] sm:$0xff]
        %v878 = vld [vmem:[%s798 + $0x8] sm:$0xff]
        %v881 = vcombine.high %v877, %v877
        %v882 = vcombine.high %v878, %v878
        %883 = vrot.lane.b32.xlu0 %v877, 109
        %v884 = vpop.permute.xlu0 %883
        %885 = vrot.lane.b32.xlu0 %v881, 109
        %v886 = vpop.permute.xlu0 %885
        %887 = vrot.lane.b32.xlu0 %v878, 109
        %v888 = vpop.permute.xlu0 %887
        %889 = vrot.lane.b32.xlu0 %v882, 109
        %v890 = vpop.permute.xlu0 %889
        %v891 = vsel %vm347, %v884, %v886
        %v892 = vsel %vm347, %v886, %v888
        %v893 = vsel %vm347, %v888, %v890
        %897 = vst [vmem:[%s804 + $0x30] sm:$0xf] %v891
        %898 = vst [vmem:[%s804 + $0x38] sm:$0xf] %v892
        %899 = vst [vmem:[%s804 + $0x40] sm:$0xf] %v893
        %v900 = vld [vmem:[%s798] sm:$0xff]
        %v901 = vld [vmem:[%s798 + $0x8] sm:$0xff]
        %v904 = vcombine.low %v900, %v900
        %v905 = vcombine.low %v901, %v901
        %906 = vrot.lane.b32.xlu0 %v904, 108
        %v907 = vpop.permute.xlu0 %906
        %908 = vrot.lane.b32.xlu0 %v900, 108
        %v909 = vpop.permute.xlu0 %908
        %910 = vrot.lane.b32.xlu0 %v905, 108
        %v911 = vpop.permute.xlu0 %910
        %912 = vrot.lane.b32.xlu0 %v901, 108
        %v913 = vpop.permute.xlu0 %912
        %v914 = vsel %vm371, %v907, %v909
        %v915 = vsel %vm371, %v909, %v911
        %v916 = vsel %vm371, %v911, %v913
        %920 = vst [vmem:[%s804 + $0x30] sm:$0xf0] %v914
        %921 = vst [vmem:[%s804 + $0x38] sm:$0xf0] %v915
        %922 = vst [vmem:[%s804 + $0x40] sm:$0xf0] %v916
        %v923 = vld [vmem:[%s798] sm:$0xff]
        %v924 = vld [vmem:[%s798 + $0x8] sm:$0xff]
        %v927 = vcombine.high %v923, %v923
        %v928 = vcombine.high %v924, %v924
        %929 = vrot.lane.b32.xlu0 %v923, 92
        %v930 = vpop.permute.xlu0 %929
        %931 = vrot.lane.b32.xlu0 %v927, 92
        %v932 = vpop.permute.xlu0 %931
        %933 = vrot.lane.b32.xlu0 %v924, 92
        %v934 = vpop.permute.xlu0 %933
        %935 = vrot.lane.b32.xlu0 %v928, 92
        %v936 = vpop.permute.xlu0 %935
        %v937 = vsel %vm395, %v930, %v932
        %v938 = vsel %vm395, %v932, %v934
        %v939 = vsel %vm395, %v934, %v936
        %943 = vst [vmem:[%s804 + $0x48] sm:$0xf] %v937
        %944 = vst [vmem:[%s804 + $0x50] sm:$0xf] %v938
        %945 = vst [vmem:[%s804 + $0x58] sm:$0xf] %v939
        %v946 = vld [vmem:[%s798] sm:$0xff]
        %v947 = vld [vmem:[%s798 + $0x8] sm:$0xff]
        %v950 = vcombine.low %v946, %v946
        %v951 = vcombine.low %v947, %v947
        %952 = vrot.lane.b32.xlu0 %v950, 91
        %v953 = vpop.permute.xlu0 %952
        %954 = vrot.lane.b32.xlu0 %v946, 91
        %v955 = vpop.permute.xlu0 %954
        %956 = vrot.lane.b32.xlu0 %v951, 91
        %v957 = vpop.permute.xlu0 %956
        %958 = vrot.lane.b32.xlu0 %v947, 91
        %v959 = vpop.permute.xlu0 %958
        %v960 = vsel %vm419, %v953, %v955
        %v961 = vsel %vm419, %v955, %v957
        %v962 = vsel %vm419, %v957, %v959
        %966 = vst [vmem:[%s804 + $0x48] sm:$0xf0] %v960
        %967 = vst [vmem:[%s804 + $0x50] sm:$0xf0] %v961
        %968 = vst [vmem:[%s804 + $0x58] sm:$0xf0] %v962
        %v969 = vld [vmem:[%s798] sm:$0xff]
        %v970 = vld [vmem:[%s798 + $0x8] sm:$0xff]
        %v973 = vcombine.high %v969, %v969
        %v974 = vcombine.high %v970, %v970
        %975 = vrot.lane.b32.xlu0 %v969, 90
        %v976 = vpop.permute.xlu0 %975
        %977 = vrot.lane.b32.xlu0 %v973, 90
        %v978 = vpop.permute.xlu0 %977
        %979 = vrot.lane.b32.xlu0 %v970, 90
        %v980 = vpop.permute.xlu0 %979
        %981 = vrot.lane.b32.xlu0 %v974, 90
        %v982 = vpop.permute.xlu0 %981
        %v983 = vsel %vm443, %v976, %v978
        %v984 = vsel %vm443, %v978, %v980
        %v985 = vsel %vm443, %v980, %v982
        %989 = vst [vmem:[%s804 + $0x60] sm:$0xf] %v983
        %990 = vst [vmem:[%s804 + $0x68] sm:$0xf] %v984
        %991 = vst [vmem:[%s804 + $0x70] sm:$0xf] %v985
        %v992 = vld [vmem:[%s804] sm:$0xff]
        %v993 = vld [vmem:[%s804 + $0x8] sm:$0xff]
        %v994 = vld [vmem:[%s804 + $0x10] sm:$0xff]
        %v995 = vld [vmem:[%s804 + $0x18] sm:$0xff]
        %v996 = vld [vmem:[%s804 + $0x20] sm:$0xff]
        %v997 = vld [vmem:[%s804 + $0x28] sm:$0xff]
        %v998 = vld [vmem:[%s804 + $0x30] sm:$0xff]
        %v999 = vld [vmem:[%s804 + $0x38] sm:$0xff]
        %v1000 = vld [vmem:[%s804 + $0x40] sm:$0xff]
        %v1001 = vld [vmem:[%s804 + $0x48] sm:$0xff]
        %v1002 = vld [vmem:[%s804 + $0x50] sm:$0xff]
        %v1003 = vld [vmem:[%s804 + $0x58] sm:$0xff]
        %v1004 = vld [vmem:[%s804 + $0x60] sm:$0xf]
        %v1005 = vld [vmem:[%s804 + $0x68] sm:$0xf]
        %v1006 = vld [vmem:[%s804 + $0x70] sm:$0xf]
        %v1008 = vsel %vm481, %v1004, 0
        %v1011 = vsel %vm481, %v1005, 0
        %v1014 = vsel %vm481, %v1006, 0
        %1016 = vmatprep.subr.mxu0 0.0
        %1017 = vmatpush1.msra.mxu0 0.0
        %1018 = vmatprep.subr.mxu0 0.0
        %1019 = vmatpush1.msra.mxu0 0.0
        %1020 = vmatprep.subr.mxu0 0.0
        %1021 = vmatpush1.msra.mxu0 0.0
        %1022 = vmatprep.subr.mxu0 0.0
        %1023 = vmatpush1.msra.mxu0 0.0
        %1024 = vmatprep.subr.mxu0 0.0
        %1025 = vmatpush1.msra.mxu0 0.0
        %1026 = vmatprep.subr.mxu0 0.0
        %1027 = vmatpush1.msra.mxu0 0.0
        %1028 = vmatprep.subr.mxu0 0.0
        %1029 = vmatpush1.msra.mxu0 0.0
        %1030 = vmatprep.subr.mxu0 0.0
        %1031 = vmatpush1.msra.mxu0 0.0
        %1032 = vmatprep.subr.mxu0 0.0
        %1033 = vmatpush1.msra.mxu0 0.0
        %1034 = vmatprep.subr.mxu0 0.0
        %1035 = vmatpush1.msra.mxu0 0.0
        %1036 = vmatprep.subr.mxu0 0.0
        %1037 = vmatpush1.msra.mxu0 0.0
        %1038 = vmatprep.subr.mxu0 %v1011
        %1039 = vmatpush1.msra.mxu0 %v1008
        %1040 = vmatprep.subr.mxu0 %v1002
        %1041 = vmatpush1.msra.mxu0 %v1001
        %1042 = vmatprep.subr.mxu0 %v999
        %1043 = vmatpush1.msra.mxu0 %v998
        %1044 = vmatprep.subr.mxu0 %v996
        %1045 = vmatpush1.msra.mxu0 %v995
        %1046 = vmatprep.subr.mxu0 %v993
        %1047 = vmatpush1.msra.mxu0 %v992
        %1048 = vmatprep.subr.mxu0 0.0
        %1049 = vmatpush2.msra.mxu0 0.0
        %1050 = vmatprep.subr.mxu0 0.0
        %1051 = vmatpush2.msra.mxu0 0.0
        %1052 = vmatprep.subr.mxu0 0.0
        %1053 = vmatpush2.msra.mxu0 0.0
        %1054 = vmatprep.subr.mxu0 0.0
        %1055 = vmatpush2.msra.mxu0 0.0
        %1056 = vmatprep.subr.mxu0 0.0
        %1057 = vmatpush2.msra.mxu0 0.0
        %1058 = vmatprep.subr.mxu0 0.0
        %1059 = vmatpush2.msra.mxu0 0.0
        %1060 = vmatprep.subr.mxu0 0.0
        %1061 = vmatpush2.msra.mxu0 0.0
        %1062 = vmatprep.subr.mxu0 0.0
        %1063 = vmatpush2.msra.mxu0 0.0
        %1064 = vmatprep.subr.mxu0 0.0
        %1065 = vmatpush2.msra.mxu0 0.0
        %1066 = vmatprep.subr.mxu0 0.0
        %1067 = vmatpush2.msra.mxu0 0.0
        %1068 = vmatprep.subr.mxu0 0.0
        %1069 = vmatpush2.msra.mxu0 0.0
        %1070 = vmatprep.subr.mxu0 0.0
        %1071 = vmatpush2.msra.mxu0 0.0
        %1072 = vmatprep.subr.mxu0 0.0
        %1073 = vmatpush2.msra.mxu0 0.0
        %1074 = vmatprep.subr.mxu0 0.0
        %1075 = vmatpush2.msra.mxu0 0.0
        %1076 = vmatprep.subr.mxu0 0.0
        %1077 = vmatpush2.msra.mxu0 0.0
        %1078 = vmatprep.subr.mxu0 0.0
        %1079 = vmatpush2.msra.mxu0 0.0
        %1080 = vmatprep.mubr.f32.mxu0 0.0
        %1081 = vmatmul.mubr.f32.gmra.mxu0 %v470
        %v1082 = vpop.f32.mrf.mxu0
        %v1083 = vadd.f32 0.0, %v1082
        %v1084 = vpop.f32.mrf.mxu0
        %v1085 = vadd.f32 0.0, %v1084
        %1086 = vmatprep.mubr.f32.mxu0 0.0
        %1087 = vmatmul.mubr.f32.gmra.mxu0 %v473
        %v1088 = vpop.f32.mrf.mxu0
        %v1089 = vadd.f32 0.0, %v1088
        %v1090 = vpop.f32.mrf.mxu0
        %v1091 = vadd.f32 0.0, %v1090
        %1092 = vmatprep.mubr.f32.mxu0 0.0
        %1093 = vmatmul.mubr.f32.gmra.mxu0 %v476
        %v1094 = vpop.f32.mrf.mxu0
        %v1095 = vadd.f32 0.0, %v1094
        %v1096 = vpop.f32.mrf.mxu0
        %v1097 = vadd.f32 0.0, %v1096
        %1098 = vmatprep.mubr.f32.mxu0 0.0
        %1099 = vmatmul.mubr.f32.gmra.mxu0 %v479
        %v1100 = vpop.f32.mrf.mxu0
        %v1101 = vadd.f32 0.0, %v1100
        %v1102 = vpop.f32.mrf.mxu0
        %v1103 = vadd.f32 0.0, %v1102
        %1104 = vdwg.mxu0
        %1105 = vmatprep.subr.mxu0 0.0
        %1106 = vmatpush1.msra.mxu0 0.0
        %1107 = vmatprep.subr.mxu0 0.0
        %1108 = vmatpush1.msra.mxu0 0.0
        %1109 = vmatprep.subr.mxu0 0.0
        %1110 = vmatpush1.msra.mxu0 0.0
        %1111 = vmatprep.subr.mxu0 0.0
        %1112 = vmatpush1.msra.mxu0 0.0
        %1113 = vmatprep.subr.mxu0 0.0
        %1114 = vmatpush1.msra.mxu0 0.0
        %1115 = vmatprep.subr.mxu0 0.0
        %1116 = vmatpush1.msra.mxu0 0.0
        %1117 = vmatprep.subr.mxu0 0.0
        %1118 = vmatpush1.msra.mxu0 0.0
        %1119 = vmatprep.subr.mxu0 0.0
        %1120 = vmatpush1.msra.mxu0 0.0
        %1121 = vmatprep.subr.mxu0 0.0
        %1122 = vmatpush1.msra.mxu0 0.0
        %1123 = vmatprep.subr.mxu0 0.0
        %1124 = vmatpush1.msra.mxu0 0.0
        %1125 = vmatprep.subr.mxu0 0.0
        %1126 = vmatpush1.msra.mxu0 0.0
        %1127 = vmatprep.subr.mxu0 0.0
        %1128 = vmatpush1.msra.mxu0 %v1014
        %1129 = vmatprep.subr.mxu0 0.0
        %1130 = vmatpush1.msra.mxu0 %v1003
        %1131 = vmatprep.subr.mxu0 0.0
        %1132 = vmatpush1.msra.mxu0 %v1000
        %1133 = vmatprep.subr.mxu0 0.0
        %1134 = vmatpush1.msra.mxu0 %v997
        %1135 = vmatprep.subr.mxu0 0.0
        %1136 = vmatpush1.msra.mxu0 %v994
        %1137 = vmatprep.subr.mxu0 0.0
        %1138 = vmatpush2.msra.mxu0 0.0
        %1139 = vmatprep.subr.mxu0 0.0
        %1140 = vmatpush2.msra.mxu0 0.0
        %1141 = vmatprep.subr.mxu0 0.0
        %1142 = vmatpush2.msra.mxu0 0.0
        %1143 = vmatprep.subr.mxu0 0.0
        %1144 = vmatpush2.msra.mxu0 0.0
        %1145 = vmatprep.subr.mxu0 0.0
        %1146 = vmatpush2.msra.mxu0 0.0
        %1147 = vmatprep.subr.mxu0 0.0
        %1148 = vmatpush2.msra.mxu0 0.0
        %1149 = vmatprep.subr.mxu0 0.0
        %1150 = vmatpush2.msra.mxu0 0.0
        %1151 = vmatprep.subr.mxu0 0.0
        %1152 = vmatpush2.msra.mxu0 0.0
        %1153 = vmatprep.subr.mxu0 0.0
        %1154 = vmatpush2.msra.mxu0 0.0
        %1155 = vmatprep.subr.mxu0 0.0
        %1156 = vmatpush2.msra.mxu0 0.0
        %1157 = vmatprep.subr.mxu0 0.0
        %1158 = vmatpush2.msra.mxu0 0.0
        %1159 = vmatprep.subr.mxu0 0.0
        %1160 = vmatpush2.msra.mxu0 0.0
        %1161 = vmatprep.subr.mxu0 0.0
        %1162 = vmatpush2.msra.mxu0 0.0
        %1163 = vmatprep.subr.mxu0 0.0
        %1164 = vmatpush2.msra.mxu0 0.0
        %1165 = vmatprep.subr.mxu0 0.0
        %1166 = vmatpush2.msra.mxu0 0.0
        %1167 = vmatprep.subr.mxu0 0.0
        %1168 = vmatpush2.msra.mxu0 0.0
        %1169 = vmatprep.mubr.f32.mxu0 0.0
        %1170 = vmatmul.mubr.f32.gmra.mxu0 %v470
        %v1171 = vpop.f32.mrf.mxu0
        %v1172 = vadd.f32 0.0, %v1171
        %v1173 = vpop.f32.mrf.mxu0
        %1174 = vmatprep.mubr.f32.mxu0 0.0
        %1175 = vmatmul.mubr.f32.gmra.mxu0 %v473
        %v1176 = vpop.f32.mrf.mxu0
        %v1177 = vadd.f32 0.0, %v1176
        %v1178 = vpop.f32.mrf.mxu0
        %1179 = vmatprep.mubr.f32.mxu0 0.0
        %1180 = vmatmul.mubr.f32.gmra.mxu0 %v476
        %v1181 = vpop.f32.mrf.mxu0
        %v1182 = vadd.f32 0.0, %v1181
        %v1183 = vpop.f32.mrf.mxu0
        %1184 = vmatprep.mubr.f32.mxu0 0.0
        %1185 = vmatmul.mubr.f32.gmra.mxu0 %v479
        %v1186 = vpop.f32.mrf.mxu0
        %v1187 = vadd.f32 0.0, %v1186
        %v1188 = vpop.f32.mrf.mxu0
        %1189 = vdwg.mxu0
        %v1190 = vmul.f32 %v1083, %v669
        %v1191 = vmul.f32 %v1085, %v673
        %v1192 = vmul.f32 %v1172, %v677
        %v1193 = vmul.f32 %v1089, %v669
        %v1194 = vmul.f32 %v1091, %v673
        %v1195 = vmul.f32 %v1177, %v677
        %v1196 = vmul.f32 %v1095, %v669
        %v1197 = vmul.f32 %v1097, %v673
        %v1198 = vmul.f32 %v1182, %v677
        %v1199 = vmul.f32 %v1101, %v669
        %v1200 = vmul.f32 %v1103, %v673
        %v1201 = vmul.f32 %v1187, %v677
        %v1202 = vadd.f32 %v1190, %v1193
        %v1203 = vadd.f32 %v1202, %v1196
        %v1204 = vadd.f32 %v1203, %v1199
        %v1205 = vadd.f32 %v1191, %v1194
        %v1206 = vadd.f32 %v1205, %v1197
        %v1207 = vadd.f32 %v1206, %v1200
        %v1208 = vadd.f32 %v1192, %v1195
        %v1209 = vadd.f32 %v1208, %v1198
        %v1210 = vadd.f32 %v1209, %v1201
        %v1211 = vadd.f32 %v1204, %v1207
        %v1212 = vadd.f32 %v1211, %v1210
        %1213 = vadd.xlane.f32.xlu0 %v1212
        %v1214 = vpop.xlane.xlu0 %1213
        %v1215 = vmul.f32 %v1190, %v1190
        %v1216 = vmul.f32 %v1191, %v1191
        %v1217 = vmul.f32 %v1192, %v1192
        %v1218 = vmul.f32 %v1193, %v1193
        %v1219 = vmul.f32 %v1194, %v1194
        %v1220 = vmul.f32 %v1195, %v1195
        %v1221 = vmul.f32 %v1196, %v1196
        %v1222 = vmul.f32 %v1197, %v1197
        %v1223 = vmul.f32 %v1198, %v1198
        %v1224 = vmul.f32 %v1199, %v1199
        %v1225 = vmul.f32 %v1200, %v1200
        %v1226 = vmul.f32 %v1201, %v1201
        %v1227 = vadd.f32 %v1215, %v1218
        %v1228 = vadd.f32 %v1227, %v1221
        %v1229 = vadd.f32 %v1228, %v1224
        %v1230 = vadd.f32 %v1216, %v1219
        %v1231 = vadd.f32 %v1230, %v1222
        %v1232 = vadd.f32 %v1231, %v1225
        %v1233 = vadd.f32 %v1217, %v1220
        %v1234 = vadd.f32 %v1233, %v1223
        %v1235 = vadd.f32 %v1234, %v1226
        %v1236 = vadd.f32 %v1229, %v1232
        %v1237 = vadd.f32 %v1236, %v1235
        %1238 = vadd.xlane.f32.xlu0 %v1237
        %v1239 = vpop.xlane.xlu0 %1238
        %v1240 = vmul.f32 %v1214, 0.0009765625
        %v1241 = vmul.f32 %v1239, 0.0009765625
        %v1242 = vmul.f32 %v1240, %v1240
        %v1243 = vsub.f32 %v1241, %v1242
        %v1244 = vadd.f32 %v1243, 1e-05
        %v1245 = vrsqrt.pop %v1244
        %v1246 = vmul.f32 %v251, %v1245
        %v1247 = vmul.f32 %v1240, %v1246
        %v1248 = vsub.f32 %v252, %v1247
        %1250 = vset.pattern.permute.xlu0 0
        %1251 = vperm.xlu0 %1250, %v1246
        %v1252 = vpop.permute.xlu0 %1251
        %v1254 = vmul.f32 %v1083, %v1252
        %v1255 = vmul.f32 %v1085, %v1252
        %v1256 = vmul.f32 %v1172, %v1252
        %v1257 = vmul.f32 %v1089, %v1252
        %v1258 = vmul.f32 %v1091, %v1252
        %v1259 = vmul.f32 %v1177, %v1252
        %v1260 = vmul.f32 %v1095, %v1252
        %v1261 = vmul.f32 %v1097, %v1252
        %v1262 = vmul.f32 %v1182, %v1252
        %v1263 = vmul.f32 %v1101, %v1252
        %v1264 = vmul.f32 %v1103, %v1252
        %v1265 = vmul.f32 %v1187, %v1252
        %1267 = vset.pattern.permute.xlu0 0
        %1268 = vperm.xlu0 %1267, %v1248
        %v1269 = vpop.permute.xlu0 %1268
        %v1271 = vadd.f32 %v1254, %v1269
        %v1272 = vadd.f32 %v1255, %v1269
        %v1273 = vadd.f32 %v1256, %v1269
        %v1274 = vadd.f32 %v1257, %v1269
        %v1275 = vadd.f32 %v1258, %v1269
        %v1276 = vadd.f32 %v1259, %v1269
        %v1277 = vadd.f32 %v1260, %v1269
        %v1278 = vadd.f32 %v1261, %v1269
        %v1279 = vadd.f32 %v1262, %v1269
        %v1280 = vadd.f32 %v1263, %v1269
        %v1281 = vadd.f32 %v1264, %v1269
        %v1282 = vadd.f32 %v1265, %v1269
        %v1283 = vmax.f32 %v1271, 0.0
        %v1284 = vmax.f32 %v1272, 0.0
        %v1285 = vmax.f32 %v1273, 0.0
        %v1286 = vmax.f32 %v1274, 0.0
        %v1287 = vmax.f32 %v1275, 0.0
        %v1288 = vmax.f32 %v1276, 0.0
        %v1289 = vmax.f32 %v1277, 0.0
        %v1290 = vmax.f32 %v1278, 0.0
        %v1291 = vmax.f32 %v1279, 0.0
        %v1292 = vmax.f32 %v1280, 0.0
        %v1293 = vmax.f32 %v1281, 0.0
        %v1294 = vmax.f32 %v1282, 0.0
        %s1295 = scalar_lea.vmem %s244, 96
        %1296 = vst [vmem:[%s1295] sm:$0xff] %v1283
        %1297 = vst [vmem:[%s1295 + $0x8] sm:$0xff] %v1284
        %1298 = vst [vmem:[%s1295 + $0x10] sm:$0xff] %v1285
        %1299 = vst [vmem:[%s1295 + $0x18] sm:$0xff] %v1286
        %1300 = vst [vmem:[%s1295 + $0x20] sm:$0xff] %v1287
        %1301 = vst [vmem:[%s1295 + $0x28] sm:$0xff] %v1288
        %1302 = vst [vmem:[%s1295 + $0x30] sm:$0xff] %v1289
        %1303 = vst [vmem:[%s1295 + $0x38] sm:$0xff] %v1290
        %1304 = vst [vmem:[%s1295 + $0x40] sm:$0xff] %v1291
        %1305 = vst [vmem:[%s1295 + $0x48] sm:$0xff] %v1292
        %1306 = vst [vmem:[%s1295 + $0x50] sm:$0xff] %v1293
        %1307 = vst [vmem:[%s1295 + $0x58] sm:$0xff] %v1294
        %s1308 = scalar_lea.vmem %s237, 32
        %v1309 = vld [vmem:[%s1308] sm:$0xff]
        %v1310 = vld [vmem:[%s1308 + $0x8] sm:$0xf]
        %v1312 = vcombine.high %v1309, %v1309
        %1314 = vst [vmem:[#allocation2] sm:$0xf] %v1309
        %1315 = vst [vmem:[#allocation2 + $0x8] sm:$0xf] %v1312
        %1316 = vst [vmem:[#allocation2 + $0x10] sm:$0xf] %v1310
        %v1317 = vld [vmem:[%s1308] sm:$0xff]
        %v1318 = vld [vmem:[%s1308 + $0x8] sm:$0xff]
        %v1321 = vcombine.low %v1317, %v1317
        %v1322 = vcombine.low %v1318, %v1318
        %1323 = vrot.lane.b32.xlu0 %v1321, 127
        %v1324 = vpop.permute.xlu0 %1323
        %1325 = vrot.lane.b32.xlu0 %v1317, 127
        %v1326 = vpop.permute.xlu0 %1325
        %1327 = vrot.lane.b32.xlu0 %v1322, 127
        %v1328 = vpop.permute.xlu0 %1327
        %1329 = vrot.lane.b32.xlu0 %v1318, 127
        %v1330 = vpop.permute.xlu0 %1329
        %v1331 = vsel %vm275, %v1324, %v1326
        %v1332 = vsel %vm275, %v1326, %v1328
        %v1333 = vsel %vm275, %v1328, %v1330
        %1337 = vst [vmem:[#allocation2] sm:$0xf0] %v1331
        %1338 = vst [vmem:[#allocation2 + $0x8] sm:$0xf0] %v1332
        %1339 = vst [vmem:[#allocation2 + $0x10] sm:$0xf0] %v1333
        %v1340 = vld [vmem:[%s1308] sm:$0xff]
        %v1341 = vld [vmem:[%s1308 + $0x8] sm:$0xff]
        %v1344 = vcombine.high %v1340, %v1340
        %v1345 = vcombine.high %v1341, %v1341
        %1346 = vrot.lane.b32.xlu0 %v1340, 126
        %v1347 = vpop.permute.xlu0 %1346
        %1348 = vrot.lane.b32.xlu0 %v1344, 126
        %v1349 = vpop.permute.xlu0 %1348
        %1350 = vrot.lane.b32.xlu0 %v1341, 126
        %v1351 = vpop.permute.xlu0 %1350
        %1352 = vrot.lane.b32.xlu0 %v1345, 126
        %v1353 = vpop.permute.xlu0 %1352
        %v1354 = vsel %vm299, %v1347, %v1349
        %v1355 = vsel %vm299, %v1349, %v1351
        %v1356 = vsel %vm299, %v1351, %v1353
        %1360 = vst [vmem:[#allocation2 + $0x18] sm:$0xf] %v1354
        %1361 = vst [vmem:[#allocation2 + $0x20] sm:$0xf] %v1355
        %1362 = vst [vmem:[#allocation2 + $0x28] sm:$0xf] %v1356
        %v1363 = vld [vmem:[%s1308] sm:$0xff]
        %v1364 = vld [vmem:[%s1308 + $0x8] sm:$0xff]
        %v1367 = vcombine.low %v1363, %v1363
        %v1368 = vcombine.low %v1364, %v1364
        %1369 = vrot.lane.b32.xlu0 %v1367, 110
        %v1370 = vpop.permute.xlu0 %1369
        %1371 = vrot.lane.b32.xlu0 %v1363, 110
        %v1372 = vpop.permute.xlu0 %1371
        %1373 = vrot.lane.b32.xlu0 %v1368, 110
        %v1374 = vpop.permute.xlu0 %1373
        %1375 = vrot.lane.b32.xlu0 %v1364, 110
        %v1376 = vpop.permute.xlu0 %1375
        %v1377 = vsel %vm323, %v1370, %v1372
        %v1378 = vsel %vm323, %v1372, %v1374
        %v1379 = vsel %vm323, %v1374, %v1376
        %1383 = vst [vmem:[#allocation2 + $0x18] sm:$0xf0] %v1377
        %1384 = vst [vmem:[#allocation2 + $0x20] sm:$0xf0] %v1378
        %1385 = vst [vmem:[#allocation2 + $0x28] sm:$0xf0] %v1379
        %v1386 = vld [vmem:[%s1308] sm:$0xff]
        %v1387 = vld [vmem:[%s1308 + $0x8] sm:$0xff]
        %v1390 = vcombine.high %v1386, %v1386
        %v1391 = vcombine.high %v1387, %v1387
        %1392 = vrot.lane.b32.xlu0 %v1386, 109
        %v1393 = vpop.permute.xlu0 %1392
        %1394 = vrot.lane.b32.xlu0 %v1390, 109
        %v1395 = vpop.permute.xlu0 %1394
        %1396 = vrot.lane.b32.xlu0 %v1387, 109
        %v1397 = vpop.permute.xlu0 %1396
        %1398 = vrot.lane.b32.xlu0 %v1391, 109
        %v1399 = vpop.permute.xlu0 %1398
        %v1400 = vsel %vm347, %v1393, %v1395
        %v1401 = vsel %vm347, %v1395, %v1397
        %v1402 = vsel %vm347, %v1397, %v1399
        %1406 = vst [vmem:[#allocation2 + $0x30] sm:$0xf] %v1400
        %1407 = vst [vmem:[#allocation2 + $0x38] sm:$0xf] %v1401
        %1408 = vst [vmem:[#allocation2 + $0x40] sm:$0xf] %v1402
        %v1409 = vld [vmem:[%s1308] sm:$0xff]
        %v1410 = vld [vmem:[%s1308 + $0x8] sm:$0xff]
        %v1413 = vcombine.low %v1409, %v1409
        %v1414 = vcombine.low %v1410, %v1410
        %1415 = vrot.lane.b32.xlu0 %v1413, 108
        %v1416 = vpop.permute.xlu0 %1415
        %1417 = vrot.lane.b32.xlu0 %v1409, 108
        %v1418 = vpop.permute.xlu0 %1417
        %1419 = vrot.lane.b32.xlu0 %v1414, 108
        %v1420 = vpop.permute.xlu0 %1419
        %1421 = vrot.lane.b32.xlu0 %v1410, 108
        %v1422 = vpop.permute.xlu0 %1421
        %v1423 = vsel %vm371, %v1416, %v1418
        %v1424 = vsel %vm371, %v1418, %v1420
        %v1425 = vsel %vm371, %v1420, %v1422
        %1429 = vst [vmem:[#allocation2 + $0x30] sm:$0xf0] %v1423
        %1430 = vst [vmem:[#allocation2 + $0x38] sm:$0xf0] %v1424
        %1431 = vst [vmem:[#allocation2 + $0x40] sm:$0xf0] %v1425
        %v1432 = vld [vmem:[%s1308] sm:$0xff]
        %v1433 = vld [vmem:[%s1308 + $0x8] sm:$0xff]
        %v1436 = vcombine.high %v1432, %v1432
        %v1437 = vcombine.high %v1433, %v1433
        %1438 = vrot.lane.b32.xlu0 %v1432, 92
        %v1439 = vpop.permute.xlu0 %1438
        %1440 = vrot.lane.b32.xlu0 %v1436, 92
        %v1441 = vpop.permute.xlu0 %1440
        %1442 = vrot.lane.b32.xlu0 %v1433, 92
        %v1443 = vpop.permute.xlu0 %1442
        %1444 = vrot.lane.b32.xlu0 %v1437, 92
        %v1445 = vpop.permute.xlu0 %1444
        %v1446 = vsel %vm395, %v1439, %v1441
        %v1447 = vsel %vm395, %v1441, %v1443
        %v1448 = vsel %vm395, %v1443, %v1445
        %1452 = vst [vmem:[#allocation2 + $0x48] sm:$0xf] %v1446
        %1453 = vst [vmem:[#allocation2 + $0x50] sm:$0xf] %v1447
        %1454 = vst [vmem:[#allocation2 + $0x58] sm:$0xf] %v1448
        %v1455 = vld [vmem:[%s1308] sm:$0xff]
        %v1456 = vld [vmem:[%s1308 + $0x8] sm:$0xff]
        %v1459 = vcombine.low %v1455, %v1455
        %v1460 = vcombine.low %v1456, %v1456
        %1461 = vrot.lane.b32.xlu0 %v1459, 91
        %v1462 = vpop.permute.xlu0 %1461
        %1463 = vrot.lane.b32.xlu0 %v1455, 91
        %v1464 = vpop.permute.xlu0 %1463
        %1465 = vrot.lane.b32.xlu0 %v1460, 91
        %v1466 = vpop.permute.xlu0 %1465
        %1467 = vrot.lane.b32.xlu0 %v1456, 91
        %v1468 = vpop.permute.xlu0 %1467
        %v1469 = vsel %vm419, %v1462, %v1464
        %v1470 = vsel %vm419, %v1464, %v1466
        %v1471 = vsel %vm419, %v1466, %v1468
        %1475 = vst [vmem:[#allocation2 + $0x48] sm:$0xf0] %v1469
        %1476 = vst [vmem:[#allocation2 + $0x50] sm:$0xf0] %v1470
        %1477 = vst [vmem:[#allocation2 + $0x58] sm:$0xf0] %v1471
        %v1478 = vld [vmem:[%s1308] sm:$0xff]
        %v1479 = vld [vmem:[%s1308 + $0x8] sm:$0xff]
        %v1482 = vcombine.high %v1478, %v1478
        %v1483 = vcombine.high %v1479, %v1479
        %1484 = vrot.lane.b32.xlu0 %v1478, 90
        %v1485 = vpop.permute.xlu0 %1484
        %1486 = vrot.lane.b32.xlu0 %v1482, 90
        %v1487 = vpop.permute.xlu0 %1486
        %1488 = vrot.lane.b32.xlu0 %v1479, 90
        %v1489 = vpop.permute.xlu0 %1488
        %1490 = vrot.lane.b32.xlu0 %v1483, 90
        %v1491 = vpop.permute.xlu0 %1490
        %v1492 = vsel %vm443, %v1485, %v1487
        %v1493 = vsel %vm443, %v1487, %v1489
        %v1494 = vsel %vm443, %v1489, %v1491
        %1498 = vst [vmem:[#allocation2 + $0x60] sm:$0xf] %v1492
        %1499 = vst [vmem:[#allocation2 + $0x68] sm:$0xf] %v1493
        %1500 = vst [vmem:[#allocation2 + $0x70] sm:$0xf] %v1494
        %v1501 = vld [vmem:[#allocation2] sm:$0xff]
        %v1502 = vld [vmem:[#allocation2 + $0x8] sm:$0xff]
        %v1503 = vld [vmem:[#allocation2 + $0x10] sm:$0xff]
        %v1504 = vld [vmem:[#allocation2 + $0x18] sm:$0xff]
        %v1505 = vld [vmem:[#allocation2 + $0x20] sm:$0xff]
        %v1506 = vld [vmem:[#allocation2 + $0x28] sm:$0xff]
        %v1507 = vld [vmem:[#allocation2 + $0x30] sm:$0xff]
        %v1508 = vld [vmem:[#allocation2 + $0x38] sm:$0xff]
        %v1509 = vld [vmem:[#allocation2 + $0x40] sm:$0xff]
        %v1510 = vld [vmem:[#allocation2 + $0x48] sm:$0xff]
        %v1511 = vld [vmem:[#allocation2 + $0x50] sm:$0xff]
        %v1512 = vld [vmem:[#allocation2 + $0x58] sm:$0xff]
        %v1513 = vld [vmem:[#allocation2 + $0x60] sm:$0xf]
        %v1514 = vld [vmem:[#allocation2 + $0x68] sm:$0xf]
        %v1515 = vld [vmem:[#allocation2 + $0x70] sm:$0xf]
        %v1517 = vsel %vm481, %v1513, 0
        %v1520 = vsel %vm481, %v1514, 0
        %v1523 = vsel %vm481, %v1515, 0
        %1525 = vmatprep.subr.mxu0 0.0
        %1526 = vmatpush1.msra.mxu0 0.0
        %1527 = vmatprep.subr.mxu0 0.0
        %1528 = vmatpush1.msra.mxu0 0.0
        %1529 = vmatprep.subr.mxu0 0.0
        %1530 = vmatpush1.msra.mxu0 0.0
        %1531 = vmatprep.subr.mxu0 0.0
        %1532 = vmatpush1.msra.mxu0 0.0
        %1533 = vmatprep.subr.mxu0 0.0
        %1534 = vmatpush1.msra.mxu0 0.0
        %1535 = vmatprep.subr.mxu0 0.0
        %1536 = vmatpush1.msra.mxu0 0.0
        %1537 = vmatprep.subr.mxu0 0.0
        %1538 = vmatpush1.msra.mxu0 0.0
        %1539 = vmatprep.subr.mxu0 0.0
        %1540 = vmatpush1.msra.mxu0 0.0
        %1541 = vmatprep.subr.mxu0 0.0
        %1542 = vmatpush1.msra.mxu0 0.0
        %1543 = vmatprep.subr.mxu0 0.0
        %1544 = vmatpush1.msra.mxu0 0.0
        %1545 = vmatprep.subr.mxu0 0.0
        %1546 = vmatpush1.msra.mxu0 0.0
        %1547 = vmatprep.subr.mxu0 %v1520
        %1548 = vmatpush1.msra.mxu0 %v1517
        %1549 = vmatprep.subr.mxu0 %v1511
        %1550 = vmatpush1.msra.mxu0 %v1510
        %1551 = vmatprep.subr.mxu0 %v1508
        %1552 = vmatpush1.msra.mxu0 %v1507
        %1553 = vmatprep.subr.mxu0 %v1505
        %1554 = vmatpush1.msra.mxu0 %v1504
        %1555 = vmatprep.subr.mxu0 %v1502
        %1556 = vmatpush1.msra.mxu0 %v1501
        %1557 = vmatprep.subr.mxu0 0.0
        %1558 = vmatpush2.msra.mxu0 0.0
        %1559 = vmatprep.subr.mxu0 0.0
        %1560 = vmatpush2.msra.mxu0 0.0
        %1561 = vmatprep.subr.mxu0 0.0
        %1562 = vmatpush2.msra.mxu0 0.0
        %1563 = vmatprep.subr.mxu0 0.0
        %1564 = vmatpush2.msra.mxu0 0.0
        %1565 = vmatprep.subr.mxu0 0.0
        %1566 = vmatpush2.msra.mxu0 0.0
        %1567 = vmatprep.subr.mxu0 0.0
        %1568 = vmatpush2.msra.mxu0 0.0
        %1569 = vmatprep.subr.mxu0 0.0
        %1570 = vmatpush2.msra.mxu0 0.0
        %1571 = vmatprep.subr.mxu0 0.0
        %1572 = vmatpush2.msra.mxu0 0.0
        %1573 = vmatprep.subr.mxu0 0.0
        %1574 = vmatpush2.msra.mxu0 0.0
        %1575 = vmatprep.subr.mxu0 0.0
        %1576 = vmatpush2.msra.mxu0 0.0
        %1577 = vmatprep.subr.mxu0 0.0
        %1578 = vmatpush2.msra.mxu0 0.0
        %1579 = vmatprep.subr.mxu0 0.0
        %1580 = vmatpush2.msra.mxu0 0.0
        %1581 = vmatprep.subr.mxu0 0.0
        %1582 = vmatpush2.msra.mxu0 0.0
        %1583 = vmatprep.subr.mxu0 0.0
        %1584 = vmatpush2.msra.mxu0 0.0
        %1585 = vmatprep.subr.mxu0 0.0
        %1586 = vmatpush2.msra.mxu0 0.0
        %1587 = vmatprep.subr.mxu0 0.0
        %1588 = vmatpush2.msra.mxu0 0.0
        %1589 = vmatprep.mubr.f32.mxu0 0.0
        %1590 = vmatmul.mubr.f32.gmra.mxu0 %v470
        %v1591 = vpop.f32.mrf.mxu0
        %v1592 = vadd.f32 0.0, %v1591
        %v1593 = vpop.f32.mrf.mxu0
        %v1594 = vadd.f32 0.0, %v1593
        %1595 = vmatprep.mubr.f32.mxu0 0.0
        %1596 = vmatmul.mubr.f32.gmra.mxu0 %v473
        %v1597 = vpop.f32.mrf.mxu0
        %v1598 = vadd.f32 0.0, %v1597
        %v1599 = vpop.f32.mrf.mxu0
        %v1600 = vadd.f32 0.0, %v1599
        %1601 = vmatprep.mubr.f32.mxu0 0.0
        %1602 = vmatmul.mubr.f32.gmra.mxu0 %v476
        %v1603 = vpop.f32.mrf.mxu0
        %v1604 = vadd.f32 0.0, %v1603
        %v1605 = vpop.f32.mrf.mxu0
        %v1606 = vadd.f32 0.0, %v1605
        %1607 = vmatprep.mubr.f32.mxu0 0.0
        %1608 = vmatmul.mubr.f32.gmra.mxu0 %v479
        %v1609 = vpop.f32.mrf.mxu0
        %v1610 = vadd.f32 0.0, %v1609
        %v1611 = vpop.f32.mrf.mxu0
        %v1612 = vadd.f32 0.0, %v1611
        %1613 = vdwg.mxu0
        %1614 = vmatprep.subr.mxu0 0.0
        %1615 = vmatpush1.msra.mxu0 0.0
        %1616 = vmatprep.subr.mxu0 0.0
        %1617 = vmatpush1.msra.mxu0 0.0
        %1618 = vmatprep.subr.mxu0 0.0
        %1619 = vmatpush1.msra.mxu0 0.0
        %1620 = vmatprep.subr.mxu0 0.0
        %1621 = vmatpush1.msra.mxu0 0.0
        %1622 = vmatprep.subr.mxu0 0.0
        %1623 = vmatpush1.msra.mxu0 0.0
        %1624 = vmatprep.subr.mxu0 0.0
        %1625 = vmatpush1.msra.mxu0 0.0
        %1626 = vmatprep.subr.mxu0 0.0
        %1627 = vmatpush1.msra.mxu0 0.0
        %1628 = vmatprep.subr.mxu0 0.0
        %1629 = vmatpush1.msra.mxu0 0.0
        %1630 = vmatprep.subr.mxu0 0.0
        %1631 = vmatpush1.msra.mxu0 0.0
        %1632 = vmatprep.subr.mxu0 0.0
        %1633 = vmatpush1.msra.mxu0 0.0
        %1634 = vmatprep.subr.mxu0 0.0
        %1635 = vmatpush1.msra.mxu0 0.0
        %1636 = vmatprep.subr.mxu0 0.0
        %1637 = vmatpush1.msra.mxu0 %v1523
        %1638 = vmatprep.subr.mxu0 0.0
        %1639 = vmatpush1.msra.mxu0 %v1512
        %1640 = vmatprep.subr.mxu0 0.0
        %1641 = vmatpush1.msra.mxu0 %v1509
        %1642 = vmatprep.subr.mxu0 0.0
        %1643 = vmatpush1.msra.mxu0 %v1506
        %1644 = vmatprep.subr.mxu0 0.0
        %1645 = vmatpush1.msra.mxu0 %v1503
        %1646 = vmatprep.subr.mxu0 0.0
        %1647 = vmatpush2.msra.mxu0 0.0
        %1648 = vmatprep.subr.mxu0 0.0
        %1649 = vmatpush2.msra.mxu0 0.0
        %1650 = vmatprep.subr.mxu0 0.0
        %1651 = vmatpush2.msra.mxu0 0.0
        %1652 = vmatprep.subr.mxu0 0.0
        %1653 = vmatpush2.msra.mxu0 0.0
        %1654 = vmatprep.subr.mxu0 0.0
        %1655 = vmatpush2.msra.mxu0 0.0
        %1656 = vmatprep.subr.mxu0 0.0
        %1657 = vmatpush2.msra.mxu0 0.0
        %1658 = vmatprep.subr.mxu0 0.0
        %1659 = vmatpush2.msra.mxu0 0.0
        %1660 = vmatprep.subr.mxu0 0.0
        %1661 = vmatpush2.msra.mxu0 0.0
        %1662 = vmatprep.subr.mxu0 0.0
        %1663 = vmatpush2.msra.mxu0 0.0
        %1664 = vmatprep.subr.mxu0 0.0
        %1665 = vmatpush2.msra.mxu0 0.0
        %1666 = vmatprep.subr.mxu0 0.0
        %1667 = vmatpush2.msra.mxu0 0.0
        %1668 = vmatprep.subr.mxu0 0.0
        %1669 = vmatpush2.msra.mxu0 0.0
        %1670 = vmatprep.subr.mxu0 0.0
        %1671 = vmatpush2.msra.mxu0 0.0
        %1672 = vmatprep.subr.mxu0 0.0
        %1673 = vmatpush2.msra.mxu0 0.0
        %1674 = vmatprep.subr.mxu0 0.0
        %1675 = vmatpush2.msra.mxu0 0.0
        %1676 = vmatprep.subr.mxu0 0.0
        %1677 = vmatpush2.msra.mxu0 0.0
        %1678 = vmatprep.mubr.f32.mxu0 0.0
        %1679 = vmatmul.mubr.f32.gmra.mxu0 %v470
        %v1680 = vpop.f32.mrf.mxu0
        %v1681 = vadd.f32 0.0, %v1680
        %v1682 = vpop.f32.mrf.mxu0
        %1683 = vmatprep.mubr.f32.mxu0 0.0
        %1684 = vmatmul.mubr.f32.gmra.mxu0 %v473
        %v1685 = vpop.f32.mrf.mxu0
        %v1686 = vadd.f32 0.0, %v1685
        %v1687 = vpop.f32.mrf.mxu0
        %1688 = vmatprep.mubr.f32.mxu0 0.0
        %1689 = vmatmul.mubr.f32.gmra.mxu0 %v476
        %v1690 = vpop.f32.mrf.mxu0
        %v1691 = vadd.f32 0.0, %v1690
        %v1692 = vpop.f32.mrf.mxu0
        %1693 = vmatprep.mubr.f32.mxu0 0.0
        %1694 = vmatmul.mubr.f32.gmra.mxu0 %v479
        %v1695 = vpop.f32.mrf.mxu0
        %v1696 = vadd.f32 0.0, %v1695
        %v1697 = vpop.f32.mrf.mxu0
        %1698 = vdwg.mxu0
        %v1699 = vmul.f32 %v1592, %v669
        %v1700 = vmul.f32 %v1594, %v673
        %v1701 = vmul.f32 %v1681, %v677
        %v1702 = vmul.f32 %v1598, %v669
        %v1703 = vmul.f32 %v1600, %v673
        %v1704 = vmul.f32 %v1686, %v677
        %v1705 = vmul.f32 %v1604, %v669
        %v1706 = vmul.f32 %v1606, %v673
        %v1707 = vmul.f32 %v1691, %v677
        %v1708 = vmul.f32 %v1610, %v669
        %v1709 = vmul.f32 %v1612, %v673
        %v1710 = vmul.f32 %v1696, %v677
        %v1711 = vadd.f32 %v1699, %v1702
        %v1712 = vadd.f32 %v1711, %v1705
        %v1713 = vadd.f32 %v1712, %v1708
        %v1714 = vadd.f32 %v1700, %v1703
        %v1715 = vadd.f32 %v1714, %v1706
        %v1716 = vadd.f32 %v1715, %v1709
        %v1717 = vadd.f32 %v1701, %v1704
        %v1718 = vadd.f32 %v1717, %v1707
        %v1719 = vadd.f32 %v1718, %v1710
        %v1720 = vadd.f32 %v1713, %v1716
        %v1721 = vadd.f32 %v1720, %v1719
        %1722 = vadd.xlane.f32.xlu0 %v1721
        %v1723 = vpop.xlane.xlu0 %1722
        %v1724 = vmul.f32 %v1699, %v1699
        %v1725 = vmul.f32 %v1700, %v1700
        %v1726 = vmul.f32 %v1701, %v1701
        %v1727 = vmul.f32 %v1702, %v1702
        %v1728 = vmul.f32 %v1703, %v1703
        %v1729 = vmul.f32 %v1704, %v1704
        %v1730 = vmul.f32 %v1705, %v1705
        %v1731 = vmul.f32 %v1706, %v1706
        %v1732 = vmul.f32 %v1707, %v1707
        %v1733 = vmul.f32 %v1708, %v1708
        %v1734 = vmul.f32 %v1709, %v1709
        %v1735 = vmul.f32 %v1710, %v1710
        %v1736 = vadd.f32 %v1724, %v1727
        %v1737 = vadd.f32 %v1736, %v1730
        %v1738 = vadd.f32 %v1737, %v1733
        %v1739 = vadd.f32 %v1725, %v1728
        %v1740 = vadd.f32 %v1739, %v1731
        %v1741 = vadd.f32 %v1740, %v1734
        %v1742 = vadd.f32 %v1726, %v1729
        %v1743 = vadd.f32 %v1742, %v1732
        %v1744 = vadd.f32 %v1743, %v1735
        %v1745 = vadd.f32 %v1738, %v1741
        %v1746 = vadd.f32 %v1745, %v1744
        %1747 = vadd.xlane.f32.xlu0 %v1746
        %v1748 = vpop.xlane.xlu0 %1747
        %v1749 = vmul.f32 %v1723, 0.0009765625
        %v1750 = vmul.f32 %v1748, 0.0009765625
        %v1751 = vmul.f32 %v1749, %v1749
        %v1752 = vsub.f32 %v1750, %v1751
        %v1753 = vadd.f32 %v1752, 1e-05
        %v1754 = vrsqrt.pop %v1753
        %v1755 = vmul.f32 %v251, %v1754
        %v1756 = vmul.f32 %v1749, %v1755
        %v1757 = vsub.f32 %v252, %v1756
        %1759 = vset.pattern.permute.xlu0 0
        %1760 = vperm.xlu0 %1759, %v1755
        %v1761 = vpop.permute.xlu0 %1760
        %v1763 = vmul.f32 %v1592, %v1761
        %v1764 = vmul.f32 %v1594, %v1761
        %v1765 = vmul.f32 %v1681, %v1761
        %v1766 = vmul.f32 %v1598, %v1761
        %v1767 = vmul.f32 %v1600, %v1761
        %v1768 = vmul.f32 %v1686, %v1761
        %v1769 = vmul.f32 %v1604, %v1761
        %v1770 = vmul.f32 %v1606, %v1761
        %v1771 = vmul.f32 %v1691, %v1761
        %v1772 = vmul.f32 %v1610, %v1761
        %v1773 = vmul.f32 %v1612, %v1761
        %v1774 = vmul.f32 %v1696, %v1761
        %1776 = vset.pattern.permute.xlu0 0
        %1777 = vperm.xlu0 %1776, %v1757
        %v1778 = vpop.permute.xlu0 %1777
        %v1780 = vadd.f32 %v1763, %v1778
        %v1781 = vadd.f32 %v1764, %v1778
        %v1782 = vadd.f32 %v1765, %v1778
        %v1783 = vadd.f32 %v1766, %v1778
        %v1784 = vadd.f32 %v1767, %v1778
        %v1785 = vadd.f32 %v1768, %v1778
        %v1786 = vadd.f32 %v1769, %v1778
        %v1787 = vadd.f32 %v1770, %v1778
        %v1788 = vadd.f32 %v1771, %v1778
        %v1789 = vadd.f32 %v1772, %v1778
        %v1790 = vadd.f32 %v1773, %v1778
        %v1791 = vadd.f32 %v1774, %v1778
        %v1792 = vmax.f32 %v1780, 0.0
        %v1793 = vmax.f32 %v1781, 0.0
        %v1794 = vmax.f32 %v1782, 0.0
        %v1795 = vmax.f32 %v1783, 0.0
        %v1796 = vmax.f32 %v1784, 0.0
        %v1797 = vmax.f32 %v1785, 0.0
        %v1798 = vmax.f32 %v1786, 0.0
        %v1799 = vmax.f32 %v1787, 0.0
        %v1800 = vmax.f32 %v1788, 0.0
        %v1801 = vmax.f32 %v1789, 0.0
        %v1802 = vmax.f32 %v1790, 0.0
        %v1803 = vmax.f32 %v1791, 0.0
        %s1804 = scalar_lea.vmem %s244, 192
        %1805 = vst [vmem:[%s1804] sm:$0xff] %v1792
        %1806 = vst [vmem:[%s1804 + $0x8] sm:$0xff] %v1793
        %1807 = vst [vmem:[%s1804 + $0x10] sm:$0xff] %v1794
        %1808 = vst [vmem:[%s1804 + $0x18] sm:$0xff] %v1795
        %1809 = vst [vmem:[%s1804 + $0x20] sm:$0xff] %v1796
        %1810 = vst [vmem:[%s1804 + $0x28] sm:$0xff] %v1797
        %1811 = vst [vmem:[%s1804 + $0x30] sm:$0xff] %v1798
        %1812 = vst [vmem:[%s1804 + $0x38] sm:$0xff] %v1799
        %1813 = vst [vmem:[%s1804 + $0x40] sm:$0xff] %v1800
        %1814 = vst [vmem:[%s1804 + $0x48] sm:$0xff] %v1801
        %1815 = vst [vmem:[%s1804 + $0x50] sm:$0xff] %v1802
        %1816 = vst [vmem:[%s1804 + $0x58] sm:$0xff] %v1803
        %s1817 = scalar_lea.vmem %s237, 48
        %v1818 = vld [vmem:[%s1817] sm:$0xff]
        %v1819 = vld [vmem:[%s1817 + $0x8] sm:$0xf]
        %v1821 = vcombine.high %v1818, %v1818
        %1823 = vst [vmem:[%s804] sm:$0xf] %v1818
        %1824 = vst [vmem:[%s804 + $0x8] sm:$0xf] %v1821
        %1825 = vst [vmem:[%s804 + $0x10] sm:$0xf] %v1819
        %v1826 = vld [vmem:[%s1817] sm:$0xff]
        %v1827 = vld [vmem:[%s1817 + $0x8] sm:$0xff]
        %v1830 = vcombine.low %v1826, %v1826
        %v1831 = vcombine.low %v1827, %v1827
        %1832 = vrot.lane.b32.xlu0 %v1830, 127
        %v1833 = vpop.permute.xlu0 %1832
        %1834 = vrot.lane.b32.xlu0 %v1826, 127
        %v1835 = vpop.permute.xlu0 %1834
        %1836 = vrot.lane.b32.xlu0 %v1831, 127
        %v1837 = vpop.permute.xlu0 %1836
        %1838 = vrot.lane.b32.xlu0 %v1827, 127
        %v1839 = vpop.permute.xlu0 %1838
        %v1840 = vsel %vm275, %v1833, %v1835
        %v1841 = vsel %vm275, %v1835, %v1837
        %v1842 = vsel %vm275, %v1837, %v1839
        %1846 = vst [vmem:[%s804] sm:$0xf0] %v1840
        %1847 = vst [vmem:[%s804 + $0x8] sm:$0xf0] %v1841
        %1848 = vst [vmem:[%s804 + $0x10] sm:$0xf0] %v1842
        %v1849 = vld [vmem:[%s1817] sm:$0xff]
        %v1850 = vld [vmem:[%s1817 + $0x8] sm:$0xff]
        %v1853 = vcombine.high %v1849, %v1849
        %v1854 = vcombine.high %v1850, %v1850
        %1855 = vrot.lane.b32.xlu0 %v1849, 126
        %v1856 = vpop.permute.xlu0 %1855
        %1857 = vrot.lane.b32.xlu0 %v1853, 126
        %v1858 = vpop.permute.xlu0 %1857
        %1859 = vrot.lane.b32.xlu0 %v1850, 126
        %v1860 = vpop.permute.xlu0 %1859
        %1861 = vrot.lane.b32.xlu0 %v1854, 126
        %v1862 = vpop.permute.xlu0 %1861
        %v1863 = vsel %vm299, %v1856, %v1858
        %v1864 = vsel %vm299, %v1858, %v1860
        %v1865 = vsel %vm299, %v1860, %v1862
        %1869 = vst [vmem:[%s804 + $0x18] sm:$0xf] %v1863
        %1870 = vst [vmem:[%s804 + $0x20] sm:$0xf] %v1864
        %1871 = vst [vmem:[%s804 + $0x28] sm:$0xf] %v1865
        %v1872 = vld [vmem:[%s1817] sm:$0xff]
        %v1873 = vld [vmem:[%s1817 + $0x8] sm:$0xff]
        %v1876 = vcombine.low %v1872, %v1872
        %v1877 = vcombine.low %v1873, %v1873
        %1878 = vrot.lane.b32.xlu0 %v1876, 110
        %v1879 = vpop.permute.xlu0 %1878
        %1880 = vrot.lane.b32.xlu0 %v1872, 110
        %v1881 = vpop.permute.xlu0 %1880
        %1882 = vrot.lane.b32.xlu0 %v1877, 110
        %v1883 = vpop.permute.xlu0 %1882
        %1884 = vrot.lane.b32.xlu0 %v1873, 110
        %v1885 = vpop.permute.xlu0 %1884
        %v1886 = vsel %vm323, %v1879, %v1881
        %v1887 = vsel %vm323, %v1881, %v1883
        %v1888 = vsel %vm323, %v1883, %v1885
        %1892 = vst [vmem:[%s804 + $0x18] sm:$0xf0] %v1886
        %1893 = vst [vmem:[%s804 + $0x20] sm:$0xf0] %v1887
        %1894 = vst [vmem:[%s804 + $0x28] sm:$0xf0] %v1888
        %v1895 = vld [vmem:[%s1817] sm:$0xff]
        %v1896 = vld [vmem:[%s1817 + $0x8] sm:$0xff]
        %v1899 = vcombine.high %v1895, %v1895
        %v1900 = vcombine.high %v1896, %v1896
        %1901 = vrot.lane.b32.xlu0 %v1895, 109
        %v1902 = vpop.permute.xlu0 %1901
        %1903 = vrot.lane.b32.xlu0 %v1899, 109
        %v1904 = vpop.permute.xlu0 %1903
        %1905 = vrot.lane.b32.xlu0 %v1896, 109
        %v1906 = vpop.permute.xlu0 %1905
        %1907 = vrot.lane.b32.xlu0 %v1900, 109
        %v1908 = vpop.permute.xlu0 %1907
        %v1909 = vsel %vm347, %v1902, %v1904
        %v1910 = vsel %vm347, %v1904, %v1906
        %v1911 = vsel %vm347, %v1906, %v1908
        %1915 = vst [vmem:[%s804 + $0x30] sm:$0xf] %v1909
        %1916 = vst [vmem:[%s804 + $0x38] sm:$0xf] %v1910
        %1917 = vst [vmem:[%s804 + $0x40] sm:$0xf] %v1911
        %v1918 = vld [vmem:[%s1817] sm:$0xff]
        %v1919 = vld [vmem:[%s1817 + $0x8] sm:$0xff]
        %v1922 = vcombine.low %v1918, %v1918
        %v1923 = vcombine.low %v1919, %v1919
        %1924 = vrot.lane.b32.xlu0 %v1922, 108
        %v1925 = vpop.permute.xlu0 %1924
        %1926 = vrot.lane.b32.xlu0 %v1918, 108
        %v1927 = vpop.permute.xlu0 %1926
        %1928 = vrot.lane.b32.xlu0 %v1923, 108
        %v1929 = vpop.permute.xlu0 %1928
        %1930 = vrot.lane.b32.xlu0 %v1919, 108
        %v1931 = vpop.permute.xlu0 %1930
        %v1932 = vsel %vm371, %v1925, %v1927
        %v1933 = vsel %vm371, %v1927, %v1929
        %v1934 = vsel %vm371, %v1929, %v1931
        %1938 = vst [vmem:[%s804 + $0x30] sm:$0xf0] %v1932
        %1939 = vst [vmem:[%s804 + $0x38] sm:$0xf0] %v1933
        %1940 = vst [vmem:[%s804 + $0x40] sm:$0xf0] %v1934
        %v1941 = vld [vmem:[%s1817] sm:$0xff]
        %v1942 = vld [vmem:[%s1817 + $0x8] sm:$0xff]
        %v1945 = vcombine.high %v1941, %v1941
        %v1946 = vcombine.high %v1942, %v1942
        %1947 = vrot.lane.b32.xlu0 %v1941, 92
        %v1948 = vpop.permute.xlu0 %1947
        %1949 = vrot.lane.b32.xlu0 %v1945, 92
        %v1950 = vpop.permute.xlu0 %1949
        %1951 = vrot.lane.b32.xlu0 %v1942, 92
        %v1952 = vpop.permute.xlu0 %1951
        %1953 = vrot.lane.b32.xlu0 %v1946, 92
        %v1954 = vpop.permute.xlu0 %1953
        %v1955 = vsel %vm395, %v1948, %v1950
        %v1956 = vsel %vm395, %v1950, %v1952
        %v1957 = vsel %vm395, %v1952, %v1954
        %1961 = vst [vmem:[%s804 + $0x48] sm:$0xf] %v1955
        %1962 = vst [vmem:[%s804 + $0x50] sm:$0xf] %v1956
        %1963 = vst [vmem:[%s804 + $0x58] sm:$0xf] %v1957
        %v1964 = vld [vmem:[%s1817] sm:$0xff]
        %v1965 = vld [vmem:[%s1817 + $0x8] sm:$0xff]
        %v1968 = vcombine.low %v1964, %v1964
        %v1969 = vcombine.low %v1965, %v1965
        %1970 = vrot.lane.b32.xlu0 %v1968, 91
        %v1971 = vpop.permute.xlu0 %1970
        %1972 = vrot.lane.b32.xlu0 %v1964, 91
        %v1973 = vpop.permute.xlu0 %1972
        %1974 = vrot.lane.b32.xlu0 %v1969, 91
        %v1975 = vpop.permute.xlu0 %1974
        %1976 = vrot.lane.b32.xlu0 %v1965, 91
        %v1977 = vpop.permute.xlu0 %1976
        %v1978 = vsel %vm419, %v1971, %v1973
        %v1979 = vsel %vm419, %v1973, %v1975
        %v1980 = vsel %vm419, %v1975, %v1977
        %1984 = vst [vmem:[%s804 + $0x48] sm:$0xf0] %v1978
        %1985 = vst [vmem:[%s804 + $0x50] sm:$0xf0] %v1979
        %1986 = vst [vmem:[%s804 + $0x58] sm:$0xf0] %v1980
        %v1987 = vld [vmem:[%s1817] sm:$0xff]
        %v1988 = vld [vmem:[%s1817 + $0x8] sm:$0xff]
        %v1991 = vcombine.high %v1987, %v1987
        %v1992 = vcombine.high %v1988, %v1988
        %1993 = vrot.lane.b32.xlu0 %v1987, 90
        %v1994 = vpop.permute.xlu0 %1993
        %1995 = vrot.lane.b32.xlu0 %v1991, 90
        %v1996 = vpop.permute.xlu0 %1995
        %1997 = vrot.lane.b32.xlu0 %v1988, 90
        %v1998 = vpop.permute.xlu0 %1997
        %1999 = vrot.lane.b32.xlu0 %v1992, 90
        %v2000 = vpop.permute.xlu0 %1999
        %v2001 = vsel %vm443, %v1994, %v1996
        %v2002 = vsel %vm443, %v1996, %v1998
        %v2003 = vsel %vm443, %v1998, %v2000
        %2007 = vst [vmem:[%s804 + $0x60] sm:$0xf] %v2001
        %2008 = vst [vmem:[%s804 + $0x68] sm:$0xf] %v2002
        %2009 = vst [vmem:[%s804 + $0x70] sm:$0xf] %v2003
        %v2010 = vld [vmem:[%s804] sm:$0xff]
        %v2011 = vld [vmem:[%s804 + $0x8] sm:$0xff]
        %v2012 = vld [vmem:[%s804 + $0x10] sm:$0xff]
        %v2013 = vld [vmem:[%s804 + $0x18] sm:$0xff]
        %v2014 = vld [vmem:[%s804 + $0x20] sm:$0xff]
        %v2015 = vld [vmem:[%s804 + $0x28] sm:$0xff]
        %v2016 = vld [vmem:[%s804 + $0x30] sm:$0xff]
        %v2017 = vld [vmem:[%s804 + $0x38] sm:$0xff]
        %v2018 = vld [vmem:[%s804 + $0x40] sm:$0xff]
        %v2019 = vld [vmem:[%s804 + $0x48] sm:$0xff]
        %v2020 = vld [vmem:[%s804 + $0x50] sm:$0xff]
        %v2021 = vld [vmem:[%s804 + $0x58] sm:$0xff]
        %v2022 = vld [vmem:[%s804 + $0x60] sm:$0xf]
        %v2023 = vld [vmem:[%s804 + $0x68] sm:$0xf]
        %v2024 = vld [vmem:[%s804 + $0x70] sm:$0xf]
        %v2026 = vsel %vm481, %v2022, 0
        %v2029 = vsel %vm481, %v2023, 0
        %v2032 = vsel %vm481, %v2024, 0
        %2034 = vmatprep.subr.mxu0 0.0
        %2035 = vmatpush1.msra.mxu0 0.0
        %2036 = vmatprep.subr.mxu0 0.0
        %2037 = vmatpush1.msra.mxu0 0.0
        %2038 = vmatprep.subr.mxu0 0.0
        %2039 = vmatpush1.msra.mxu0 0.0
        %2040 = vmatprep.subr.mxu0 0.0
        %2041 = vmatpush1.msra.mxu0 0.0
        %2042 = vmatprep.subr.mxu0 0.0
        %2043 = vmatpush1.msra.mxu0 0.0
        %2044 = vmatprep.subr.mxu0 0.0
        %2045 = vmatpush1.msra.mxu0 0.0
        %2046 = vmatprep.subr.mxu0 0.0
        %2047 = vmatpush1.msra.mxu0 0.0
        %2048 = vmatprep.subr.mxu0 0.0
        %2049 = vmatpush1.msra.mxu0 0.0
        %2050 = vmatprep.subr.mxu0 0.0
        %2051 = vmatpush1.msra.mxu0 0.0
        %2052 = vmatprep.subr.mxu0 0.0
        %2053 = vmatpush1.msra.mxu0 0.0
        %2054 = vmatprep.subr.mxu0 0.0
        %2055 = vmatpush1.msra.mxu0 0.0
        %2056 = vmatprep.subr.mxu0 %v2029
        %2057 = vmatpush1.msra.mxu0 %v2026
        %2058 = vmatprep.subr.mxu0 %v2020
        %2059 = vmatpush1.msra.mxu0 %v2019
        %2060 = vmatprep.subr.mxu0 %v2017
        %2061 = vmatpush1.msra.mxu0 %v2016
        %2062 = vmatprep.subr.mxu0 %v2014
        %2063 = vmatpush1.msra.mxu0 %v2013
        %2064 = vmatprep.subr.mxu0 %v2011
        %2065 = vmatpush1.msra.mxu0 %v2010
        %2066 = vmatprep.subr.mxu0 0.0
        %2067 = vmatpush2.msra.mxu0 0.0
        %2068 = vmatprep.subr.mxu0 0.0
        %2069 = vmatpush2.msra.mxu0 0.0
        %2070 = vmatprep.subr.mxu0 0.0
        %2071 = vmatpush2.msra.mxu0 0.0
        %2072 = vmatprep.subr.mxu0 0.0
        %2073 = vmatpush2.msra.mxu0 0.0
        %2074 = vmatprep.subr.mxu0 0.0
        %2075 = vmatpush2.msra.mxu0 0.0
        %2076 = vmatprep.subr.mxu0 0.0
        %2077 = vmatpush2.msra.mxu0 0.0
        %2078 = vmatprep.subr.mxu0 0.0
        %2079 = vmatpush2.msra.mxu0 0.0
        %2080 = vmatprep.subr.mxu0 0.0
        %2081 = vmatpush2.msra.mxu0 0.0
        %2082 = vmatprep.subr.mxu0 0.0
        %2083 = vmatpush2.msra.mxu0 0.0
        %2084 = vmatprep.subr.mxu0 0.0
        %2085 = vmatpush2.msra.mxu0 0.0
        %2086 = vmatprep.subr.mxu0 0.0
        %2087 = vmatpush2.msra.mxu0 0.0
        %2088 = vmatprep.subr.mxu0 0.0
        %2089 = vmatpush2.msra.mxu0 0.0
        %2090 = vmatprep.subr.mxu0 0.0
        %2091 = vmatpush2.msra.mxu0 0.0
        %2092 = vmatprep.subr.mxu0 0.0
        %2093 = vmatpush2.msra.mxu0 0.0
        %2094 = vmatprep.subr.mxu0 0.0
        %2095 = vmatpush2.msra.mxu0 0.0
        %2096 = vmatprep.subr.mxu0 0.0
        %2097 = vmatpush2.msra.mxu0 0.0
        %2098 = vmatprep.mubr.f32.mxu0 0.0
        %2099 = vmatmul.mubr.f32.gmra.mxu0 %v470
        %v2100 = vpop.f32.mrf.mxu0
        %v2101 = vadd.f32 0.0, %v2100
        %v2102 = vpop.f32.mrf.mxu0
        %v2103 = vadd.f32 0.0, %v2102
        %2104 = vmatprep.mubr.f32.mxu0 0.0
        %2105 = vmatmul.mubr.f32.gmra.mxu0 %v473
        %v2106 = vpop.f32.mrf.mxu0
        %v2107 = vadd.f32 0.0, %v2106
        %v2108 = vpop.f32.mrf.mxu0
        %v2109 = vadd.f32 0.0, %v2108
        %2110 = vmatprep.mubr.f32.mxu0 0.0
        %2111 = vmatmul.mubr.f32.gmra.mxu0 %v476
        %v2112 = vpop.f32.mrf.mxu0
        %v2113 = vadd.f32 0.0, %v2112
        %v2114 = vpop.f32.mrf.mxu0
        %v2115 = vadd.f32 0.0, %v2114
        %2116 = vmatprep.mubr.f32.mxu0 0.0
        %2117 = vmatmul.mubr.f32.gmra.mxu0 %v479
        %v2118 = vpop.f32.mrf.mxu0
        %v2119 = vadd.f32 0.0, %v2118
        %v2120 = vpop.f32.mrf.mxu0
        %v2121 = vadd.f32 0.0, %v2120
        %2122 = vdwg.mxu0
        %2123 = vmatprep.subr.mxu0 0.0
        %2124 = vmatpush1.msra.mxu0 0.0
        %2125 = vmatprep.subr.mxu0 0.0
        %2126 = vmatpush1.msra.mxu0 0.0
        %2127 = vmatprep.subr.mxu0 0.0
        %2128 = vmatpush1.msra.mxu0 0.0
        %2129 = vmatprep.subr.mxu0 0.0
        %2130 = vmatpush1.msra.mxu0 0.0
        %2131 = vmatprep.subr.mxu0 0.0
        %2132 = vmatpush1.msra.mxu0 0.0
        %2133 = vmatprep.subr.mxu0 0.0
        %2134 = vmatpush1.msra.mxu0 0.0
        %2135 = vmatprep.subr.mxu0 0.0
        %2136 = vmatpush1.msra.mxu0 0.0
        %2137 = vmatprep.subr.mxu0 0.0
        %2138 = vmatpush1.msra.mxu0 0.0
        %2139 = vmatprep.subr.mxu0 0.0
        %2140 = vmatpush1.msra.mxu0 0.0
        %2141 = vmatprep.subr.mxu0 0.0
        %2142 = vmatpush1.msra.mxu0 0.0
        %2143 = vmatprep.subr.mxu0 0.0
        %2144 = vmatpush1.msra.mxu0 0.0
        %2145 = vmatprep.subr.mxu0 0.0
        %2146 = vmatpush1.msra.mxu0 %v2032
        %2147 = vmatprep.subr.mxu0 0.0
        %2148 = vmatpush1.msra.mxu0 %v2021
        %2149 = vmatprep.subr.mxu0 0.0
        %2150 = vmatpush1.msra.mxu0 %v2018
        %2151 = vmatprep.subr.mxu0 0.0
        %2152 = vmatpush1.msra.mxu0 %v2015
        %2153 = vmatprep.subr.mxu0 0.0
        %2154 = vmatpush1.msra.mxu0 %v2012
        %2155 = vmatprep.subr.mxu0 0.0
        %2156 = vmatpush2.msra.mxu0 0.0
        %2157 = vmatprep.subr.mxu0 0.0
        %2158 = vmatpush2.msra.mxu0 0.0
        %2159 = vmatprep.subr.mxu0 0.0
        %2160 = vmatpush2.msra.mxu0 0.0
        %2161 = vmatprep.subr.mxu0 0.0
        %2162 = vmatpush2.msra.mxu0 0.0
        %2163 = vmatprep.subr.mxu0 0.0
        %2164 = vmatpush2.msra.mxu0 0.0
        %2165 = vmatprep.subr.mxu0 0.0
        %2166 = vmatpush2.msra.mxu0 0.0
        %2167 = vmatprep.subr.mxu0 0.0
        %2168 = vmatpush2.msra.mxu0 0.0
        %2169 = vmatprep.subr.mxu0 0.0
        %2170 = vmatpush2.msra.mxu0 0.0
        %2171 = vmatprep.subr.mxu0 0.0
        %2172 = vmatpush2.msra.mxu0 0.0
        %2173 = vmatprep.subr.mxu0 0.0
        %2174 = vmatpush2.msra.mxu0 0.0
        %2175 = vmatprep.subr.mxu0 0.0
        %2176 = vmatpush2.msra.mxu0 0.0
        %2177 = vmatprep.subr.mxu0 0.0
        %2178 = vmatpush2.msra.mxu0 0.0
        %2179 = vmatprep.subr.mxu0 0.0
        %2180 = vmatpush2.msra.mxu0 0.0
        %2181 = vmatprep.subr.mxu0 0.0
        %2182 = vmatpush2.msra.mxu0 0.0
        %2183 = vmatprep.subr.mxu0 0.0
        %2184 = vmatpush2.msra.mxu0 0.0
        %2185 = vmatprep.subr.mxu0 0.0
        %2186 = vmatpush2.msra.mxu0 0.0
        %2187 = vmatprep.mubr.f32.mxu0 0.0
        %2188 = vmatmul.mubr.f32.gmra.mxu0 %v470
        %v2189 = vpop.f32.mrf.mxu0
        %v2190 = vadd.f32 0.0, %v2189
        %v2191 = vpop.f32.mrf.mxu0
        %2192 = vmatprep.mubr.f32.mxu0 0.0
        %2193 = vmatmul.mubr.f32.gmra.mxu0 %v473
        %v2194 = vpop.f32.mrf.mxu0
        %v2195 = vadd.f32 0.0, %v2194
        %v2196 = vpop.f32.mrf.mxu0
        %2197 = vmatprep.mubr.f32.mxu0 0.0
        %2198 = vmatmul.mubr.f32.gmra.mxu0 %v476
        %v2199 = vpop.f32.mrf.mxu0
        %v2200 = vadd.f32 0.0, %v2199
        %v2201 = vpop.f32.mrf.mxu0
        %2202 = vmatprep.mubr.f32.mxu0 0.0
        %2203 = vmatmul.mubr.f32.gmra.mxu0 %v479
        %v2204 = vpop.f32.mrf.mxu0
        %v2205 = vadd.f32 0.0, %v2204
        %v2206 = vpop.f32.mrf.mxu0
        %2207 = vdwg.mxu0
        %v2208 = vmul.f32 %v2101, %v669
        %v2209 = vmul.f32 %v2103, %v673
        %v2210 = vmul.f32 %v2190, %v677
        %v2211 = vmul.f32 %v2107, %v669
        %v2212 = vmul.f32 %v2109, %v673
        %v2213 = vmul.f32 %v2195, %v677
        %v2214 = vmul.f32 %v2113, %v669
        %v2215 = vmul.f32 %v2115, %v673
        %v2216 = vmul.f32 %v2200, %v677
        %v2217 = vmul.f32 %v2119, %v669
        %v2218 = vmul.f32 %v2121, %v673
        %v2219 = vmul.f32 %v2205, %v677
        %v2220 = vadd.f32 %v2208, %v2211
        %v2221 = vadd.f32 %v2220, %v2214
        %v2222 = vadd.f32 %v2221, %v2217
        %v2223 = vadd.f32 %v2209, %v2212
        %v2224 = vadd.f32 %v2223, %v2215
        %v2225 = vadd.f32 %v2224, %v2218
        %v2226 = vadd.f32 %v2210, %v2213
        %v2227 = vadd.f32 %v2226, %v2216
        %v2228 = vadd.f32 %v2227, %v2219
        %v2229 = vadd.f32 %v2222, %v2225
        %v2230 = vadd.f32 %v2229, %v2228
        %2231 = vadd.xlane.f32.xlu0 %v2230
        %v2232 = vpop.xlane.xlu0 %2231
        %v2233 = vmul.f32 %v2208, %v2208
        %v2234 = vmul.f32 %v2209, %v2209
        %v2235 = vmul.f32 %v2210, %v2210
        %v2236 = vmul.f32 %v2211, %v2211
        %v2237 = vmul.f32 %v2212, %v2212
        %v2238 = vmul.f32 %v2213, %v2213
        %v2239 = vmul.f32 %v2214, %v2214
        %v2240 = vmul.f32 %v2215, %v2215
        %v2241 = vmul.f32 %v2216, %v2216
        %v2242 = vmul.f32 %v2217, %v2217
        %v2243 = vmul.f32 %v2218, %v2218
        %v2244 = vmul.f32 %v2219, %v2219
        %v2245 = vadd.f32 %v2233, %v2236
        %v2246 = vadd.f32 %v2245, %v2239
        %v2247 = vadd.f32 %v2246, %v2242
        %v2248 = vadd.f32 %v2234, %v2237
        %v2249 = vadd.f32 %v2248, %v2240
        %v2250 = vadd.f32 %v2249, %v2243
        %v2251 = vadd.f32 %v2235, %v2238
        %v2252 = vadd.f32 %v2251, %v2241
        %v2253 = vadd.f32 %v2252, %v2244
        %v2254 = vadd.f32 %v2247, %v2250
        %v2255 = vadd.f32 %v2254, %v2253
        %2256 = vadd.xlane.f32.xlu0 %v2255
        %v2257 = vpop.xlane.xlu0 %2256
        %v2258 = vmul.f32 %v2232, 0.0009765625
        %v2259 = vmul.f32 %v2257, 0.0009765625
        %v2260 = vmul.f32 %v2258, %v2258
        %v2261 = vsub.f32 %v2259, %v2260
        %v2262 = vadd.f32 %v2261, 1e-05
        %v2263 = vrsqrt.pop %v2262
        %v2264 = vmul.f32 %v251, %v2263
        %v2265 = vmul.f32 %v2258, %v2264
        %v2266 = vsub.f32 %v252, %v2265
        %2268 = vset.pattern.permute.xlu0 0
        %2269 = vperm.xlu0 %2268, %v2264
        %v2270 = vpop.permute.xlu0 %2269
        %v2272 = vmul.f32 %v2101, %v2270
        %v2273 = vmul.f32 %v2103, %v2270
        %v2274 = vmul.f32 %v2190, %v2270
        %v2275 = vmul.f32 %v2107, %v2270
        %v2276 = vmul.f32 %v2109, %v2270
        %v2277 = vmul.f32 %v2195, %v2270
        %v2278 = vmul.f32 %v2113, %v2270
        %v2279 = vmul.f32 %v2115, %v2270
        %v2280 = vmul.f32 %v2200, %v2270
        %v2281 = vmul.f32 %v2119, %v2270
        %v2282 = vmul.f32 %v2121, %v2270
        %v2283 = vmul.f32 %v2205, %v2270
        %2285 = vset.pattern.permute.xlu0 0
        %2286 = vperm.xlu0 %2285, %v2266
        %v2287 = vpop.permute.xlu0 %2286
        %v2289 = vadd.f32 %v2272, %v2287
        %v2290 = vadd.f32 %v2273, %v2287
        %v2291 = vadd.f32 %v2274, %v2287
        %v2292 = vadd.f32 %v2275, %v2287
        %v2293 = vadd.f32 %v2276, %v2287
        %v2294 = vadd.f32 %v2277, %v2287
        %v2295 = vadd.f32 %v2278, %v2287
        %v2296 = vadd.f32 %v2279, %v2287
        %v2297 = vadd.f32 %v2280, %v2287
        %v2298 = vadd.f32 %v2281, %v2287
        %v2299 = vadd.f32 %v2282, %v2287
        %v2300 = vadd.f32 %v2283, %v2287
        %v2301 = vmax.f32 %v2289, 0.0
        %v2302 = vmax.f32 %v2290, 0.0
        %v2303 = vmax.f32 %v2291, 0.0
        %v2304 = vmax.f32 %v2292, 0.0
        %v2305 = vmax.f32 %v2293, 0.0
        %v2306 = vmax.f32 %v2294, 0.0
        %v2307 = vmax.f32 %v2295, 0.0
        %v2308 = vmax.f32 %v2296, 0.0
        %v2309 = vmax.f32 %v2297, 0.0
        %v2310 = vmax.f32 %v2298, 0.0
        %v2311 = vmax.f32 %v2299, 0.0
        %v2312 = vmax.f32 %v2300, 0.0
        %s2313 = scalar_lea.vmem %s244, 288
        %2314 = vst [vmem:[%s2313] sm:$0xff] %v2301
        %2315 = vst [vmem:[%s2313 + $0x8] sm:$0xff] %v2302
        %2316 = vst [vmem:[%s2313 + $0x10] sm:$0xff] %v2303
        %2317 = vst [vmem:[%s2313 + $0x18] sm:$0xff] %v2304
        %2318 = vst [vmem:[%s2313 + $0x20] sm:$0xff] %v2305
        %2319 = vst [vmem:[%s2313 + $0x28] sm:$0xff] %v2306
        %2320 = vst [vmem:[%s2313 + $0x30] sm:$0xff] %v2307
        %2321 = vst [vmem:[%s2313 + $0x38] sm:$0xff] %v2308
        %2322 = vst [vmem:[%s2313 + $0x40] sm:$0xff] %v2309
        %2323 = vst [vmem:[%s2313 + $0x48] sm:$0xff] %v2310
        %2324 = vst [vmem:[%s2313 + $0x50] sm:$0xff] %v2311
        %2325 = vst [vmem:[%s2313 + $0x58] sm:$0xff] %v2312
        %s2326 = smul.u32 4, %s17
        %p2327 = scmp.lt.s32.totalorder %s2326, 7
        %s2328 = scalar_select %p2327, %s2326, 7
        %s2329 = smul.addr %s2328, 12
        %s2330 = smul.addr %s2329, 8
        %s2331 = scalar_lea.vmem %s5, %s2330
        // Predicated region
        $region45: #{conv_transpose2d_layer.1} parent=39 // pred_check
          %p2332 = pneg %p145
        $region46: #{conv_transpose2d_layer.1} parent=39 // pred_check_branch
          %2334 = sbr.rel (%p2332) target = $region48
        $region47: #{conv_transpose2d_layer.1} parent=39 // pred_region
          %s2335 = smul.u32 4, %s17
        $region48: #{conv_transpose2d_layer.1} parent=39 // pred_fallthru
          _
      $region40: #{conv_transpose2d_layer.1} parent=5 // pred_fallthru
        _
      %p2336 = scmp.le.s32.totalorder 2, %s12
      // Predicated region
      $region49: #{conv_transpose2d_layer.1} parent=5 // pred_check
        %p2337 = pneg %p2336
      $region50: #{conv_transpose2d_layer.1} parent=5 // pred_check_branch
        %2339 = sbr.rel (%p2337) target = $region52
      $region51: #{conv_transpose2d_layer.1} parent=5 // pred_region
        %s2340 = ssub.s32 %s12, 2
        // Predicated region
        $region53: #{conv_transpose2d_layer.1} parent=51 // pred_check
          %p2341 = pneg %p151
        $region54: #{conv_transpose2d_layer.1} parent=51 // pred_check_branch
          %2343 = sbr.rel (%p2341) target = $region56
        $region55: #{conv_transpose2d_layer.1} parent=51 // pred_region
          %s2344 = smul.u32 4, %s18
          %p2345 = scmp.lt.s32.totalorder %s2344, 7
          %s2346 = scalar_select %p2345, %s2344, 7
          %s2347 = smul.addr %s2346, 12
          %s2348 = smul.addr %s2347, 8
          %s2349 = scalar_lea.vmem %s5, %s2348
        $region56: #{conv_transpose2d_layer.1} parent=51 // pred_fallthru
          _
      $region52: #{conv_transpose2d_layer.1} parent=5 // pred_fallthru
        _
    $region6: #{conv_transpose2d_layer.1} parent=1 // loop_footer
      %s16 = sadd.s32 1, %s12
    $region7: #{conv_transpose2d_layer.1} parent=1 // loop_footer_branch
      %11 = sbr.rel target = $region3
    $region8: #{conv_transpose2d_layer.1} parent=1 // loop_exit
      _
    %2350 = vsyncpa [#allocation4], 1
    %s2351 = scalar_lea.sflag [#allocation4], 1
    %2352 = vsyncpa %s2351, 1

</llo_original>
